<compile_context>
chip_gen: v7x
topology: tpu7x:2x2x1
jax: 0.10.0
libtpu: 0.0.40
codegen_flags: <defaults>
</compile_context>

<pallas_src>
import functools

import jax
import jax.numpy as jnp
from jax.experimental import pallas as pl


# ----------------------------------------------------------------------------
# Fused Pallas kernel (built per static (num_layers, T, B_pad, H) config)
# ----------------------------------------------------------------------------
def _make_fused_kernel(num_layers, seq_len, batch, hidden):
    T, B, H = seq_len, batch, hidden

    def kernel(*refs):
        # refs = [x2d, (wih, whh, b) * num_layers, fc_w, fc_b, out]
        x_ref = refs[0]
        w_refs = refs[1:1 + 3 * num_layers]
        fcw_ref = refs[1 + 3 * num_layers]
        fcb_ref = refs[2 + 3 * num_layers]
        out_ref = refs[-1]

        def lstm_step(g_in, h_prev, c_prev, whh_ref):
            # g_in already contains x_t @ W_ih + (b_ih + b_hh), f32.
            gates = g_in + jnp.dot(
                h_prev.astype(jnp.bfloat16), whh_ref[...],
                preferred_element_type=jnp.float32)          # (B, 4H) f32
            i_g = jax.nn.sigmoid(gates[:, 0 * H:1 * H])
            f_g = jax.nn.sigmoid(gates[:, 1 * H:2 * H])
            g_g = jnp.tanh(gates[:, 2 * H:3 * H])
            o_g = jax.nn.sigmoid(gates[:, 3 * H:4 * H])
            c_new = f_g * c_prev + i_g * g_g
            h_new = o_g * jnp.tanh(c_new)
            return h_new, c_new

        wih0_ref, whh0_ref, b0_ref = w_refs[0], w_refs[1], w_refs[2]

        # Hoisted layer-0 input projection for ALL time steps:
        #   (T*B, I) @ (I, 4H) -> (T*B, 4H), rows are time-major (contiguous
        #   sublane block of size B per time step).
        proj0 = jnp.dot(
            x_ref[...].astype(jnp.bfloat16), wih0_ref[...],
            preferred_element_type=jnp.float32) + b0_ref[...]

        h = [jnp.zeros((B, H), jnp.float32) for _ in range(num_layers)]
        c = [jnp.zeros((B, H), jnp.float32) for _ in range(num_layers)]

        for t in range(T):                      # short static T -> fully unrolled
            g_in = proj0[t * B:(t + 1) * B, :]  # static, tile-aligned slice
            h[0], c[0] = lstm_step(g_in, h[0], c[0], whh0_ref)
            x_l = h[0]
            for layer in range(1, num_layers):
                wih_ref = w_refs[3 * layer]
                whh_ref = w_refs[3 * layer + 1]
                b_ref = w_refs[3 * layer + 2]
                g_in = jnp.dot(
                    x_l.astype(jnp.bfloat16), wih_ref[...],
                    preferred_element_type=jnp.float32) + b_ref[...]
                h[layer], c[layer] = lstm_step(g_in, h[layer], c[layer], whh_ref)
                x_l = h[layer]
            # TODO(synk): PyTorch applies dropout(p=0.2) between layers only in
            # training mode; eval-mode forward is identity, so nothing to do.

        # Final Linear(H, 1) + Sigmoid on the top layer's last hidden state.
        logits = jnp.dot(h[-1], fcw_ref[...],
                         preferred_element_type=jnp.float32) + fcb_ref[...]
        out_ref[...] = jax.nn.sigmoid(logits)

    return kernel


# ----------------------------------------------------------------------------
# Wrapper
# ----------------------------------------------------------------------------
def tuned_lstm_forward(x_bti, params):
    """Full TunedLSTM forward.

    x_bti : (B, T, input_size) float32, batch_first like PyTorch.
    params: dict of arrays (see init_params); LSTM weights pre-transposed to
            (in, 4H)/(H, 4H) in bf16, biases fused (b_ih + b_hh) in f32.
    returns (B, 1) float32 in [0, 1].
    """
    B, T, I = x_bti.shape
    num_layers = sum(1 for k in params if k.startswith("w_hh_t_"))
    H = params["w_hh_t_0"].shape[0]
    B_pad = max(8, ((B + 7) // 8) * 8)  # f32 sublane count

    # Pad batch to the sublane count and lay the input out time-major 2D so
    # the hoisted projection is one well-shaped (T*B, I) x (I, 4H) matmul and
    # each per-step slice is a contiguous sublane block.  These are tiny (KB)
    # XLA ops that fuse under jit.
    x_tm = jnp.transpose(x_bti, (1, 0, 2))                       # (T, B, I)
    x_tm = jnp.pad(x_tm, ((0, 0), (0, B_pad - B), (0, 0)))        # (T, B_pad, I)
    x2d = x_tm.reshape(T * B_pad, I).astype(jnp.float32)          # (T*B_pad, I)

    inputs = [x2d]
    in_specs = [pl.BlockSpec((T * B_pad, I), lambda: (0, 0))]
    for layer in range(num_layers):
        wih = params[f"w_ih_t_{layer}"]
        whh = params[f"w_hh_t_{layer}"]
        b = params[f"b_{layer}"]
        inputs += [wih, whh, b]
        in_specs += [
            pl.BlockSpec(wih.shape, lambda: (0, 0)),
            pl.BlockSpec(whh.shape, lambda: (0, 0)),
            pl.BlockSpec(b.shape, lambda: (0, 0)),
        ]
    inputs += [params["fc_w_t"], params["fc_b"]]
    in_specs += [
        pl.BlockSpec(params["fc_w_t"].shape, lambda: (0, 0)),
        pl.BlockSpec(params["fc_b"].shape, lambda: (0, 0)),
    ]

    kernel = _make_fused_kernel(num_layers, T, B_pad, H)

    out_pad = pl.pallas_call(
        kernel,
        out_shape=jax.ShapeDtypeStruct((B_pad, 1), jnp.float32),
        in_specs=in_specs,
        out_specs=pl.BlockSpec((B_pad, 1), lambda: (0, 0)),
    )(*inputs)

    return out_pad[:B]


# ----------------------------------------------------------------------------
# Deterministic parameter construction (PyTorch-style uniform(-1/sqrt(H), 1/sqrt(H)))
# ----------------------------------------------------------------------------
def init_params(key, input_size=5, hidden_size=128, num_layers=2):
    H = hidden_size
    bound = 1.0 / jnp.sqrt(jnp.float32(H))
    params = {}
    for layer in range(num_layers):
        in_dim = input_size if layer == 0 else H
        key, k1, k2, k3, k4 = jax.random.split(key, 5)
        w_ih = jax.random.uniform(k1, (4 * H, in_dim), jnp.float32, -bound, bound)
        w_hh = jax.random.uniform(k2, (4 * H, H), jnp.float32, -bound, bound)
        b_ih = jax.random.uniform(k3, (4 * H,), jnp.float32, -bound, bound)
        b_hh = jax.random.uniform(k4, (4 * H,), jnp.float32, -bound, bound)
        # MXU operands in bf16 (f32 accumulation in-kernel); biases stay f32.
        params[f"w_ih_t_{layer}"] = w_ih.T.astype(jnp.bfloat16)      # (in, 4H)
        params[f"w_hh_t_{layer}"] = w_hh.T.astype(jnp.bfloat16)      # (H, 4H)
        params[f"b_{layer}"] = (b_ih + b_hh).reshape(1, 4 * H)       # (1, 4H) f32
    key, k5, k6 = jax.random.split(key, 3)
    fc_w = jax.random.uniform(k5, (1, H), jnp.float32, -bound, bound)
    fc_b = jax.random.uniform(k6, (1,), jnp.float32, -bound, bound)
    params["fc_w_t"] = fc_w.T                  # (H, 1) f32
    params["fc_b"] = fc_b.reshape(1, 1)        # (1, 1) f32
    return params


if __name__ == "__main__":
    B, T, INPUT, HIDDEN, LAYERS = 2, 8, 5, 128, 2

    key = jax.random.PRNGKey(0)
    key, xk = jax.random.split(key)
    x = jax.random.normal(xk, (B, T, INPUT), dtype=jnp.float32)

    params = init_params(key, input_size=INPUT, hidden_size=HIDDEN, num_layers=LAYERS)

    fwd = jax.jit(tuned_lstm_forward)
    out = jax.block_until_ready(fwd(x, params))

    assert out.shape == (B, 1)
    assert bool(jnp.all(jnp.isfinite(out)))
    assert bool(jnp.all((out >= 0.0) & (out <= 1.0)))
    print("KERNEL_OK")
</pallas_src>

<mosaic_0001>
module attributes {stable_mosaic.version = 11 : i64} {
  func.func @kernel(%arg0: memref<64x5xf32, #tpu.memory_space<vmem>>, %arg1: memref<5x512xbf16, #tpu.memory_space<vmem>>, %arg2: memref<128x512xbf16, #tpu.memory_space<vmem>>, %arg3: memref<1x512xf32, #tpu.memory_space<vmem>>, %arg4: memref<128x512xbf16, #tpu.memory_space<vmem>>, %arg5: memref<128x512xbf16, #tpu.memory_space<vmem>>, %arg6: memref<1x512xf32, #tpu.memory_space<vmem>>, %arg7: memref<128x1xf32, #tpu.memory_space<vmem>>, %arg8: memref<1x1xf32, #tpu.memory_space<vmem>>, %arg9: memref<8x1xf32, #tpu.memory_space<vmem>>) attributes {dimension_semantics = [], scalar_prefetch = 0 : i64, scratch_operands = 0 : i64, tpu.core_type = #tpu.core_type<tc>} {
    %c0 = arith.constant 0 : index
    %c0_0 = arith.constant 0 : index
    %0 = vector.load %arg0[%c0, %c0_0] : memref<64x5xf32, #tpu.memory_space<vmem>>, vector<64x5xf32>
    %1 = arith.truncf %0 : vector<64x5xf32> to vector<64x5xbf16>
    %c0_1 = arith.constant 0 : index
    %c0_2 = arith.constant 0 : index
    %2 = vector.load %arg1[%c0_1, %c0_2] : memref<5x512xbf16, #tpu.memory_space<vmem>>, vector<5x512xbf16>
    %cst = arith.constant dense<0.000000e+00> : vector<64x512xf32>
    %3 = tpu.matmul %1, %2, %cst {dimension_numbers = #tpu.dot_dimension_numbers<[1], [0], [0], [1], [0, 0, 1, 1], [], []>} : vector<64x5xbf16>, vector<5x512xbf16>, vector<64x512xf32> -> vector<64x512xf32>
    %c0_3 = arith.constant 0 : index
    %c0_4 = arith.constant 0 : index
    %4 = vector.load %arg3[%c0_3, %c0_4] : memref<1x512xf32, #tpu.memory_space<vmem>>, vector<1x512xf32>
    %5 = vector.broadcast %4 : vector<1x512xf32> to vector<64x512xf32>
    %6 = arith.addf %3, %5 : vector<64x512xf32>
    %cst_5 = arith.constant 0.000000e+00 : f32
    %7 = vector.broadcast %cst_5 : f32 to vector<8x128xf32>
    %cst_6 = arith.constant 0.000000e+00 : f32
    %8 = vector.broadcast %cst_6 : f32 to vector<8x128xf32>
    %cst_7 = arith.constant 0.000000e+00 : f32
    %9 = vector.broadcast %cst_7 : f32 to vector<8x128xf32>
    %cst_8 = arith.constant 0.000000e+00 : f32
    %10 = vector.broadcast %cst_8 : f32 to vector<8x128xf32>
    %11 = vector.extract_strided_slice %6 {offsets = [0, 0], sizes = [8, 512], strides = [1, 1]} : vector<64x512xf32> to vector<8x512xf32>
    %12 = arith.truncf %7 : vector<8x128xf32> to vector<8x128xbf16>
    %c0_9 = arith.constant 0 : index
    %c0_10 = arith.constant 0 : index
    %13 = vector.load %arg2[%c0_9, %c0_10] : memref<128x512xbf16, #tpu.memory_space<vmem>>, vector<128x512xbf16>
    %cst_11 = arith.constant dense<0.000000e+00> : vector<8x512xf32>
    %14 = tpu.matmul %12, %13, %cst_11 {dimension_numbers = #tpu.dot_dimension_numbers<[1], [0], [0], [1], [0, 0, 1, 1], [], []>} : vector<8x128xbf16>, vector<128x512xbf16>, vector<8x512xf32> -> vector<8x512xf32>
    %15 = arith.addf %11, %14 : vector<8x512xf32>
    %16 = vector.extract_strided_slice %15 {offsets = [0, 0], sizes = [8, 128], strides = [1, 1]} : vector<8x512xf32> to vector<8x128xf32>
    %17 = arith.negf %16 : vector<8x128xf32>
    %18 = math.exp %17 : vector<8x128xf32>
    %cst_12 = arith.constant 1.000000e+00 : f32
    %19 = vector.broadcast %cst_12 : f32 to vector<8x128xf32>
    %20 = arith.addf %19, %18 : vector<8x128xf32>
    %21 = arith.divf %19, %20 : vector<8x128xf32>
    %22 = vector.extract_strided_slice %15 {offsets = [0, 128], sizes = [8, 128], strides = [1, 1]} : vector<8x512xf32> to vector<8x128xf32>
    %23 = arith.negf %22 : vector<8x128xf32>
    %24 = math.exp %23 : vector<8x128xf32>
    %cst_13 = arith.constant 1.000000e+00 : f32
    %25 = vector.broadcast %cst_13 : f32 to vector<8x128xf32>
    %26 = arith.addf %25, %24 : vector<8x128xf32>
    %27 = arith.divf %25, %26 : vector<8x128xf32>
    %28 = vector.extract_strided_slice %15 {offsets = [0, 256], sizes = [8, 128], strides = [1, 1]} : vector<8x512xf32> to vector<8x128xf32>
    %29 = math.tanh %28 : vector<8x128xf32>
    %30 = vector.extract_strided_slice %15 {offsets = [0, 384], sizes = [8, 128], strides = [1, 1]} : vector<8x512xf32> to vector<8x128xf32>
    %31 = arith.negf %30 : vector<8x128xf32>
    %32 = math.exp %31 : vector<8x128xf32>
    %cst_14 = arith.constant 1.000000e+00 : f32
    %33 = vector.broadcast %cst_14 : f32 to vector<8x128xf32>
    %34 = arith.addf %33, %32 : vector<8x128xf32>
    %35 = arith.divf %33, %34 : vector<8x128xf32>
    %36 = arith.mulf %27, %9 : vector<8x128xf32>
    %37 = arith.mulf %21, %29 : vector<8x128xf32>
    %38 = arith.addf %36, %37 : vector<8x128xf32>
    %39 = math.tanh %38 : vector<8x128xf32>
    %40 = arith.mulf %35, %39 : vector<8x128xf32>
    %41 = arith.truncf %40 : vector<8x128xf32> to vector<8x128xbf16>
    %c0_15 = arith.constant 0 : index
    %c0_16 = arith.constant 0 : index
    %42 = vector.load %arg4[%c0_15, %c0_16] : memref<128x512xbf16, #tpu.memory_space<vmem>>, vector<128x512xbf16>
    %cst_17 = arith.constant dense<0.000000e+00> : vector<8x512xf32>
    %43 = tpu.matmul %41, %42, %cst_17 {dimension_numbers = #tpu.dot_dimension_numbers<[1], [0], [0], [1], [0, 0, 1, 1], [], []>} : vector<8x128xbf16>, vector<128x512xbf16>, vector<8x512xf32> -> vector<8x512xf32>
    %c0_18 = arith.constant 0 : index
    %c0_19 = arith.constant 0 : index
    %44 = vector.load %arg6[%c0_18, %c0_19] : memref<1x512xf32, #tpu.memory_space<vmem>>, vector<1x512xf32>
    %45 = vector.broadcast %44 : vector<1x512xf32> to vector<8x512xf32>
    %46 = arith.addf %43, %45 : vector<8x512xf32>
    %47 = arith.truncf %8 : vector<8x128xf32> to vector<8x128xbf16>
    %c0_20 = arith.constant 0 : index
    %c0_21 = arith.constant 0 : index
    %48 = vector.load %arg5[%c0_20, %c0_21] : memref<128x512xbf16, #tpu.memory_space<vmem>>, vector<128x512xbf16>
    %cst_22 = arith.constant dense<0.000000e+00> : vector<8x512xf32>
    %49 = tpu.matmul %47, %48, %cst_22 {dimension_numbers = #tpu.dot_dimension_numbers<[1], [0], [0], [1], [0, 0, 1, 1], [], []>} : vector<8x128xbf16>, vector<128x512xbf16>, vector<8x512xf32> -> vector<8x512xf32>
    %50 = arith.addf %46, %49 : vector<8x512xf32>
    %51 = vector.extract_strided_slice %50 {offsets = [0, 0], sizes = [8, 128], strides = [1, 1]} : vector<8x512xf32> to vector<8x128xf32>
    %52 = arith.negf %51 : vector<8x128xf32>
    %53 = math.exp %52 : vector<8x128xf32>
    %cst_23 = arith.constant 1.000000e+00 : f32
    %54 = vector.broadcast %cst_23 : f32 to vector<8x128xf32>
    %55 = arith.addf %54, %53 : vector<8x128xf32>
    %56 = arith.divf %54, %55 : vector<8x128xf32>
    %57 = vector.extract_strided_slice %50 {offsets = [0, 128], sizes = [8, 128], strides = [1, 1]} : vector<8x512xf32> to vector<8x128xf32>
    %58 = arith.negf %57 : vector<8x128xf32>
    %59 = math.exp %58 : vector<8x128xf32>
    %cst_24 = arith.constant 1.000000e+00 : f32
    %60 = vector.broadcast %cst_24 : f32 to vector<8x128xf32>
    %61 = arith.addf %60, %59 : vector<8x128xf32>
    %62 = arith.divf %60, %61 : vector<8x128xf32>
    %63 = vector.extract_strided_slice %50 {offsets = [0, 256], sizes = [8, 128], strides = [1, 1]} : vector<8x512xf32> to vector<8x128xf32>
    %64 = math.tanh %63 : vector<8x128xf32>
    %65 = vector.extract_strided_slice %50 {offsets = [0, 384], sizes = [8, 128], strides = [1, 1]} : vector<8x512xf32> to vector<8x128xf32>
    %66 = arith.negf %65 : vector<8x128xf32>
    %67 = math.exp %66 : vector<8x128xf32>
    %cst_25 = arith.constant 1.000000e+00 : f32
    %68 = vector.broadcast %cst_25 : f32 to vector<8x128xf32>
    %69 = arith.addf %68, %67 : vector<8x128xf32>
    %70 = arith.divf %68, %69 : vector<8x128xf32>
    %71 = arith.mulf %62, %10 : vector<8x128xf32>
    %72 = arith.mulf %56, %64 : vector<8x128xf32>
    %73 = arith.addf %71, %72 : vector<8x128xf32>
    %74 = math.tanh %73 : vector<8x128xf32>
    %75 = arith.mulf %70, %74 : vector<8x128xf32>
    %76 = vector.extract_strided_slice %6 {offsets = [8, 0], sizes = [8, 512], strides = [1, 1]} : vector<64x512xf32> to vector<8x512xf32>
    %77 = arith.truncf %40 : vector<8x128xf32> to vector<8x128xbf16>
    %c0_26 = arith.constant 0 : index
    %c0_27 = arith.constant 0 : index
    %78 = vector.load %arg2[%c0_26, %c0_27] : memref<128x512xbf16, #tpu.memory_space<vmem>>, vector<128x512xbf16>
    %cst_28 = arith.constant dense<0.000000e+00> : vector<8x512xf32>
    %79 = tpu.matmul %77, %78, %cst_28 {dimension_numbers = #tpu.dot_dimension_numbers<[1], [0], [0], [1], [0, 0, 1, 1], [], []>} : vector<8x128xbf16>, vector<128x512xbf16>, vector<8x512xf32> -> vector<8x512xf32>
    %80 = arith.addf %76, %79 : vector<8x512xf32>
    %81 = vector.extract_strided_slice %80 {offsets = [0, 0], sizes = [8, 128], strides = [1, 1]} : vector<8x512xf32> to vector<8x128xf32>
    %82 = arith.negf %81 : vector<8x128xf32>
    %83 = math.exp %82 : vector<8x128xf32>
    %cst_29 = arith.constant 1.000000e+00 : f32
    %84 = vector.broadcast %cst_29 : f32 to vector<8x128xf32>
    %85 = arith.addf %84, %83 : vector<8x128xf32>
    %86 = arith.divf %84, %85 : vector<8x128xf32>
    %87 = vector.extract_strided_slice %80 {offsets = [0, 128], sizes = [8, 128], strides = [1, 1]} : vector<8x512xf32> to vector<8x128xf32>
    %88 = arith.negf %87 : vector<8x128xf32>
    %89 = math.exp %88 : vector<8x128xf32>
    %cst_30 = arith.constant 1.000000e+00 : f32
    %90 = vector.broadcast %cst_30 : f32 to vector<8x128xf32>
    %91 = arith.addf %90, %89 : vector<8x128xf32>
    %92 = arith.divf %90, %91 : vector<8x128xf32>
    %93 = vector.extract_strided_slice %80 {offsets = [0, 256], sizes = [8, 128], strides = [1, 1]} : vector<8x512xf32> to vector<8x128xf32>
    %94 = math.tanh %93 : vector<8x128xf32>
    %95 = vector.extract_strided_slice %80 {offsets = [0, 384], sizes = [8, 128], strides = [1, 1]} : vector<8x512xf32> to vector<8x128xf32>
    %96 = arith.negf %95 : vector<8x128xf32>
    %97 = math.exp %96 : vector<8x128xf32>
    %cst_31 = arith.constant 1.000000e+00 : f32
    %98 = vector.broadcast %cst_31 : f32 to vector<8x128xf32>
    %99 = arith.addf %98, %97 : vector<8x128xf32>
    %100 = arith.divf %98, %99 : vector<8x128xf32>
    %101 = arith.mulf %92, %38 : vector<8x128xf32>
    %102 = arith.mulf %86, %94 : vector<8x128xf32>
    %103 = arith.addf %101, %102 : vector<8x128xf32>
    %104 = math.tanh %103 : vector<8x128xf32>
    %105 = arith.mulf %100, %104 : vector<8x128xf32>
    %106 = arith.truncf %105 : vector<8x128xf32> to vector<8x128xbf16>
    %c0_32 = arith.constant 0 : index
    %c0_33 = arith.constant 0 : index
    %107 = vector.load %arg4[%c0_32, %c0_33] : memref<128x512xbf16, #tpu.memory_space<vmem>>, vector<128x512xbf16>
    %cst_34 = arith.constant dense<0.000000e+00> : vector<8x512xf32>
    %108 = tpu.matmul %106, %107, %cst_34 {dimension_numbers = #tpu.dot_dimension_numbers<[1], [0], [0], [1], [0, 0, 1, 1], [], []>} : vector<8x128xbf16>, vector<128x512xbf16>, vector<8x512xf32> -> vector<8x512xf32>
    %c0_35 = arith.constant 0 : index
    %c0_36 = arith.constant 0 : index
    %109 = vector.load %arg6[%c0_35, %c0_36] : memref<1x512xf32, #tpu.memory_space<vmem>>, vector<1x512xf32>
    %110 = vector.broadcast %109 : vector<1x512xf32> to vector<8x512xf32>
    %111 = arith.addf %108, %110 : vector<8x512xf32>
    %112 = arith.truncf %75 : vector<8x128xf32> to vector<8x128xbf16>
    %c0_37 = arith.constant 0 : index
    %c0_38 = arith.constant 0 : index
    %113 = vector.load %arg5[%c0_37, %c0_38] : memref<128x512xbf16, #tpu.memory_space<vmem>>, vector<128x512xbf16>
    %cst_39 = arith.constant dense<0.000000e+00> : vector<8x512xf32>
    %114 = tpu.matmul %112, %113, %cst_39 {dimension_numbers = #tpu.dot_dimension_numbers<[1], [0], [0], [1], [0, 0, 1, 1], [], []>} : vector<8x128xbf16>, vector<128x512xbf16>, vector<8x512xf32> -> vector<8x512xf32>
    %115 = arith.addf %111, %114 : vector<8x512xf32>
    %116 = vector.extract_strided_slice %115 {offsets = [0, 0], sizes = [8, 128], strides = [1, 1]} : vector<8x512xf32> to vector<8x128xf32>
    %117 = arith.negf %116 : vector<8x128xf32>
    %118 = math.exp %117 : vector<8x128xf32>
    %cst_40 = arith.constant 1.000000e+00 : f32
    %119 = vector.broadcast %cst_40 : f32 to vector<8x128xf32>
    %120 = arith.addf %119, %118 : vector<8x128xf32>
    %121 = arith.divf %119, %120 : vector<8x128xf32>
    %122 = vector.extract_strided_slice %115 {offsets = [0, 128], sizes = [8, 128], strides = [1, 1]} : vector<8x512xf32> to vector<8x128xf32>
    %123 = arith.negf %122 : vector<8x128xf32>
    %124 = math.exp %123 : vector<8x128xf32>
    %cst_41 = arith.constant 1.000000e+00 : f32
    %125 = vector.broadcast %cst_41 : f32 to vector<8x128xf32>
    %126 = arith.addf %125, %124 : vector<8x128xf32>
    %127 = arith.divf %125, %126 : vector<8x128xf32>
    %128 = vector.extract_strided_slice %115 {offsets = [0, 256], sizes = [8, 128], strides = [1, 1]} : vector<8x512xf32> to vector<8x128xf32>
    %129 = math.tanh %128 : vector<8x128xf32>
    %130 = vector.extract_strided_slice %115 {offsets = [0, 384], sizes = [8, 128], strides = [1, 1]} : vector<8x512xf32> to vector<8x128xf32>
    %131 = arith.negf %130 : vector<8x128xf32>
    %132 = math.exp %131 : vector<8x128xf32>
    %cst_42 = arith.constant 1.000000e+00 : f32
    %133 = vector.broadcast %cst_42 : f32 to vector<8x128xf32>
    %134 = arith.addf %133, %132 : vector<8x128xf32>
    %135 = arith.divf %133, %134 : vector<8x128xf32>
    %136 = arith.mulf %127, %73 : vector<8x128xf32>
    %137 = arith.mulf %121, %129 : vector<8x128xf32>
    %138 = arith.addf %136, %137 : vector<8x128xf32>
    %139 = math.tanh %138 : vector<8x128xf32>
    %140 = arith.mulf %135, %139 : vector<8x128xf32>
    %141 = vector.extract_strided_slice %6 {offsets = [16, 0], sizes = [8, 512], strides = [1, 1]} : vector<64x512xf32> to vector<8x512xf32>
    %142 = arith.truncf %105 : vector<8x128xf32> to vector<8x128xbf16>
    %c0_43 = arith.constant 0 : index
    %c0_44 = arith.constant 0 : index
    %143 = vector.load %arg2[%c0_43, %c0_44] : memref<128x512xbf16, #tpu.memory_space<vmem>>, vector<128x512xbf16>
    %cst_45 = arith.constant dense<0.000000e+00> : vector<8x512xf32>
    %144 = tpu.matmul %142, %143, %cst_45 {dimension_numbers = #tpu.dot_dimension_numbers<[1], [0], [0], [1], [0, 0, 1, 1], [], []>} : vector<8x128xbf16>, vector<128x512xbf16>, vector<8x512xf32> -> vector<8x512xf32>
    %145 = arith.addf %141, %144 : vector<8x512xf32>
    %146 = vector.extract_strided_slice %145 {offsets = [0, 0], sizes = [8, 128], strides = [1, 1]} : vector<8x512xf32> to vector<8x128xf32>
    %147 = arith.negf %146 : vector<8x128xf32>
    %148 = math.exp %147 : vector<8x128xf32>
    %cst_46 = arith.constant 1.000000e+00 : f32
    %149 = vector.broadcast %cst_46 : f32 to vector<8x128xf32>
    %150 = arith.addf %149, %148 : vector<8x128xf32>
    %151 = arith.divf %149, %150 : vector<8x128xf32>
    %152 = vector.extract_strided_slice %145 {offsets = [0, 128], sizes = [8, 128], strides = [1, 1]} : vector<8x512xf32> to vector<8x128xf32>
    %153 = arith.negf %152 : vector<8x128xf32>
    %154 = math.exp %153 : vector<8x128xf32>
    %cst_47 = arith.constant 1.000000e+00 : f32
    %155 = vector.broadcast %cst_47 : f32 to vector<8x128xf32>
    %156 = arith.addf %155, %154 : vector<8x128xf32>
    %157 = arith.divf %155, %156 : vector<8x128xf32>
    %158 = vector.extract_strided_slice %145 {offsets = [0, 256], sizes = [8, 128], strides = [1, 1]} : vector<8x512xf32> to vector<8x128xf32>
    %159 = math.tanh %158 : vector<8x128xf32>
    %160 = vector.extract_strided_slice %145 {offsets = [0, 384], sizes = [8, 128], strides = [1, 1]} : vector<8x512xf32> to vector<8x128xf32>
    %161 = arith.negf %160 : vector<8x128xf32>
    %162 = math.exp %161 : vector<8x128xf32>
    %cst_48 = arith.constant 1.000000e+00 : f32
    %163 = vector.broadcast %cst_48 : f32 to vector<8x128xf32>
    %164 = arith.addf %163, %162 : vector<8x128xf32>
    %165 = arith.divf %163, %164 : vector<8x128xf32>
    %166 = arith.mulf %157, %103 : vector<8x128xf32>
    %167 = arith.mulf %151, %159 : vector<8x128xf32>
    %168 = arith.addf %166, %167 : vector<8x128xf32>
    %169 = math.tanh %168 : vector<8x128xf32>
    %170 = arith.mulf %165, %169 : vector<8x128xf32>
    %171 = arith.truncf %170 : vector<8x128xf32> to vector<8x128xbf16>
    %c0_49 = arith.constant 0 : index
    %c0_50 = arith.constant 0 : index
    %172 = vector.load %arg4[%c0_49, %c0_50] : memref<128x512xbf16, #tpu.memory_space<vmem>>, vector<128x512xbf16>
    %cst_51 = arith.constant dense<0.000000e+00> : vector<8x512xf32>
    %173 = tpu.matmul %171, %172, %cst_51 {dimension_numbers = #tpu.dot_dimension_numbers<[1], [0], [0], [1], [0, 0, 1, 1], [], []>} : vector<8x128xbf16>, vector<128x512xbf16>, vector<8x512xf32> -> vector<8x512xf32>
    %c0_52 = arith.constant 0 : index
    %c0_53 = arith.constant 0 : index
    %174 = vector.load %arg6[%c0_52, %c0_53] : memref<1x512xf32, #tpu.memory_space<vmem>>, vector<1x512xf32>
    %175 = vector.broadcast %174 : vector<1x512xf32> to vector<8x512xf32>
    %176 = arith.addf %173, %175 : vector<8x512xf32>
    %177 = arith.truncf %140 : vector<8x128xf32> to vector<8x128xbf16>
    %c0_54 = arith.constant 0 : index
    %c0_55 = arith.constant 0 : index
    %178 = vector.load %arg5[%c0_54, %c0_55] : memref<128x512xbf16, #tpu.memory_space<vmem>>, vector<128x512xbf16>
    %cst_56 = arith.constant dense<0.000000e+00> : vector<8x512xf32>
    %179 = tpu.matmul %177, %178, %cst_56 {dimension_numbers = #tpu.dot_dimension_numbers<[1], [0], [0], [1], [0, 0, 1, 1], [], []>} : vector<8x128xbf16>, vector<128x512xbf16>, vector<8x512xf32> -> vector<8x512xf32>
    %180 = arith.addf %176, %179 : vector<8x512xf32>
    %181 = vector.extract_strided_slice %180 {offsets = [0, 0], sizes = [8, 128], strides = [1, 1]} : vector<8x512xf32> to vector<8x128xf32>
    %182 = arith.negf %181 : vector<8x128xf32>
    %183 = math.exp %182 : vector<8x128xf32>
    %cst_57 = arith.constant 1.000000e+00 : f32
    %184 = vector.broadcast %cst_57 : f32 to vector<8x128xf32>
    %185 = arith.addf %184, %183 : vector<8x128xf32>
    %186 = arith.divf %184, %185 : vector<8x128xf32>
    %187 = vector.extract_strided_slice %180 {offsets = [0, 128], sizes = [8, 128], strides = [1, 1]} : vector<8x512xf32> to vector<8x128xf32>
    %188 = arith.negf %187 : vector<8x128xf32>
    %189 = math.exp %188 : vector<8x128xf32>
    %cst_58 = arith.constant 1.000000e+00 : f32
    %190 = vector.broadcast %cst_58 : f32 to vector<8x128xf32>
    %191 = arith.addf %190, %189 : vector<8x128xf32>
    %192 = arith.divf %190, %191 : vector<8x128xf32>
    %193 = vector.extract_strided_slice %180 {offsets = [0, 256], sizes = [8, 128], strides = [1, 1]} : vector<8x512xf32> to vector<8x128xf32>
    %194 = math.tanh %193 : vector<8x128xf32>
    %195 = vector.extract_strided_slice %180 {offsets = [0, 384], sizes = [8, 128], strides = [1, 1]} : vector<8x512xf32> to vector<8x128xf32>
    %196 = arith.negf %195 : vector<8x128xf32>
    %197 = math.exp %196 : vector<8x128xf32>
    %cst_59 = arith.constant 1.000000e+00 : f32
    %198 = vector.broadcast %cst_59 : f32 to vector<8x128xf32>
    %199 = arith.addf %198, %197 : vector<8x128xf32>
    %200 = arith.divf %198, %199 : vector<8x128xf32>
    %201 = arith.mulf %192, %138 : vector<8x128xf32>
    %202 = arith.mulf %186, %194 : vector<8x128xf32>
    %203 = arith.addf %201, %202 : vector<8x128xf32>
    %204 = math.tanh %203 : vector<8x128xf32>
    %205 = arith.mulf %200, %204 : vector<8x128xf32>
    %206 = vector.extract_strided_slice %6 {offsets = [24, 0], sizes = [8, 512], strides = [1, 1]} : vector<64x512xf32> to vector<8x512xf32>
    %207 = arith.truncf %170 : vector<8x128xf32> to vector<8x128xbf16>
    %c0_60 = arith.constant 0 : index
    %c0_61 = arith.constant 0 : index
    %208 = vector.load %arg2[%c0_60, %c0_61] : memref<128x512xbf16, #tpu.memory_space<vmem>>, vector<128x512xbf16>
    %cst_62 = arith.constant dense<0.000000e+00> : vector<8x512xf32>
    %209 = tpu.matmul %207, %208, %cst_62 {dimension_numbers = #tpu.dot_dimension_numbers<[1], [0], [0], [1], [0, 0, 1, 1], [], []>} : vector<8x128xbf16>, vector<128x512xbf16>, vector<8x512xf32> -> vector<8x512xf32>
    %210 = arith.addf %206, %209 : vector<8x512xf32>
    %211 = vector.extract_strided_slice %210 {offsets = [0, 0], sizes = [8, 128], strides = [1, 1]} : vector<8x512xf32> to vector<8x128xf32>
    %212 = arith.negf %211 : vector<8x128xf32>
    %213 = math.exp %212 : vector<8x128xf32>
    %cst_63 = arith.constant 1.000000e+00 : f32
    %214 = vector.broadcast %cst_63 : f32 to vector<8x128xf32>
    %215 = arith.addf %214, %213 : vector<8x128xf32>
    %216 = arith.divf %214, %215 : vector<8x128xf32>
    %217 = vector.extract_strided_slice %210 {offsets = [0, 128], sizes = [8, 128], strides = [1, 1]} : vector<8x512xf32> to vector<8x128xf32>
    %218 = arith.negf %217 : vector<8x128xf32>
    %219 = math.exp %218 : vector<8x128xf32>
    %cst_64 = arith.constant 1.000000e+00 : f32
    %220 = vector.broadcast %cst_64 : f32 to vector<8x128xf32>
    %221 = arith.addf %220, %219 : vector<8x128xf32>
    %222 = arith.divf %220, %221 : vector<8x128xf32>
    %223 = vector.extract_strided_slice %210 {offsets = [0, 256], sizes = [8, 128], strides = [1, 1]} : vector<8x512xf32> to vector<8x128xf32>
    %224 = math.tanh %223 : vector<8x128xf32>
    %225 = vector.extract_strided_slice %210 {offsets = [0, 384], sizes = [8, 128], strides = [1, 1]} : vector<8x512xf32> to vector<8x128xf32>
    %226 = arith.negf %225 : vector<8x128xf32>
    %227 = math.exp %226 : vector<8x128xf32>
    %cst_65 = arith.constant 1.000000e+00 : f32
    %228 = vector.broadcast %cst_65 : f32 to vector<8x128xf32>
    %229 = arith.addf %228, %227 : vector<8x128xf32>
    %230 = arith.divf %228, %229 : vector<8x128xf32>
    %231 = arith.mulf %222, %168 : vector<8x128xf32>
    %232 = arith.mulf %216, %224 : vector<8x128xf32>
    %233 = arith.addf %231, %232 : vector<8x128xf32>
    %234 = math.tanh %233 : vector<8x128xf32>
    %235 = arith.mulf %230, %234 : vector<8x128xf32>
    %236 = arith.truncf %235 : vector<8x128xf32> to vector<8x128xbf16>
    %c0_66 = arith.constant 0 : index
    %c0_67 = arith.constant 0 : index
    %237 = vector.load %arg4[%c0_66, %c0_67] : memref<128x512xbf16, #tpu.memory_space<vmem>>, vector<128x512xbf16>
    %cst_68 = arith.constant dense<0.000000e+00> : vector<8x512xf32>
    %238 = tpu.matmul %236, %237, %cst_68 {dimension_numbers = #tpu.dot_dimension_numbers<[1], [0], [0], [1], [0, 0, 1, 1], [], []>} : vector<8x128xbf16>, vector<128x512xbf16>, vector<8x512xf32> -> vector<8x512xf32>
    %c0_69 = arith.constant 0 : index
    %c0_70 = arith.constant 0 : index
    %239 = vector.load %arg6[%c0_69, %c0_70] : memref<1x512xf32, #tpu.memory_space<vmem>>, vector<1x512xf32>
    %240 = vector.broadcast %239 : vector<1x512xf32> to vector<8x512xf32>
    %241 = arith.addf %238, %240 : vector<8x512xf32>
    %242 = arith.truncf %205 : vector<8x128xf32> to vector<8x128xbf16>
    %c0_71 = arith.constant 0 : index
    %c0_72 = arith.constant 0 : index
    %243 = vector.load %arg5[%c0_71, %c0_72] : memref<128x512xbf16, #tpu.memory_space<vmem>>, vector<128x512xbf16>
    %cst_73 = arith.constant dense<0.000000e+00> : vector<8x512xf32>
    %244 = tpu.matmul %242, %243, %cst_73 {dimension_numbers = #tpu.dot_dimension_numbers<[1], [0], [0], [1], [0, 0, 1, 1], [], []>} : vector<8x128xbf16>, vector<128x512xbf16>, vector<8x512xf32> -> vector<8x512xf32>
    %245 = arith.addf %241, %244 : vector<8x512xf32>
    %246 = vector.extract_strided_slice %245 {offsets = [0, 0], sizes = [8, 128], strides = [1, 1]} : vector<8x512xf32> to vector<8x128xf32>
    %247 = arith.negf %246 : vector<8x128xf32>
    %248 = math.exp %247 : vector<8x128xf32>
    %cst_74 = arith.constant 1.000000e+00 : f32
    %249 = vector.broadcast %cst_74 : f32 to vector<8x128xf32>
    %250 = arith.addf %249, %248 : vector<8x128xf32>
    %251 = arith.divf %249, %250 : vector<8x128xf32>
    %252 = vector.extract_strided_slice %245 {offsets = [0, 128], sizes = [8, 128], strides = [1, 1]} : vector<8x512xf32> to vector<8x128xf32>
    %253 = arith.negf %252 : vector<8x128xf32>
    %254 = math.exp %253 : vector<8x128xf32>
    %cst_75 = arith.constant 1.000000e+00 : f32
    %255 = vector.broadcast %cst_75 : f32 to vector<8x128xf32>
    %256 = arith.addf %255, %254 : vector<8x128xf32>
    %257 = arith.divf %255, %256 : vector<8x128xf32>
    %258 = vector.extract_strided_slice %245 {offsets = [0, 256], sizes = [8, 128], strides = [1, 1]} : vector<8x512xf32> to vector<8x128xf32>
    %259 = math.tanh %258 : vector<8x128xf32>
    %260 = vector.extract_strided_slice %245 {offsets = [0, 384], sizes = [8, 128], strides = [1, 1]} : vector<8x512xf32> to vector<8x128xf32>
    %261 = arith.negf %260 : vector<8x128xf32>
    %262 = math.exp %261 : vector<8x128xf32>
    %cst_76 = arith.constant 1.000000e+00 : f32
    %263 = vector.broadcast %cst_76 : f32 to vector<8x128xf32>
    %264 = arith.addf %263, %262 : vector<8x128xf32>
    %265 = arith.divf %263, %264 : vector<8x128xf32>
    %266 = arith.mulf %257, %203 : vector<8x128xf32>
    %267 = arith.mulf %251, %259 : vector<8x128xf32>
    %268 = arith.addf %266, %267 : vector<8x128xf32>
    %269 = math.tanh %268 : vector<8x128xf32>
    %270 = arith.mulf %265, %269 : vector<8x128xf32>
    %271 = vector.extract_strided_slice %6 {offsets = [32, 0], sizes = [8, 512], strides = [1, 1]} : vector<64x512xf32> to vector<8x512xf32>
    %272 = arith.truncf %235 : vector<8x128xf32> to vector<8x128xbf16>
    %c0_77 = arith.constant 0 : index
    %c0_78 = arith.constant 0 : index
    %273 = vector.load %arg2[%c0_77, %c0_78] : memref<128x512xbf16, #tpu.memory_space<vmem>>, vector<128x512xbf16>
    %cst_79 = arith.constant dense<0.000000e+00> : vector<8x512xf32>
    %274 = tpu.matmul %272, %273, %cst_79 {dimension_numbers = #tpu.dot_dimension_numbers<[1], [0], [0], [1], [0, 0, 1, 1], [], []>} : vector<8x128xbf16>, vector<128x512xbf16>, vector<8x512xf32> -> vector<8x512xf32>
    %275 = arith.addf %271, %274 : vector<8x512xf32>
    %276 = vector.extract_strided_slice %275 {offsets = [0, 0], sizes = [8, 128], strides = [1, 1]} : vector<8x512xf32> to vector<8x128xf32>
    %277 = arith.negf %276 : vector<8x128xf32>
    %278 = math.exp %277 : vector<8x128xf32>
    %cst_80 = arith.constant 1.000000e+00 : f32
    %279 = vector.broadcast %cst_80 : f32 to vector<8x128xf32>
    %280 = arith.addf %279, %278 : vector<8x128xf32>
    %281 = arith.divf %279, %280 : vector<8x128xf32>
    %282 = vector.extract_strided_slice %275 {offsets = [0, 128], sizes = [8, 128], strides = [1, 1]} : vector<8x512xf32> to vector<8x128xf32>
    %283 = arith.negf %282 : vector<8x128xf32>
    %284 = math.exp %283 : vector<8x128xf32>
    %cst_81 = arith.constant 1.000000e+00 : f32
    %285 = vector.broadcast %cst_81 : f32 to vector<8x128xf32>
    %286 = arith.addf %285, %284 : vector<8x128xf32>
    %287 = arith.divf %285, %286 : vector<8x128xf32>
    %288 = vector.extract_strided_slice %275 {offsets = [0, 256], sizes = [8, 128], strides = [1, 1]} : vector<8x512xf32> to vector<8x128xf32>
    %289 = math.tanh %288 : vector<8x128xf32>
    %290 = vector.extract_strided_slice %275 {offsets = [0, 384], sizes = [8, 128], strides = [1, 1]} : vector<8x512xf32> to vector<8x128xf32>
    %291 = arith.negf %290 : vector<8x128xf32>
    %292 = math.exp %291 : vector<8x128xf32>
    %cst_82 = arith.constant 1.000000e+00 : f32
    %293 = vector.broadcast %cst_82 : f32 to vector<8x128xf32>
    %294 = arith.addf %293, %292 : vector<8x128xf32>
    %295 = arith.divf %293, %294 : vector<8x128xf32>
    %296 = arith.mulf %287, %233 : vector<8x128xf32>
    %297 = arith.mulf %281, %289 : vector<8x128xf32>
    %298 = arith.addf %296, %297 : vector<8x128xf32>
    %299 = math.tanh %298 : vector<8x128xf32>
    %300 = arith.mulf %295, %299 : vector<8x128xf32>
    %301 = arith.truncf %300 : vector<8x128xf32> to vector<8x128xbf16>
    %c0_83 = arith.constant 0 : index
    %c0_84 = arith.constant 0 : index
    %302 = vector.load %arg4[%c0_83, %c0_84] : memref<128x512xbf16, #tpu.memory_space<vmem>>, vector<128x512xbf16>
    %cst_85 = arith.constant dense<0.000000e+00> : vector<8x512xf32>
    %303 = tpu.matmul %301, %302, %cst_85 {dimension_numbers = #tpu.dot_dimension_numbers<[1], [0], [0], [1], [0, 0, 1, 1], [], []>} : vector<8x128xbf16>, vector<128x512xbf16>, vector<8x512xf32> -> vector<8x512xf32>
    %c0_86 = arith.constant 0 : index
    %c0_87 = arith.constant 0 : index
    %304 = vector.load %arg6[%c0_86, %c0_87] : memref<1x512xf32, #tpu.memory_space<vmem>>, vector<1x512xf32>
    %305 = vector.broadcast %304 : vector<1x512xf32> to vector<8x512xf32>
    %306 = arith.addf %303, %305 : vector<8x512xf32>
    %307 = arith.truncf %270 : vector<8x128xf32> to vector<8x128xbf16>
    %c0_88 = arith.constant 0 : index
    %c0_89 = arith.constant 0 : index
    %308 = vector.load %arg5[%c0_88, %c0_89] : memref<128x512xbf16, #tpu.memory_space<vmem>>, vector<128x512xbf16>
    %cst_90 = arith.constant dense<0.000000e+00> : vector<8x512xf32>
    %309 = tpu.matmul %307, %308, %cst_90 {dimension_numbers = #tpu.dot_dimension_numbers<[1], [0], [0], [1], [0, 0, 1, 1], [], []>} : vector<8x128xbf16>, vector<128x512xbf16>, vector<8x512xf32> -> vector<8x512xf32>
    %310 = arith.addf %306, %309 : vector<8x512xf32>
    %311 = vector.extract_strided_slice %310 {offsets = [0, 0], sizes = [8, 128], strides = [1, 1]} : vector<8x512xf32> to vector<8x128xf32>
    %312 = arith.negf %311 : vector<8x128xf32>
    %313 = math.exp %312 : vector<8x128xf32>
    %cst_91 = arith.constant 1.000000e+00 : f32
    %314 = vector.broadcast %cst_91 : f32 to vector<8x128xf32>
    %315 = arith.addf %314, %313 : vector<8x128xf32>
    %316 = arith.divf %314, %315 : vector<8x128xf32>
    %317 = vector.extract_strided_slice %310 {offsets = [0, 128], sizes = [8, 128], strides = [1, 1]} : vector<8x512xf32> to vector<8x128xf32>
    %318 = arith.negf %317 : vector<8x128xf32>
    %319 = math.exp %318 : vector<8x128xf32>
    %cst_92 = arith.constant 1.000000e+00 : f32
    %320 = vector.broadcast %cst_92 : f32 to vector<8x128xf32>
    %321 = arith.addf %320, %319 : vector<8x128xf32>
    %322 = arith.divf %320, %321 : vector<8x128xf32>
    %323 = vector.extract_strided_slice %310 {offsets = [0, 256], sizes = [8, 128], strides = [1, 1]} : vector<8x512xf32> to vector<8x128xf32>
    %324 = math.tanh %323 : vector<8x128xf32>
    %325 = vector.extract_strided_slice %310 {offsets = [0, 384], sizes = [8, 128], strides = [1, 1]} : vector<8x512xf32> to vector<8x128xf32>
    %326 = arith.negf %325 : vector<8x128xf32>
    %327 = math.exp %326 : vector<8x128xf32>
    %cst_93 = arith.constant 1.000000e+00 : f32
    %328 = vector.broadcast %cst_93 : f32 to vector<8x128xf32>
    %329 = arith.addf %328, %327 : vector<8x128xf32>
    %330 = arith.divf %328, %329 : vector<8x128xf32>
    %331 = arith.mulf %322, %268 : vector<8x128xf32>
    %332 = arith.mulf %316, %324 : vector<8x128xf32>
    %333 = arith.addf %331, %332 : vector<8x128xf32>
    %334 = math.tanh %333 : vector<8x128xf32>
    %335 = arith.mulf %330, %334 : vector<8x128xf32>
    %336 = vector.extract_strided_slice %6 {offsets = [40, 0], sizes = [8, 512], strides = [1, 1]} : vector<64x512xf32> to vector<8x512xf32>
    %337 = arith.truncf %300 : vector<8x128xf32> to vector<8x128xbf16>
    %c0_94 = arith.constant 0 : index
    %c0_95 = arith.constant 0 : index
    %338 = vector.load %arg2[%c0_94, %c0_95] : memref<128x512xbf16, #tpu.memory_space<vmem>>, vector<128x512xbf16>
    %cst_96 = arith.constant dense<0.000000e+00> : vector<8x512xf32>
    %339 = tpu.matmul %337, %338, %cst_96 {dimension_numbers = #tpu.dot_dimension_numbers<[1], [0], [0], [1], [0, 0, 1, 1], [], []>} : vector<8x128xbf16>, vector<128x512xbf16>, vector<8x512xf32> -> vector<8x512xf32>
    %340 = arith.addf %336, %339 : vector<8x512xf32>
    %341 = vector.extract_strided_slice %340 {offsets = [0, 0], sizes = [8, 128], strides = [1, 1]} : vector<8x512xf32> to vector<8x128xf32>
    %342 = arith.negf %341 : vector<8x128xf32>
    %343 = math.exp %342 : vector<8x128xf32>
    %cst_97 = arith.constant 1.000000e+00 : f32
    %344 = vector.broadcast %cst_97 : f32 to vector<8x128xf32>
    %345 = arith.addf %344, %343 : vector<8x128xf32>
    %346 = arith.divf %344, %345 : vector<8x128xf32>
    %347 = vector.extract_strided_slice %340 {offsets = [0, 128], sizes = [8, 128], strides = [1, 1]} : vector<8x512xf32> to vector<8x128xf32>
    %348 = arith.negf %347 : vector<8x128xf32>
    %349 = math.exp %348 : vector<8x128xf32>
    %cst_98 = arith.constant 1.000000e+00 : f32
    %350 = vector.broadcast %cst_98 : f32 to vector<8x128xf32>
    %351 = arith.addf %350, %349 : vector<8x128xf32>
    %352 = arith.divf %350, %351 : vector<8x128xf32>
    %353 = vector.extract_strided_slice %340 {offsets = [0, 256], sizes = [8, 128], strides = [1, 1]} : vector<8x512xf32> to vector<8x128xf32>
    %354 = math.tanh %353 : vector<8x128xf32>
    %355 = vector.extract_strided_slice %340 {offsets = [0, 384], sizes = [8, 128], strides = [1, 1]} : vector<8x512xf32> to vector<8x128xf32>
    %356 = arith.negf %355 : vector<8x128xf32>
    %357 = math.exp %356 : vector<8x128xf32>
    %cst_99 = arith.constant 1.000000e+00 : f32
    %358 = vector.broadcast %cst_99 : f32 to vector<8x128xf32>
    %359 = arith.addf %358, %357 : vector<8x128xf32>
    %360 = arith.divf %358, %359 : vector<8x128xf32>
    %361 = arith.mulf %352, %298 : vector<8x128xf32>
    %362 = arith.mulf %346, %354 : vector<8x128xf32>
    %363 = arith.addf %361, %362 : vector<8x128xf32>
    %364 = math.tanh %363 : vector<8x128xf32>
    %365 = arith.mulf %360, %364 : vector<8x128xf32>
    %366 = arith.truncf %365 : vector<8x128xf32> to vector<8x128xbf16>
    %c0_100 = arith.constant 0 : index
    %c0_101 = arith.constant 0 : index
    %367 = vector.load %arg4[%c0_100, %c0_101] : memref<128x512xbf16, #tpu.memory_space<vmem>>, vector<128x512xbf16>
    %cst_102 = arith.constant dense<0.000000e+00> : vector<8x512xf32>
    %368 = tpu.matmul %366, %367, %cst_102 {dimension_numbers = #tpu.dot_dimension_numbers<[1], [0], [0], [1], [0, 0, 1, 1], [], []>} : vector<8x128xbf16>, vector<128x512xbf16>, vector<8x512xf32> -> vector<8x512xf32>
    %c0_103 = arith.constant 0 : index
    %c0_104 = arith.constant 0 : index
    %369 = vector.load %arg6[%c0_103, %c0_104] : memref<1x512xf32, #tpu.memory_space<vmem>>, vector<1x512xf32>
    %370 = vector.broadcast %369 : vector<1x512xf32> to vector<8x512xf32>
    %371 = arith.addf %368, %370 : vector<8x512xf32>
    %372 = arith.truncf %335 : vector<8x128xf32> to vector<8x128xbf16>
    %c0_105 = arith.constant 0 : index
    %c0_106 = arith.constant 0 : index
    %373 = vector.load %arg5[%c0_105, %c0_106] : memref<128x512xbf16, #tpu.memory_space<vmem>>, vector<128x512xbf16>
    %cst_107 = arith.constant dense<0.000000e+00> : vector<8x512xf32>
    %374 = tpu.matmul %372, %373, %cst_107 {dimension_numbers = #tpu.dot_dimension_numbers<[1], [0], [0], [1], [0, 0, 1, 1], [], []>} : vector<8x128xbf16>, vector<128x512xbf16>, vector<8x512xf32> -> vector<8x512xf32>
    %375 = arith.addf %371, %374 : vector<8x512xf32>
    %376 = vector.extract_strided_slice %375 {offsets = [0, 0], sizes = [8, 128], strides = [1, 1]} : vector<8x512xf32> to vector<8x128xf32>
    %377 = arith.negf %376 : vector<8x128xf32>
    %378 = math.exp %377 : vector<8x128xf32>
    %cst_108 = arith.constant 1.000000e+00 : f32
    %379 = vector.broadcast %cst_108 : f32 to vector<8x128xf32>
    %380 = arith.addf %379, %378 : vector<8x128xf32>
    %381 = arith.divf %379, %380 : vector<8x128xf32>
    %382 = vector.extract_strided_slice %375 {offsets = [0, 128], sizes = [8, 128], strides = [1, 1]} : vector<8x512xf32> to vector<8x128xf32>
    %383 = arith.negf %382 : vector<8x128xf32>
    %384 = math.exp %383 : vector<8x128xf32>
    %cst_109 = arith.constant 1.000000e+00 : f32
    %385 = vector.broadcast %cst_109 : f32 to vector<8x128xf32>
    %386 = arith.addf %385, %384 : vector<8x128xf32>
    %387 = arith.divf %385, %386 : vector<8x128xf32>
    %388 = vector.extract_strided_slice %375 {offsets = [0, 256], sizes = [8, 128], strides = [1, 1]} : vector<8x512xf32> to vector<8x128xf32>
    %389 = math.tanh %388 : vector<8x128xf32>
    %390 = vector.extract_strided_slice %375 {offsets = [0, 384], sizes = [8, 128], strides = [1, 1]} : vector<8x512xf32> to vector<8x128xf32>
    %391 = arith.negf %390 : vector<8x128xf32>
    %392 = math.exp %391 : vector<8x128xf32>
    %cst_110 = arith.constant 1.000000e+00 : f32
    %393 = vector.broadcast %cst_110 : f32 to vector<8x128xf32>
    %394 = arith.addf %393, %392 : vector<8x128xf32>
    %395 = arith.divf %393, %394 : vector<8x128xf32>
    %396 = arith.mulf %387, %333 : vector<8x128xf32>
    %397 = arith.mulf %381, %389 : vector<8x128xf32>
    %398 = arith.addf %396, %397 : vector<8x128xf32>
    %399 = math.tanh %398 : vector<8x128xf32>
    %400 = arith.mulf %395, %399 : vector<8x128xf32>
    %401 = vector.extract_strided_slice %6 {offsets = [48, 0], sizes = [8, 512], strides = [1, 1]} : vector<64x512xf32> to vector<8x512xf32>
    %402 = arith.truncf %365 : vector<8x128xf32> to vector<8x128xbf16>
    %c0_111 = arith.constant 0 : index
    %c0_112 = arith.constant 0 : index
    %403 = vector.load %arg2[%c0_111, %c0_112] : memref<128x512xbf16, #tpu.memory_space<vmem>>, vector<128x512xbf16>
    %cst_113 = arith.constant dense<0.000000e+00> : vector<8x512xf32>
    %404 = tpu.matmul %402, %403, %cst_113 {dimension_numbers = #tpu.dot_dimension_numbers<[1], [0], [0], [1], [0, 0, 1, 1], [], []>} : vector<8x128xbf16>, vector<128x512xbf16>, vector<8x512xf32> -> vector<8x512xf32>
    %405 = arith.addf %401, %404 : vector<8x512xf32>
    %406 = vector.extract_strided_slice %405 {offsets = [0, 0], sizes = [8, 128], strides = [1, 1]} : vector<8x512xf32> to vector<8x128xf32>
    %407 = arith.negf %406 : vector<8x128xf32>
    %408 = math.exp %407 : vector<8x128xf32>
    %cst_114 = arith.constant 1.000000e+00 : f32
    %409 = vector.broadcast %cst_114 : f32 to vector<8x128xf32>
    %410 = arith.addf %409, %408 : vector<8x128xf32>
    %411 = arith.divf %409, %410 : vector<8x128xf32>
    %412 = vector.extract_strided_slice %405 {offsets = [0, 128], sizes = [8, 128], strides = [1, 1]} : vector<8x512xf32> to vector<8x128xf32>
    %413 = arith.negf %412 : vector<8x128xf32>
    %414 = math.exp %413 : vector<8x128xf32>
    %cst_115 = arith.constant 1.000000e+00 : f32
    %415 = vector.broadcast %cst_115 : f32 to vector<8x128xf32>
    %416 = arith.addf %415, %414 : vector<8x128xf32>
    %417 = arith.divf %415, %416 : vector<8x128xf32>
    %418 = vector.extract_strided_slice %405 {offsets = [0, 256], sizes = [8, 128], strides = [1, 1]} : vector<8x512xf32> to vector<8x128xf32>
    %419 = math.tanh %418 : vector<8x128xf32>
    %420 = vector.extract_strided_slice %405 {offsets = [0, 384], sizes = [8, 128], strides = [1, 1]} : vector<8x512xf32> to vector<8x128xf32>
    %421 = arith.negf %420 : vector<8x128xf32>
    %422 = math.exp %421 : vector<8x128xf32>
    %cst_116 = arith.constant 1.000000e+00 : f32
    %423 = vector.broadcast %cst_116 : f32 to vector<8x128xf32>
    %424 = arith.addf %423, %422 : vector<8x128xf32>
    %425 = arith.divf %423, %424 : vector<8x128xf32>
    %426 = arith.mulf %417, %363 : vector<8x128xf32>
    %427 = arith.mulf %411, %419 : vector<8x128xf32>
    %428 = arith.addf %426, %427 : vector<8x128xf32>
    %429 = math.tanh %428 : vector<8x128xf32>
    %430 = arith.mulf %425, %429 : vector<8x128xf32>
    %431 = arith.truncf %430 : vector<8x128xf32> to vector<8x128xbf16>
    %c0_117 = arith.constant 0 : index
    %c0_118 = arith.constant 0 : index
    %432 = vector.load %arg4[%c0_117, %c0_118] : memref<128x512xbf16, #tpu.memory_space<vmem>>, vector<128x512xbf16>
    %cst_119 = arith.constant dense<0.000000e+00> : vector<8x512xf32>
    %433 = tpu.matmul %431, %432, %cst_119 {dimension_numbers = #tpu.dot_dimension_numbers<[1], [0], [0], [1], [0, 0, 1, 1], [], []>} : vector<8x128xbf16>, vector<128x512xbf16>, vector<8x512xf32> -> vector<8x512xf32>
    %c0_120 = arith.constant 0 : index
    %c0_121 = arith.constant 0 : index
    %434 = vector.load %arg6[%c0_120, %c0_121] : memref<1x512xf32, #tpu.memory_space<vmem>>, vector<1x512xf32>
    %435 = vector.broadcast %434 : vector<1x512xf32> to vector<8x512xf32>
    %436 = arith.addf %433, %435 : vector<8x512xf32>
    %437 = arith.truncf %400 : vector<8x128xf32> to vector<8x128xbf16>
    %c0_122 = arith.constant 0 : index
    %c0_123 = arith.constant 0 : index
    %438 = vector.load %arg5[%c0_122, %c0_123] : memref<128x512xbf16, #tpu.memory_space<vmem>>, vector<128x512xbf16>
    %cst_124 = arith.constant dense<0.000000e+00> : vector<8x512xf32>
    %439 = tpu.matmul %437, %438, %cst_124 {dimension_numbers = #tpu.dot_dimension_numbers<[1], [0], [0], [1], [0, 0, 1, 1], [], []>} : vector<8x128xbf16>, vector<128x512xbf16>, vector<8x512xf32> -> vector<8x512xf32>
    %440 = arith.addf %436, %439 : vector<8x512xf32>
    %441 = vector.extract_strided_slice %440 {offsets = [0, 0], sizes = [8, 128], strides = [1, 1]} : vector<8x512xf32> to vector<8x128xf32>
    %442 = arith.negf %441 : vector<8x128xf32>
    %443 = math.exp %442 : vector<8x128xf32>
    %cst_125 = arith.constant 1.000000e+00 : f32
    %444 = vector.broadcast %cst_125 : f32 to vector<8x128xf32>
    %445 = arith.addf %444, %443 : vector<8x128xf32>
    %446 = arith.divf %444, %445 : vector<8x128xf32>
    %447 = vector.extract_strided_slice %440 {offsets = [0, 128], sizes = [8, 128], strides = [1, 1]} : vector<8x512xf32> to vector<8x128xf32>
    %448 = arith.negf %447 : vector<8x128xf32>
    %449 = math.exp %448 : vector<8x128xf32>
    %cst_126 = arith.constant 1.000000e+00 : f32
    %450 = vector.broadcast %cst_126 : f32 to vector<8x128xf32>
    %451 = arith.addf %450, %449 : vector<8x128xf32>
    %452 = arith.divf %450, %451 : vector<8x128xf32>
    %453 = vector.extract_strided_slice %440 {offsets = [0, 256], sizes = [8, 128], strides = [1, 1]} : vector<8x512xf32> to vector<8x128xf32>
    %454 = math.tanh %453 : vector<8x128xf32>
    %455 = vector.extract_strided_slice %440 {offsets = [0, 384], sizes = [8, 128], strides = [1, 1]} : vector<8x512xf32> to vector<8x128xf32>
    %456 = arith.negf %455 : vector<8x128xf32>
    %457 = math.exp %456 : vector<8x128xf32>
    %cst_127 = arith.constant 1.000000e+00 : f32
    %458 = vector.broadcast %cst_127 : f32 to vector<8x128xf32>
    %459 = arith.addf %458, %457 : vector<8x128xf32>
    %460 = arith.divf %458, %459 : vector<8x128xf32>
    %461 = arith.mulf %452, %398 : vector<8x128xf32>
    %462 = arith.mulf %446, %454 : vector<8x128xf32>
    %463 = arith.addf %461, %462 : vector<8x128xf32>
    %464 = math.tanh %463 : vector<8x128xf32>
    %465 = arith.mulf %460, %464 : vector<8x128xf32>
    %466 = vector.extract_strided_slice %6 {offsets = [56, 0], sizes = [8, 512], strides = [1, 1]} : vector<64x512xf32> to vector<8x512xf32>
    %467 = arith.truncf %430 : vector<8x128xf32> to vector<8x128xbf16>
    %c0_128 = arith.constant 0 : index
    %c0_129 = arith.constant 0 : index
    %468 = vector.load %arg2[%c0_128, %c0_129] : memref<128x512xbf16, #tpu.memory_space<vmem>>, vector<128x512xbf16>
    %cst_130 = arith.constant dense<0.000000e+00> : vector<8x512xf32>
    %469 = tpu.matmul %467, %468, %cst_130 {dimension_numbers = #tpu.dot_dimension_numbers<[1], [0], [0], [1], [0, 0, 1, 1], [], []>} : vector<8x128xbf16>, vector<128x512xbf16>, vector<8x512xf32> -> vector<8x512xf32>
    %470 = arith.addf %466, %469 : vector<8x512xf32>
    %471 = vector.extract_strided_slice %470 {offsets = [0, 0], sizes = [8, 128], strides = [1, 1]} : vector<8x512xf32> to vector<8x128xf32>
    %472 = arith.negf %471 : vector<8x128xf32>
    %473 = math.exp %472 : vector<8x128xf32>
    %cst_131 = arith.constant 1.000000e+00 : f32
    %474 = vector.broadcast %cst_131 : f32 to vector<8x128xf32>
    %475 = arith.addf %474, %473 : vector<8x128xf32>
    %476 = arith.divf %474, %475 : vector<8x128xf32>
    %477 = vector.extract_strided_slice %470 {offsets = [0, 128], sizes = [8, 128], strides = [1, 1]} : vector<8x512xf32> to vector<8x128xf32>
    %478 = arith.negf %477 : vector<8x128xf32>
    %479 = math.exp %478 : vector<8x128xf32>
    %cst_132 = arith.constant 1.000000e+00 : f32
    %480 = vector.broadcast %cst_132 : f32 to vector<8x128xf32>
    %481 = arith.addf %480, %479 : vector<8x128xf32>
    %482 = arith.divf %480, %481 : vector<8x128xf32>
    %483 = vector.extract_strided_slice %470 {offsets = [0, 256], sizes = [8, 128], strides = [1, 1]} : vector<8x512xf32> to vector<8x128xf32>
    %484 = math.tanh %483 : vector<8x128xf32>
    %485 = vector.extract_strided_slice %470 {offsets = [0, 384], sizes = [8, 128], strides = [1, 1]} : vector<8x512xf32> to vector<8x128xf32>
    %486 = arith.negf %485 : vector<8x128xf32>
    %487 = math.exp %486 : vector<8x128xf32>
    %cst_133 = arith.constant 1.000000e+00 : f32
    %488 = vector.broadcast %cst_133 : f32 to vector<8x128xf32>
    %489 = arith.addf %488, %487 : vector<8x128xf32>
    %490 = arith.divf %488, %489 : vector<8x128xf32>
    %491 = arith.mulf %482, %428 : vector<8x128xf32>
    %492 = arith.mulf %476, %484 : vector<8x128xf32>
    %493 = arith.addf %491, %492 : vector<8x128xf32>
    %494 = math.tanh %493 : vector<8x128xf32>
    %495 = arith.mulf %490, %494 : vector<8x128xf32>
    %496 = arith.truncf %495 : vector<8x128xf32> to vector<8x128xbf16>
    %c0_134 = arith.constant 0 : index
    %c0_135 = arith.constant 0 : index
    %497 = vector.load %arg4[%c0_134, %c0_135] : memref<128x512xbf16, #tpu.memory_space<vmem>>, vector<128x512xbf16>
    %cst_136 = arith.constant dense<0.000000e+00> : vector<8x512xf32>
    %498 = tpu.matmul %496, %497, %cst_136 {dimension_numbers = #tpu.dot_dimension_numbers<[1], [0], [0], [1], [0, 0, 1, 1], [], []>} : vector<8x128xbf16>, vector<128x512xbf16>, vector<8x512xf32> -> vector<8x512xf32>
    %c0_137 = arith.constant 0 : index
    %c0_138 = arith.constant 0 : index
    %499 = vector.load %arg6[%c0_137, %c0_138] : memref<1x512xf32, #tpu.memory_space<vmem>>, vector<1x512xf32>
    %500 = vector.broadcast %499 : vector<1x512xf32> to vector<8x512xf32>
    %501 = arith.addf %498, %500 : vector<8x512xf32>
    %502 = arith.truncf %465 : vector<8x128xf32> to vector<8x128xbf16>
    %c0_139 = arith.constant 0 : index
    %c0_140 = arith.constant 0 : index
    %503 = vector.load %arg5[%c0_139, %c0_140] : memref<128x512xbf16, #tpu.memory_space<vmem>>, vector<128x512xbf16>
    %cst_141 = arith.constant dense<0.000000e+00> : vector<8x512xf32>
    %504 = tpu.matmul %502, %503, %cst_141 {dimension_numbers = #tpu.dot_dimension_numbers<[1], [0], [0], [1], [0, 0, 1, 1], [], []>} : vector<8x128xbf16>, vector<128x512xbf16>, vector<8x512xf32> -> vector<8x512xf32>
    %505 = arith.addf %501, %504 : vector<8x512xf32>
    %506 = vector.extract_strided_slice %505 {offsets = [0, 0], sizes = [8, 128], strides = [1, 1]} : vector<8x512xf32> to vector<8x128xf32>
    %507 = arith.negf %506 : vector<8x128xf32>
    %508 = math.exp %507 : vector<8x128xf32>
    %cst_142 = arith.constant 1.000000e+00 : f32
    %509 = vector.broadcast %cst_142 : f32 to vector<8x128xf32>
    %510 = arith.addf %509, %508 : vector<8x128xf32>
    %511 = arith.divf %509, %510 : vector<8x128xf32>
    %512 = vector.extract_strided_slice %505 {offsets = [0, 128], sizes = [8, 128], strides = [1, 1]} : vector<8x512xf32> to vector<8x128xf32>
    %513 = arith.negf %512 : vector<8x128xf32>
    %514 = math.exp %513 : vector<8x128xf32>
    %cst_143 = arith.constant 1.000000e+00 : f32
    %515 = vector.broadcast %cst_143 : f32 to vector<8x128xf32>
    %516 = arith.addf %515, %514 : vector<8x128xf32>
    %517 = arith.divf %515, %516 : vector<8x128xf32>
    %518 = vector.extract_strided_slice %505 {offsets = [0, 256], sizes = [8, 128], strides = [1, 1]} : vector<8x512xf32> to vector<8x128xf32>
    %519 = math.tanh %518 : vector<8x128xf32>
    %520 = vector.extract_strided_slice %505 {offsets = [0, 384], sizes = [8, 128], strides = [1, 1]} : vector<8x512xf32> to vector<8x128xf32>
    %521 = arith.negf %520 : vector<8x128xf32>
    %522 = math.exp %521 : vector<8x128xf32>
    %cst_144 = arith.constant 1.000000e+00 : f32
    %523 = vector.broadcast %cst_144 : f32 to vector<8x128xf32>
    %524 = arith.addf %523, %522 : vector<8x128xf32>
    %525 = arith.divf %523, %524 : vector<8x128xf32>
    %526 = arith.mulf %517, %463 : vector<8x128xf32>
    %527 = arith.mulf %511, %519 : vector<8x128xf32>
    %528 = arith.addf %526, %527 : vector<8x128xf32>
    %529 = math.tanh %528 : vector<8x128xf32>
    %530 = arith.mulf %525, %529 : vector<8x128xf32>
    %c0_145 = arith.constant 0 : index
    %c0_146 = arith.constant 0 : index
    %531 = vector.load %arg7[%c0_145, %c0_146] : memref<128x1xf32, #tpu.memory_space<vmem>>, vector<128x1xf32>
    %cst_147 = arith.constant dense<0.000000e+00> : vector<8x1xf32>
    %532 = tpu.matmul %530, %531, %cst_147 {dimension_numbers = #tpu.dot_dimension_numbers<[1], [0], [0], [1], [0, 0, 1, 1], [], []>} : vector<8x128xf32>, vector<128x1xf32>, vector<8x1xf32> -> vector<8x1xf32>
    %c0_148 = arith.constant 0 : index
    %c0_149 = arith.constant 0 : index
    %533 = vector.load %arg8[%c0_148, %c0_149] : memref<1x1xf32, #tpu.memory_space<vmem>>, vector<1x1xf32>
    %534 = vector.broadcast %533 : vector<1x1xf32> to vector<8x1xf32>
    %535 = arith.addf %532, %534 : vector<8x1xf32>
    %536 = arith.negf %535 : vector<8x1xf32>
    %537 = math.exp %536 : vector<8x1xf32>
    %cst_150 = arith.constant 1.000000e+00 : f32
    %538 = vector.broadcast %cst_150 : f32 to vector<8x1xf32>
    %539 = arith.addf %538, %537 : vector<8x1xf32>
    %540 = arith.divf %538, %539 : vector<8x1xf32>
    %c0_151 = arith.constant 0 : index
    %c0_152 = arith.constant 0 : index
    %541 = vector.load %arg9[%c0_151, %c0_152] : memref<8x1xf32, #tpu.memory_space<vmem>>, vector<8x1xf32>
    tpu.vector_store %arg9[%c0_151, %c0_152], %540 {strides = array<i32>} : memref<8x1xf32, #tpu.memory_space<vmem>>, vector<8x1xf32>,
    return
  }
}

</mosaic_0001>

<llo_original>
// kernel: tuned_lstm_forward.1
$region0: #{tuned_lstm_forward.1}
  #allocation0 [shape = 'u32[]', space=smem, size = 0x4, offset = 0x4, fixed_abs, tag = 'smem constant byte address 0x4 - core index']
  #allocation1 [shape = 'u32[144,128]{1,0:T(1,128)}', space=vmem, size = 0x12000, scoped, tag = 'internal scratch']
  #allocation2 [shape = 'f32[1,1]{1,0:T(1,128)S(1)}', space=vmem, size = 0x200, scoped, tag = 'scoped memory for tuned_lstm_forward.1']
  %s0 = inlined_call_operand.vmem [shape: f32[64,5], index: 0, kind: input, shape index: {}]
  %s1 = inlined_call_operand.hbm [shape: bf16[5,512], index: 1, kind: input, shape index: {}]
  %s2 = inlined_call_operand.vmem [shape: bf16[128,512], index: 2, kind: input, shape index: {}]
  %s3 = inlined_call_operand.hbm [shape: f32[1,512], index: 3, kind: input, shape index: {}]
  %s4 = inlined_call_operand.hbm [shape: bf16[128,512], index: 4, kind: input, shape index: {}]
  %s5 = inlined_call_operand.hbm [shape: bf16[128,512], index: 5, kind: input, shape index: {}]
  %s6 = inlined_call_operand.hbm [shape: f32[1,512], index: 6, kind: input, shape index: {}]
  %s7 = inlined_call_operand.vmem [shape: f32[128,1], index: 7, kind: input, shape index: {}]
  %s8 = inlined_call_operand.<no memory space> [shape: f32[1,1], index: 8, kind: input, shape index: {}]
  %s9 = inlined_call_operand.vmem [shape: f32[8,1], index: 9, kind: output, shape index: {}]
  %s10 = sld [smem:[#allocation0]]
  $region66: #{tuned_lstm_forward.1} parent=0
    _
  %s12 = ssub.s32 1, %s10
  %s13 = scalar_select 0, %s12, %s10
  %v14 = vstv %s8
  %15 = vst [vmem:[#allocation2] sm:$0x1] %v14
  $region1: #{tuned_lstm_forward.1} parent=0
    #allocation3 [shape = 'u8[8192]{0}', space=vmem, size = 0x2000, scoped, tag = 'input window, operand 1, single buffered']
    #allocation4 [shape = 's32[1]{0}', space=sflag, size = 0x4, scoped, tag = 'scoped memory for tuned_lstm_forward.1']
    #allocation5 [shape = 'u8[2048]{0}', space=vmem, size = 0x800, scoped, tag = 'input window, operand 3, single buffered']
    #allocation6 [shape = 's32[1]{0}', space=sflag, size = 0x4, scoped, tag = 'scoped memory for tuned_lstm_forward.1']
    #allocation7 [shape = 'u8[131072]{0}', space=vmem, size = 0x20000, scoped, tag = 'input window, operand 4, single buffered']
    #allocation8 [shape = 'u8[131072]{0}', space=vmem, size = 0x20000, scoped, tag = 'input window, operand 5, single buffered']
    #allocation9 [shape = 's32[1]{0}', space=sflag, size = 0x4, scoped, tag = 'scoped memory for tuned_lstm_forward.1']
    #allocation10 [shape = 'u8[2048]{0}', space=vmem, size = 0x800, scoped, tag = 'input window, operand 6, single buffered']
    %16 = vsyncpa [#allocation4], 0
    %17 = vsyncpa [#allocation6], 0
    %18 = vsyncpa [#allocation9], 0
    // Predicated region
    $region2: #{tuned_lstm_forward.1} parent=1 // pred_check
      _
    $region3: #{tuned_lstm_forward.1} parent=1 // pred_check_branch
      %20 = sbr.rel (0) target = $region5
    $region4: #{tuned_lstm_forward.1} parent=1 // pred_region
      _
    $region5: #{tuned_lstm_forward.1} parent=1 // pred_fallthru
      _
    // Predicated region
    $region6: #{tuned_lstm_forward.1} parent=1 // pred_check
      _
    $region7: #{tuned_lstm_forward.1} parent=1 // pred_check_branch
      %22 = sbr.rel (0) target = $region9
    $region8: #{tuned_lstm_forward.1} parent=1 // pred_region
      %s24 = ssub.s32 256, 256
      %25 = vsyncadd [#allocation4], %s24
      %s27 = sshll.u32 [#allocation3], 4
      %s28 = int_to_ptr.vmem [resolvable:$true] %s27
      %30 = dma.hbm_to_vmem [thread:$0]  %s1, 256, %s28, [#allocation4]
    $region9: #{tuned_lstm_forward.1} parent=1 // pred_fallthru
      _
    // Predicated region
    $region10: #{tuned_lstm_forward.1} parent=1 // pred_check
      _
    $region11: #{tuned_lstm_forward.1} parent=1 // pred_check_branch
      %32 = sbr.rel (0) target = $region13
    $region12: #{tuned_lstm_forward.1} parent=1 // pred_region
      _
    $region13: #{tuned_lstm_forward.1} parent=1 // pred_fallthru
      _
    // Predicated region
    $region14: #{tuned_lstm_forward.1} parent=1 // pred_check
      _
    $region15: #{tuned_lstm_forward.1} parent=1 // pred_check_branch
      %34 = sbr.rel (0) target = $region17
    $region16: #{tuned_lstm_forward.1} parent=1 // pred_region
      %s36 = ssub.s32 64, 64
      %37 = vsyncadd [#allocation6], %s36
      %s39 = sshll.u32 [#allocation5], 4
      %s40 = int_to_ptr.vmem [resolvable:$true] %s39
      %42 = dma.hbm_to_vmem [thread:$0]  %s3, 64, %s40, [#allocation6]
    $region17: #{tuned_lstm_forward.1} parent=1 // pred_fallthru
      _
    // Predicated region
    $region18: #{tuned_lstm_forward.1} parent=1 // pred_check
      _
    $region19: #{tuned_lstm_forward.1} parent=1 // pred_check_branch
      %44 = sbr.rel (0) target = $region21
    $region20: #{tuned_lstm_forward.1} parent=1 // pred_region
      %s46 = ssub.s32 4096, 4096
      %47 = vsyncadd [#allocation6], %s46
      %s48 = sshll.u32 [#allocation7], 4
      %s49 = int_to_ptr.vmem [resolvable:$true] %s48
      %54 = dma.hbm_to_vmem [thread:$0]  %s4, 4096, %s49, [#allocation6], 256, 256, 16
    $region21: #{tuned_lstm_forward.1} parent=1 // pred_fallthru
      _
    // Predicated region
    $region22: #{tuned_lstm_forward.1} parent=1 // pred_check
      _
    $region23: #{tuned_lstm_forward.1} parent=1 // pred_check_branch
      %56 = sbr.rel (0) target = $region25
    $region24: #{tuned_lstm_forward.1} parent=1 // pred_region
      %s58 = ssub.s32 4096, 4096
      %59 = vsyncadd [#allocation9], %s58
      %s60 = sshll.u32 [#allocation8], 4
      %s61 = int_to_ptr.vmem [resolvable:$true] %s60
      %66 = dma.hbm_to_vmem [thread:$0]  %s5, 4096, %s61, [#allocation9], 256, 256, 16
    $region25: #{tuned_lstm_forward.1} parent=1 // pred_fallthru
      _
    // Predicated region
    $region26: #{tuned_lstm_forward.1} parent=1 // pred_check
      _
    $region27: #{tuned_lstm_forward.1} parent=1 // pred_check_branch
      %68 = sbr.rel (0) target = $region29
    $region28: #{tuned_lstm_forward.1} parent=1 // pred_region
      %s70 = ssub.s32 64, 64
      %71 = vsyncadd [#allocation9], %s70
      %s73 = sshll.u32 [#allocation10], 4
      %s74 = int_to_ptr.vmem [resolvable:$true] %s73
      %76 = dma.hbm_to_vmem [thread:$0]  %s6, 64, %s74, [#allocation9]
    $region29: #{tuned_lstm_forward.1} parent=1 // pred_fallthru
      _
    // Predicated region
    $region30: #{tuned_lstm_forward.1} parent=1 // pred_check
      _
    $region31: #{tuned_lstm_forward.1} parent=1 // pred_check_branch
      %78 = sbr.rel (0) target = $region33
    $region32: #{tuned_lstm_forward.1} parent=1 // pred_region
      _
    $region33: #{tuned_lstm_forward.1} parent=1 // pred_fallthru
      _
    // Predicated region
    $region34: #{tuned_lstm_forward.1} parent=1 // pred_check
      _
    $region35: #{tuned_lstm_forward.1} parent=1 // pred_check_branch
      %80 = sbr.rel (0) target = $region37
    $region36: #{tuned_lstm_forward.1} parent=1 // pred_region
      _
    $region37: #{tuned_lstm_forward.1} parent=1 // pred_fallthru
      _
    // Predicated region
    $region38: #{tuned_lstm_forward.1} parent=1 // pred_check
      _
    $region39: #{tuned_lstm_forward.1} parent=1 // pred_check_branch
      %82 = sbr.rel (0) target = $region41
    $region40: #{tuned_lstm_forward.1} parent=1 // pred_region
      %83 = dma.done [#allocation4], 256
    $region41: #{tuned_lstm_forward.1} parent=1 // pred_fallthru
      _
    // Predicated region
    $region42: #{tuned_lstm_forward.1} parent=1 // pred_check
      _
    $region43: #{tuned_lstm_forward.1} parent=1 // pred_check_branch
      %85 = sbr.rel (0) target = $region45
    $region44: #{tuned_lstm_forward.1} parent=1 // pred_region
      %86 = dma.done [#allocation6], 64
    $region45: #{tuned_lstm_forward.1} parent=1 // pred_fallthru
      _
    // Predicated region
    $region46: #{tuned_lstm_forward.1} parent=1 // pred_check
      _
    $region47: #{tuned_lstm_forward.1} parent=1 // pred_check_branch
      %88 = sbr.rel (0) target = $region49
    $region48: #{tuned_lstm_forward.1} parent=1 // pred_region
      %89 = dma.done [#allocation6], 4096
    $region49: #{tuned_lstm_forward.1} parent=1 // pred_fallthru
      _
    // Predicated region
    $region50: #{tuned_lstm_forward.1} parent=1 // pred_check
      _
    $region51: #{tuned_lstm_forward.1} parent=1 // pred_check_branch
      %91 = sbr.rel (0) target = $region53
    $region52: #{tuned_lstm_forward.1} parent=1 // pred_region
      %92 = dma.done [#allocation9], 4096
    $region53: #{tuned_lstm_forward.1} parent=1 // pred_fallthru
      _
    // Predicated region
    $region54: #{tuned_lstm_forward.1} parent=1 // pred_check
      _
    $region55: #{tuned_lstm_forward.1} parent=1 // pred_check_branch
      %94 = sbr.rel (0) target = $region57
    $region56: #{tuned_lstm_forward.1} parent=1 // pred_region
      %95 = dma.done [#allocation9], 64
    $region57: #{tuned_lstm_forward.1} parent=1 // pred_fallthru
      _
    %v97 = vld [vmem:[%s0] sm:$0xff]
    %v98 = vld [vmem:[%s0 + $0x8] sm:$0xff]
    %v99 = vld [vmem:[%s0 + $0x10] sm:$0xff]
    %v100 = vld [vmem:[%s0 + $0x18] sm:$0xff]
    %v101 = vld [vmem:[%s0 + $0x20] sm:$0xff]
    %v102 = vld [vmem:[%s0 + $0x28] sm:$0xff]
    %v103 = vld [vmem:[%s0 + $0x30] sm:$0xff]
    %v104 = vld [vmem:[%s0 + $0x38] sm:$0xff]
    %v105 = vpack.c.bf16 %v98, %v97
    %v106 = vpack.c.bf16 %v100, %v99
    %v107 = vpack.c.bf16 %v102, %v101
    %v108 = vpack.c.bf16 %v104, %v103
    %v109 = vld [vmem:[#allocation3] sm:$0x77]
    %v110 = vld [vmem:[#allocation3 + $0x8] sm:$0x77]
    %v111 = vld [vmem:[#allocation5] sm:$0xf]
    %v113 = vlaneseq
    %v114 = vshrl.u32 %v113, 7
    %v115 = vsub.s32 0, %v114
    %v116 = vrot.slane %v111, %v115
    %v117 = vlaneseq
    %v118 = vshrl.u32 %v117, 7
    %v119 = vsub.s32 1, %v118
    %v120 = vrot.slane %v111, %v119
    %v121 = vlaneseq
    %v122 = vshrl.u32 %v121, 7
    %v123 = vsub.s32 2, %v122
    %v124 = vrot.slane %v111, %v123
    %v125 = vlaneseq
    %v126 = vshrl.u32 %v125, 7
    %v127 = vsub.s32 3, %v126
    %v128 = vrot.slane %v111, %v127
    %v135 = vunpack.c.l.b16 %v109
    %v136 = vunpack.c.h.b16 %v109
    %v137 = vunpack.c.l.b16 %v110
    %v138 = vunpack.c.h.b16 %v110
    %v139 = vpack.c.b16 %v135, %v135
    %v140 = vpack.c.b16 %v136, %v136
    %v141 = vpack.c.b16 %v137, %v137
    %v142 = vpack.c.b16 %v138, %v138
    %vm143 = vcmask 39936
    %v145 = vsel %vm143, %v105, 0
    %v148 = vsel %vm143, %v106, 0
    %v151 = vsel %vm143, %v107, 0
    %v154 = vsel %vm143, %v108, 0
    %vm156 = vcmask 1041408
    %vm157 = vcmask 1042432
    %v158 = vsel %vm156, 4294967295, 65535
    %v159 = vsel %vm157, %v158, 0
    %v161 = vand.u32 %v139, %v159
    %v164 = vand.u32 %v140, %v159
    %v167 = vand.u32 %v141, %v159
    %v170 = vand.u32 %v142, %v159
    %172 = vmatprep.subr.bf16.mxu0 %v164
    %173 = vmatpush1.bf16.msra.mxu0 %v161
    %174 = vmatprep.subr.bf16.mxu0 0
    %175 = vmatpush1.bf16.msra.mxu0 0
    %176 = vmatprep.subr.bf16.mxu0 0
    %177 = vmatpush1.bf16.msra.mxu0 0
    %178 = vmatprep.subr.bf16.mxu0 0
    %179 = vmatpush1.bf16.msra.mxu0 0
    %180 = vmatprep.subr.bf16.mxu0 0
    %181 = vmatpush1.bf16.msra.mxu0 0
    %182 = vmatprep.subr.bf16.mxu0 0
    %183 = vmatpush1.bf16.msra.mxu0 0
    %184 = vmatprep.subr.bf16.mxu0 0
    %185 = vmatpush1.bf16.msra.mxu0 0
    %186 = vmatprep.subr.bf16.mxu0 0
    %187 = vmatpush1.bf16.msra.mxu0 0
    %188 = vmatprep.subr.bf16.mxu0 0
    %189 = vmatpush1.bf16.msra.mxu0 0
    %190 = vmatprep.subr.bf16.mxu0 0
    %191 = vmatpush1.bf16.msra.mxu0 0
    %192 = vmatprep.subr.bf16.mxu0 0
    %193 = vmatpush1.bf16.msra.mxu0 0
    %194 = vmatprep.subr.bf16.mxu0 0
    %195 = vmatpush1.bf16.msra.mxu0 0
    %196 = vmatprep.subr.bf16.mxu0 0
    %197 = vmatpush1.bf16.msra.mxu0 0
    %198 = vmatprep.subr.bf16.mxu0 0
    %199 = vmatpush1.bf16.msra.mxu0 0
    %200 = vmatprep.subr.bf16.mxu0 0
    %201 = vmatpush1.bf16.msra.mxu0 0
    %202 = vmatprep.subr.bf16.mxu0 0
    %203 = vmatpush1.bf16.msra.mxu0 0
    %204 = vmatprep.mubr.bf16.mxu0 0
    %205 = vmatmul.mubr.bf16.gmra.mrb[0].mxu0 %v145
    %v206 = vpop.f32.mrb[0].mxu0
    %v207 = vadd.f32 %v116, %v206
    %v208 = vpop.f32.mrb[0].mxu0
    %v209 = vadd.f32 %v120, %v208
    %v210 = vpop.f32.mrb[0].mxu0
    %v211 = vadd.f32 %v116, %v210
    %v212 = vpop.f32.mrb[0].mxu0
    %v213 = vadd.f32 %v120, %v212
    %214 = vmatprep.mubr.bf16.mxu0 0
    %215 = vmatmul.mubr.bf16.gmra.mrb[0].mxu0 %v148
    %v216 = vpop.f32.mrb[0].mxu0
    %v217 = vadd.f32 %v116, %v216
    %v218 = vpop.f32.mrb[0].mxu0
    %v219 = vadd.f32 %v120, %v218
    %v220 = vpop.f32.mrb[0].mxu0
    %v221 = vadd.f32 %v116, %v220
    %v222 = vpop.f32.mrb[0].mxu0
    %v223 = vadd.f32 %v120, %v222
    %224 = vmatprep.mubr.bf16.mxu0 0
    %225 = vmatmul.mubr.bf16.gmra.mrb[0].mxu0 %v151
    %v226 = vpop.f32.mrb[0].mxu0
    %v227 = vadd.f32 %v116, %v226
    %v228 = vpop.f32.mrb[0].mxu0
    %v229 = vadd.f32 %v120, %v228
    %v230 = vpop.f32.mrb[0].mxu0
    %v231 = vadd.f32 %v116, %v230
    %v232 = vpop.f32.mrb[0].mxu0
    %v233 = vadd.f32 %v120, %v232
    %234 = vmatprep.mubr.bf16.mxu0 0
    %235 = vmatmul.mubr.bf16.gmra.mrb[0].mxu0 %v154
    %v236 = vpop.f32.mrb[0].mxu0
    %v237 = vadd.f32 %v116, %v236
    %v238 = vpop.f32.mrb[0].mxu0
    %v239 = vadd.f32 %v120, %v238
    %v240 = vpop.f32.mrb[0].mxu0
    %v241 = vadd.f32 %v116, %v240
    %v242 = vpop.f32.mrb[0].mxu0
    %v243 = vadd.f32 %v120, %v242
    %244 = vdwg.mxu0
    %245 = vmatprep.subr.bf16.mxu0 %v170
    %246 = vmatpush1.bf16.msra.mxu0 %v167
    %247 = vmatprep.subr.bf16.mxu0 0
    %248 = vmatpush1.bf16.msra.mxu0 0
    %249 = vmatprep.subr.bf16.mxu0 0
    %250 = vmatpush1.bf16.msra.mxu0 0
    %251 = vmatprep.subr.bf16.mxu0 0
    %252 = vmatpush1.bf16.msra.mxu0 0
    %253 = vmatprep.subr.bf16.mxu0 0
    %254 = vmatpush1.bf16.msra.mxu0 0
    %255 = vmatprep.subr.bf16.mxu0 0
    %256 = vmatpush1.bf16.msra.mxu0 0
    %257 = vmatprep.subr.bf16.mxu0 0
    %258 = vmatpush1.bf16.msra.mxu0 0
    %259 = vmatprep.subr.bf16.mxu0 0
    %260 = vmatpush1.bf16.msra.mxu0 0
    %261 = vmatprep.subr.bf16.mxu0 0
    %262 = vmatpush1.bf16.msra.mxu0 0
    %263 = vmatprep.subr.bf16.mxu0 0
    %264 = vmatpush1.bf16.msra.mxu0 0
    %265 = vmatprep.subr.bf16.mxu0 0
    %266 = vmatpush1.bf16.msra.mxu0 0
    %267 = vmatprep.subr.bf16.mxu0 0
    %268 = vmatpush1.bf16.msra.mxu0 0
    %269 = vmatprep.subr.bf16.mxu0 0
    %270 = vmatpush1.bf16.msra.mxu0 0
    %271 = vmatprep.subr.bf16.mxu0 0
    %272 = vmatpush1.bf16.msra.mxu0 0
    %273 = vmatprep.subr.bf16.mxu0 0
    %274 = vmatpush1.bf16.msra.mxu0 0
    %275 = vmatprep.subr.bf16.mxu0 0
    %276 = vmatpush1.bf16.msra.mxu0 0
    %277 = vmatprep.mubr.bf16.mxu0 0
    %278 = vmatmul.mubr.bf16.gmra.mrb[0].mxu0 %v145
    %v279 = vpop.f32.mrb[0].mxu0
    %v280 = vadd.f32 %v124, %v279
    %v281 = vpop.f32.mrb[0].mxu0
    %v282 = vadd.f32 %v128, %v281
    %v283 = vpop.f32.mrb[0].mxu0
    %v284 = vadd.f32 %v124, %v283
    %v285 = vpop.f32.mrb[0].mxu0
    %v286 = vadd.f32 %v128, %v285
    %287 = vmatprep.mubr.bf16.mxu0 0
    %288 = vmatmul.mubr.bf16.gmra.mrb[0].mxu0 %v148
    %v289 = vpop.f32.mrb[0].mxu0
    %v290 = vadd.f32 %v124, %v289
    %v291 = vpop.f32.mrb[0].mxu0
    %v292 = vadd.f32 %v128, %v291
    %v293 = vpop.f32.mrb[0].mxu0
    %v294 = vadd.f32 %v124, %v293
    %v295 = vpop.f32.mrb[0].mxu0
    %v296 = vadd.f32 %v128, %v295
    %297 = vmatprep.mubr.bf16.mxu0 0
    %298 = vmatmul.mubr.bf16.gmra.mrb[0].mxu0 %v151
    %v299 = vpop.f32.mrb[0].mxu0
    %v300 = vadd.f32 %v124, %v299
    %v301 = vpop.f32.mrb[0].mxu0
    %v302 = vadd.f32 %v128, %v301
    %v303 = vpop.f32.mrb[0].mxu0
    %v304 = vadd.f32 %v124, %v303
    %v305 = vpop.f32.mrb[0].mxu0
    %v306 = vadd.f32 %v128, %v305
    %307 = vmatprep.mubr.bf16.mxu0 0
    %308 = vmatmul.mubr.bf16.gmra.mrb[0].mxu0 %v154
    %v309 = vpop.f32.mrb[0].mxu0
    %v310 = vadd.f32 %v124, %v309
    %v311 = vpop.f32.mrb[0].mxu0
    %v312 = vadd.f32 %v128, %v311
    %v313 = vpop.f32.mrb[0].mxu0
    %v314 = vadd.f32 %v124, %v313
    %v315 = vpop.f32.mrb[0].mxu0
    %v316 = vadd.f32 %v128, %v315
    %317 = vdwg.mxu0
    %v318 = vld [vmem:[%s2] sm:$0xff]
    %v319 = vld [vmem:[%s2 + $0x8] sm:$0xff]
    %v320 = vld [vmem:[%s2 + $0x10] sm:$0xff]
    %v321 = vld [vmem:[%s2 + $0x18] sm:$0xff]
    %v322 = vld [vmem:[%s2 + $0x20] sm:$0xff]
    %v323 = vld [vmem:[%s2 + $0x28] sm:$0xff]
    %v324 = vld [vmem:[%s2 + $0x30] sm:$0xff]
    %v325 = vld [vmem:[%s2 + $0x38] sm:$0xff]
    %v326 = vld [vmem:[%s2 + $0x40] sm:$0xff]
    %v327 = vld [vmem:[%s2 + $0x48] sm:$0xff]
    %v328 = vld [vmem:[%s2 + $0x50] sm:$0xff]
    %v329 = vld [vmem:[%s2 + $0x58] sm:$0xff]
    %v330 = vld [vmem:[%s2 + $0x60] sm:$0xff]
    %v331 = vld [vmem:[%s2 + $0x68] sm:$0xff]
    %v332 = vld [vmem:[%s2 + $0x70] sm:$0xff]
    %v333 = vld [vmem:[%s2 + $0x78] sm:$0xff]
    %v334 = vld [vmem:[%s2 + $0x80] sm:$0xff]
    %v335 = vld [vmem:[%s2 + $0x88] sm:$0xff]
    %v336 = vld [vmem:[%s2 + $0x90] sm:$0xff]
    %v337 = vld [vmem:[%s2 + $0x98] sm:$0xff]
    %v338 = vld [vmem:[%s2 + $0xa0] sm:$0xff]
    %v339 = vld [vmem:[%s2 + $0xa8] sm:$0xff]
    %v340 = vld [vmem:[%s2 + $0xb0] sm:$0xff]
    %v341 = vld [vmem:[%s2 + $0xb8] sm:$0xff]
    %v342 = vld [vmem:[%s2 + $0xc0] sm:$0xff]
    %v343 = vld [vmem:[%s2 + $0xc8] sm:$0xff]
    %v344 = vld [vmem:[%s2 + $0xd0] sm:$0xff]
    %v345 = vld [vmem:[%s2 + $0xd8] sm:$0xff]
    %v346 = vld [vmem:[%s2 + $0xe0] sm:$0xff]
    %v347 = vld [vmem:[%s2 + $0xe8] sm:$0xff]
    %v348 = vld [vmem:[%s2 + $0xf0] sm:$0xff]
    %v349 = vld [vmem:[%s2 + $0xf8] sm:$0xff]
    %v382 = vunpack.c.l.b16 %v318
    %v383 = vunpack.c.h.b16 %v318
    %v384 = vunpack.c.l.b16 %v319
    %v385 = vunpack.c.h.b16 %v319
    %v386 = vunpack.c.l.b16 %v320
    %v387 = vunpack.c.h.b16 %v320
    %v388 = vunpack.c.l.b16 %v321
    %v389 = vunpack.c.h.b16 %v321
    %v390 = vunpack.c.l.b16 %v322
    %v391 = vunpack.c.h.b16 %v322
    %v392 = vunpack.c.l.b16 %v323
    %v393 = vunpack.c.h.b16 %v323
    %v394 = vunpack.c.l.b16 %v324
    %v395 = vunpack.c.h.b16 %v324
    %v396 = vunpack.c.l.b16 %v325
    %v397 = vunpack.c.h.b16 %v325
    %v398 = vunpack.c.l.b16 %v326
    %v399 = vunpack.c.h.b16 %v326
    %v400 = vunpack.c.l.b16 %v327
    %v401 = vunpack.c.h.b16 %v327
    %v402 = vunpack.c.l.b16 %v328
    %v403 = vunpack.c.h.b16 %v328
    %v404 = vunpack.c.l.b16 %v329
    %v405 = vunpack.c.h.b16 %v329
    %v406 = vunpack.c.l.b16 %v330
    %v407 = vunpack.c.h.b16 %v330
    %v408 = vunpack.c.l.b16 %v331
    %v409 = vunpack.c.h.b16 %v331
    %v410 = vunpack.c.l.b16 %v332
    %v411 = vunpack.c.h.b16 %v332
    %v412 = vunpack.c.l.b16 %v333
    %v413 = vunpack.c.h.b16 %v333
    %v414 = vunpack.c.l.b16 %v334
    %v415 = vunpack.c.h.b16 %v334
    %v416 = vunpack.c.l.b16 %v335
    %v417 = vunpack.c.h.b16 %v335
    %v418 = vunpack.c.l.b16 %v336
    %v419 = vunpack.c.h.b16 %v336
    %v420 = vunpack.c.l.b16 %v337
    %v421 = vunpack.c.h.b16 %v337
    %v422 = vunpack.c.l.b16 %v338
    %v423 = vunpack.c.h.b16 %v338
    %v424 = vunpack.c.l.b16 %v339
    %v425 = vunpack.c.h.b16 %v339
    %v426 = vunpack.c.l.b16 %v340
    %v427 = vunpack.c.h.b16 %v340
    %v428 = vunpack.c.l.b16 %v341
    %v429 = vunpack.c.h.b16 %v341
    %v430 = vunpack.c.l.b16 %v342
    %v431 = vunpack.c.h.b16 %v342
    %v432 = vunpack.c.l.b16 %v343
    %v433 = vunpack.c.h.b16 %v343
    %v434 = vunpack.c.l.b16 %v344
    %v435 = vunpack.c.h.b16 %v344
    %v436 = vunpack.c.l.b16 %v345
    %v437 = vunpack.c.h.b16 %v345
    %v438 = vunpack.c.l.b16 %v346
    %v439 = vunpack.c.h.b16 %v346
    %v440 = vunpack.c.l.b16 %v347
    %v441 = vunpack.c.h.b16 %v347
    %v442 = vunpack.c.l.b16 %v348
    %v443 = vunpack.c.h.b16 %v348
    %v444 = vunpack.c.l.b16 %v349
    %v445 = vunpack.c.h.b16 %v349
    %v446 = vpack.c.b16 %v386, %v382
    %v447 = vpack.c.b16 %v387, %v383
    %v448 = vpack.c.b16 %v388, %v384
    %v449 = vpack.c.b16 %v389, %v385
    %v450 = vpack.c.b16 %v394, %v390
    %v451 = vpack.c.b16 %v395, %v391
    %v452 = vpack.c.b16 %v396, %v392
    %v453 = vpack.c.b16 %v397, %v393
    %v454 = vpack.c.b16 %v402, %v398
    %v455 = vpack.c.b16 %v403, %v399
    %v456 = vpack.c.b16 %v404, %v400
    %v457 = vpack.c.b16 %v405, %v401
    %v458 = vpack.c.b16 %v410, %v406
    %v459 = vpack.c.b16 %v411, %v407
    %v460 = vpack.c.b16 %v412, %v408
    %v461 = vpack.c.b16 %v413, %v409
    %v462 = vpack.c.b16 %v418, %v414
    %v463 = vpack.c.b16 %v419, %v415
    %v464 = vpack.c.b16 %v420, %v416
    %v465 = vpack.c.b16 %v421, %v417
    %v466 = vpack.c.b16 %v426, %v422
    %v467 = vpack.c.b16 %v427, %v423
    %v468 = vpack.c.b16 %v428, %v424
    %v469 = vpack.c.b16 %v429, %v425
    %v470 = vpack.c.b16 %v434, %v430
    %v471 = vpack.c.b16 %v435, %v431
    %v472 = vpack.c.b16 %v436, %v432
    %v473 = vpack.c.b16 %v437, %v433
    %v474 = vpack.c.b16 %v442, %v438
    %v475 = vpack.c.b16 %v443, %v439
    %v476 = vpack.c.b16 %v444, %v440
    %v477 = vpack.c.b16 %v445, %v441
    %510 = vmatprep.subr.bf16.mxu0 %v447
    %511 = vmatpush1.bf16.msra.mxu0 %v446
    %512 = vmatprep.subr.bf16.mxu0 %v451
    %513 = vmatpush1.bf16.msra.mxu0 %v450
    %514 = vmatprep.subr.bf16.mxu0 %v455
    %515 = vmatpush1.bf16.msra.mxu0 %v454
    %516 = vmatprep.subr.bf16.mxu0 %v459
    %517 = vmatpush1.bf16.msra.mxu0 %v458
    %518 = vmatprep.subr.bf16.mxu0 %v463
    %519 = vmatpush1.bf16.msra.mxu0 %v462
    %520 = vmatprep.subr.bf16.mxu0 %v467
    %521 = vmatpush1.bf16.msra.mxu0 %v466
    %522 = vmatprep.subr.bf16.mxu0 %v471
    %523 = vmatpush1.bf16.msra.mxu0 %v470
    %524 = vmatprep.subr.bf16.mxu0 %v475
    %525 = vmatpush1.bf16.msra.mxu0 %v474
    %526 = vmatprep.subr.bf16.mxu0 0
    %527 = vmatpush1.bf16.msra.mxu0 0
    %528 = vmatprep.subr.bf16.mxu0 0
    %529 = vmatpush1.bf16.msra.mxu0 0
    %530 = vmatprep.subr.bf16.mxu0 0
    %531 = vmatpush1.bf16.msra.mxu0 0
    %532 = vmatprep.subr.bf16.mxu0 0
    %533 = vmatpush1.bf16.msra.mxu0 0
    %534 = vmatprep.subr.bf16.mxu0 0
    %535 = vmatpush1.bf16.msra.mxu0 0
    %536 = vmatprep.subr.bf16.mxu0 0
    %537 = vmatpush1.bf16.msra.mxu0 0
    %538 = vmatprep.subr.bf16.mxu0 0
    %539 = vmatpush1.bf16.msra.mxu0 0
    %540 = vmatprep.subr.bf16.mxu0 0
    %541 = vmatpush1.bf16.msra.mxu0 0
    %542 = vmatprep.mubr.bf16.mxu0 0
    %543 = vmatmul.mubr.bf16.gmra.mrb[0].mxu0 0
    %v544 = vpop.f32.mrb[0].mxu0
    %v545 = vadd.f32 0.0, %v544
    %v546 = vpop.f32.mrb[0].mxu0
    %v547 = vadd.f32 0.0, %v546
    %v548 = vpop.f32.mrb[0].mxu0
    %v549 = vpop.f32.mrb[0].mxu0
    %550 = vdwg.mxu0
    %551 = vmatprep.subr.bf16.mxu0 %v449
    %552 = vmatpush1.bf16.msra.mxu0 %v448
    %553 = vmatprep.subr.bf16.mxu0 %v453
    %554 = vmatpush1.bf16.msra.mxu0 %v452
    %555 = vmatprep.subr.bf16.mxu0 %v457
    %556 = vmatpush1.bf16.msra.mxu0 %v456
    %557 = vmatprep.subr.bf16.mxu0 %v461
    %558 = vmatpush1.bf16.msra.mxu0 %v460
    %559 = vmatprep.subr.bf16.mxu0 %v465
    %560 = vmatpush1.bf16.msra.mxu0 %v464
    %561 = vmatprep.subr.bf16.mxu0 %v469
    %562 = vmatpush1.bf16.msra.mxu0 %v468
    %563 = vmatprep.subr.bf16.mxu0 %v473
    %564 = vmatpush1.bf16.msra.mxu0 %v472
    %565 = vmatprep.subr.bf16.mxu0 %v477
    %566 = vmatpush1.bf16.msra.mxu0 %v476
    %567 = vmatprep.subr.bf16.mxu0 0
    %568 = vmatpush1.bf16.msra.mxu0 0
    %569 = vmatprep.subr.bf16.mxu0 0
    %570 = vmatpush1.bf16.msra.mxu0 0
    %571 = vmatprep.subr.bf16.mxu0 0
    %572 = vmatpush1.bf16.msra.mxu0 0
    %573 = vmatprep.subr.bf16.mxu0 0
    %574 = vmatpush1.bf16.msra.mxu0 0
    %575 = vmatprep.subr.bf16.mxu0 0
    %576 = vmatpush1.bf16.msra.mxu0 0
    %577 = vmatprep.subr.bf16.mxu0 0
    %578 = vmatpush1.bf16.msra.mxu0 0
    %579 = vmatprep.subr.bf16.mxu0 0
    %580 = vmatpush1.bf16.msra.mxu0 0
    %581 = vmatprep.subr.bf16.mxu0 0
    %582 = vmatpush1.bf16.msra.mxu0 0
    %583 = vmatprep.mubr.bf16.mxu0 0
    %584 = vmatmul.mubr.bf16.gmra.mrb[0].mxu0 0
    %v585 = vpop.f32.mrb[0].mxu0
    %v586 = vadd.f32 0.0, %v585
    %v587 = vpop.f32.mrb[0].mxu0
    %v588 = vadd.f32 0.0, %v587
    %v589 = vpop.f32.mrb[0].mxu0
    %v590 = vpop.f32.mrb[0].mxu0
    %591 = vdwg.mxu0
    %v592 = vadd.f32 %v207, %v545
    %v593 = vadd.f32 %v209, %v547
    %v594 = vadd.f32 %v280, %v586
    %v595 = vadd.f32 %v282, %v588
    %v596 = vxor.u32 %v592, 2147483648
    %v597 = vmul.f32 %v596, 1.442695
    %v598 = vpow.pop %v597
    %v599 = vadd.f32 %v598, 1.0
    %v600 = vrcp.pop %v599
    %v601 = vmul.f32 1.0, %v600
    %v602 = vxor.u32 %v593, 2147483648
    %v603 = vmul.f32 %v602, 1.442695
    %v604 = vpow.pop %v603
    %v605 = vadd.f32 %v604, 1.0
    %v606 = vrcp.pop %v605
    %v607 = vmul.f32 1.0, %v606
    %v608 = vtanh.pop %v594
    %v609 = vxor.u32 %v595, 2147483648
    %v610 = vmul.f32 %v609, 1.442695
    %v611 = vpow.pop %v610
    %v612 = vadd.f32 %v611, 1.0
    %v613 = vrcp.pop %v612
    %v614 = vmul.f32 1.0, %v613
    %v615 = vmul.f32 %v607, 0.0
    %v616 = vmul.f32 %v601, %v608
    %v617 = vadd.f32 %v615, %v616
    %v618 = vtanh.pop %v617
    %v619 = vmul.f32 %v614, %v618
    %v620 = vpack.c.bf16 %v619, %v619
    %v621 = vld [vmem:[#allocation7] sm:$0xff]
    %v622 = vld [vmem:[#allocation7 + $0x8] sm:$0xff]
    %v623 = vld [vmem:[#allocation7 + $0x10] sm:$0xff]
    %v624 = vld [vmem:[#allocation7 + $0x18] sm:$0xff]
    %v625 = vld [vmem:[#allocation7 + $0x20] sm:$0xff]
    %v626 = vld [vmem:[#allocation7 + $0x28] sm:$0xff]
    %v627 = vld [vmem:[#allocation7 + $0x30] sm:$0xff]
    %v628 = vld [vmem:[#allocation7 + $0x38] sm:$0xff]
    %v629 = vld [vmem:[#allocation7 + $0x40] sm:$0xff]
    %v630 = vld [vmem:[#allocation7 + $0x48] sm:$0xff]
    %v631 = vld [vmem:[#allocation7 + $0x50] sm:$0xff]
    %v632 = vld [vmem:[#allocation7 + $0x58] sm:$0xff]
    %v633 = vld [vmem:[#allocation7 + $0x60] sm:$0xff]
    %v634 = vld [vmem:[#allocation7 + $0x68] sm:$0xff]
    %v635 = vld [vmem:[#allocation7 + $0x70] sm:$0xff]
    %v636 = vld [vmem:[#allocation7 + $0x78] sm:$0xff]
    %v637 = vld [vmem:[#allocation7 + $0x80] sm:$0xff]
    %v638 = vld [vmem:[#allocation7 + $0x88] sm:$0xff]
    %v639 = vld [vmem:[#allocation7 + $0x90] sm:$0xff]
    %v640 = vld [vmem:[#allocation7 + $0x98] sm:$0xff]
    %v641 = vld [vmem:[#allocation7 + $0xa0] sm:$0xff]
    %v642 = vld [vmem:[#allocation7 + $0xa8] sm:$0xff]
    %v643 = vld [vmem:[#allocation7 + $0xb0] sm:$0xff]
    %v644 = vld [vmem:[#allocation7 + $0xb8] sm:$0xff]
    %v645 = vld [vmem:[#allocation7 + $0xc0] sm:$0xff]
    %v646 = vld [vmem:[#allocation7 + $0xc8] sm:$0xff]
    %v647 = vld [vmem:[#allocation7 + $0xd0] sm:$0xff]
    %v648 = vld [vmem:[#allocation7 + $0xd8] sm:$0xff]
    %v649 = vld [vmem:[#allocation7 + $0xe0] sm:$0xff]
    %v650 = vld [vmem:[#allocation7 + $0xe8] sm:$0xff]
    %v651 = vld [vmem:[#allocation7 + $0xf0] sm:$0xff]
    %v652 = vld [vmem:[#allocation7 + $0xf8] sm:$0xff]
    %v653 = vld [vmem:[#allocation10] sm:$0xf]
    %v655 = vlaneseq
    %v656 = vshrl.u32 %v655, 7
    %v657 = vsub.s32 0, %v656
    %v658 = vrot.slane %v653, %v657
    %v659 = vlaneseq
    %v660 = vshrl.u32 %v659, 7
    %v661 = vsub.s32 1, %v660
    %v662 = vrot.slane %v653, %v661
    %v663 = vlaneseq
    %v664 = vshrl.u32 %v663, 7
    %v665 = vsub.s32 2, %v664
    %v666 = vrot.slane %v653, %v665
    %v667 = vlaneseq
    %v668 = vshrl.u32 %v667, 7
    %v669 = vsub.s32 3, %v668
    %v670 = vrot.slane %v653, %v669
    %v707 = vunpack.c.l.b16 %v621
    %v708 = vunpack.c.h.b16 %v621
    %v709 = vunpack.c.l.b16 %v622
    %v710 = vunpack.c.h.b16 %v622
    %v711 = vunpack.c.l.b16 %v623
    %v712 = vunpack.c.h.b16 %v623
    %v713 = vunpack.c.l.b16 %v624
    %v714 = vunpack.c.h.b16 %v624
    %v715 = vunpack.c.l.b16 %v625
    %v716 = vunpack.c.h.b16 %v625
    %v717 = vunpack.c.l.b16 %v626
    %v718 = vunpack.c.h.b16 %v626
    %v719 = vunpack.c.l.b16 %v627
    %v720 = vunpack.c.h.b16 %v627
    %v721 = vunpack.c.l.b16 %v628
    %v722 = vunpack.c.h.b16 %v628
    %v723 = vunpack.c.l.b16 %v629
    %v724 = vunpack.c.h.b16 %v629
    %v725 = vunpack.c.l.b16 %v630
    %v726 = vunpack.c.h.b16 %v630
    %v727 = vunpack.c.l.b16 %v631
    %v728 = vunpack.c.h.b16 %v631
    %v729 = vunpack.c.l.b16 %v632
    %v730 = vunpack.c.h.b16 %v632
    %v731 = vunpack.c.l.b16 %v633
    %v732 = vunpack.c.h.b16 %v633
    %v733 = vunpack.c.l.b16 %v634
    %v734 = vunpack.c.h.b16 %v634
    %v735 = vunpack.c.l.b16 %v635
    %v736 = vunpack.c.h.b16 %v635
    %v737 = vunpack.c.l.b16 %v636
    %v738 = vunpack.c.h.b16 %v636
    %v739 = vunpack.c.l.b16 %v637
    %v740 = vunpack.c.h.b16 %v637
    %v741 = vunpack.c.l.b16 %v638
    %v742 = vunpack.c.h.b16 %v638
    %v743 = vunpack.c.l.b16 %v639
    %v744 = vunpack.c.h.b16 %v639
    %v745 = vunpack.c.l.b16 %v640
    %v746 = vunpack.c.h.b16 %v640
    %v747 = vunpack.c.l.b16 %v641
    %v748 = vunpack.c.h.b16 %v641
    %v749 = vunpack.c.l.b16 %v642
    %v750 = vunpack.c.h.b16 %v642
    %v751 = vunpack.c.l.b16 %v643
    %v752 = vunpack.c.h.b16 %v643
    %v753 = vunpack.c.l.b16 %v644
    %v754 = vunpack.c.h.b16 %v644
    %v755 = vunpack.c.l.b16 %v645
    %v756 = vunpack.c.h.b16 %v645
    %v757 = vunpack.c.l.b16 %v646
    %v758 = vunpack.c.h.b16 %v646
    %v759 = vunpack.c.l.b16 %v647
    %v760 = vunpack.c.h.b16 %v647
    %v761 = vunpack.c.l.b16 %v648
    %v762 = vunpack.c.h.b16 %v648
    %v763 = vunpack.c.l.b16 %v649
    %v764 = vunpack.c.h.b16 %v649
    %v765 = vunpack.c.l.b16 %v650
    %v766 = vunpack.c.h.b16 %v650
    %v767 = vunpack.c.l.b16 %v651
    %v768 = vunpack.c.h.b16 %v651
    %v769 = vunpack.c.l.b16 %v652
    %v770 = vunpack.c.h.b16 %v652
    %v771 = vpack.c.b16 %v711, %v707
    %v772 = vpack.c.b16 %v712, %v708
    %v773 = vpack.c.b16 %v713, %v709
    %v774 = vpack.c.b16 %v714, %v710
    %v775 = vpack.c.b16 %v719, %v715
    %v776 = vpack.c.b16 %v720, %v716
    %v777 = vpack.c.b16 %v721, %v717
    %v778 = vpack.c.b16 %v722, %v718
    %v779 = vpack.c.b16 %v727, %v723
    %v780 = vpack.c.b16 %v728, %v724
    %v781 = vpack.c.b16 %v729, %v725
    %v782 = vpack.c.b16 %v730, %v726
    %v783 = vpack.c.b16 %v735, %v731
    %v784 = vpack.c.b16 %v736, %v732
    %v785 = vpack.c.b16 %v737, %v733
    %v786 = vpack.c.b16 %v738, %v734
    %v787 = vpack.c.b16 %v743, %v739
    %v788 = vpack.c.b16 %v744, %v740
    %v789 = vpack.c.b16 %v745, %v741
    %v790 = vpack.c.b16 %v746, %v742
    %v791 = vpack.c.b16 %v751, %v747
    %v792 = vpack.c.b16 %v752, %v748
    %v793 = vpack.c.b16 %v753, %v749
    %v794 = vpack.c.b16 %v754, %v750
    %v795 = vpack.c.b16 %v759, %v755
    %v796 = vpack.c.b16 %v760, %v756
    %v797 = vpack.c.b16 %v761, %v757
    %v798 = vpack.c.b16 %v762, %v758
    %v799 = vpack.c.b16 %v767, %v763
    %v800 = vpack.c.b16 %v768, %v764
    %v801 = vpack.c.b16 %v769, %v765
    %v802 = vpack.c.b16 %v770, %v766
    %835 = vmatprep.subr.bf16.mxu0 %v772
    %836 = vmatpush1.bf16.msra.mxu0 %v771
    %837 = vmatprep.subr.bf16.mxu0 %v776
    %838 = vmatpush1.bf16.msra.mxu0 %v775
    %839 = vmatprep.subr.bf16.mxu0 %v780
    %840 = vmatpush1.bf16.msra.mxu0 %v779
    %841 = vmatprep.subr.bf16.mxu0 %v784
    %842 = vmatpush1.bf16.msra.mxu0 %v783
    %843 = vmatprep.subr.bf16.mxu0 %v788
    %844 = vmatpush1.bf16.msra.mxu0 %v787
    %845 = vmatprep.subr.bf16.mxu0 %v792
    %846 = vmatpush1.bf16.msra.mxu0 %v791
    %847 = vmatprep.subr.bf16.mxu0 %v796
    %848 = vmatpush1.bf16.msra.mxu0 %v795
    %849 = vmatprep.subr.bf16.mxu0 %v800
    %850 = vmatpush1.bf16.msra.mxu0 %v799
    %851 = vmatprep.subr.bf16.mxu0 0
    %852 = vmatpush1.bf16.msra.mxu0 0
    %853 = vmatprep.subr.bf16.mxu0 0
    %854 = vmatpush1.bf16.msra.mxu0 0
    %855 = vmatprep.subr.bf16.mxu0 0
    %856 = vmatpush1.bf16.msra.mxu0 0
    %857 = vmatprep.subr.bf16.mxu0 0
    %858 = vmatpush1.bf16.msra.mxu0 0
    %859 = vmatprep.subr.bf16.mxu0 0
    %860 = vmatpush1.bf16.msra.mxu0 0
    %861 = vmatprep.subr.bf16.mxu0 0
    %862 = vmatpush1.bf16.msra.mxu0 0
    %863 = vmatprep.subr.bf16.mxu0 0
    %864 = vmatpush1.bf16.msra.mxu0 0
    %865 = vmatprep.subr.bf16.mxu0 0
    %866 = vmatpush1.bf16.msra.mxu0 0
    %867 = vmatprep.mubr.bf16.mxu0 0
    %868 = vmatmul.mubr.bf16.gmra.mrb[0].mxu0 %v620
    %v869 = vpop.f32.mrb[0].mxu0
    %v870 = vadd.f32 %v658, %v869
    %v871 = vpop.f32.mrb[0].mxu0
    %v872 = vadd.f32 %v662, %v871
    %v873 = vpop.f32.mrb[0].mxu0
    %v874 = vpop.f32.mrb[0].mxu0
    %875 = vdwg.mxu0
    %876 = vmatprep.subr.bf16.mxu0 %v774
    %877 = vmatpush1.bf16.msra.mxu0 %v773
    %878 = vmatprep.subr.bf16.mxu0 %v778
    %879 = vmatpush1.bf16.msra.mxu0 %v777
    %880 = vmatprep.subr.bf16.mxu0 %v782
    %881 = vmatpush1.bf16.msra.mxu0 %v781
    %882 = vmatprep.subr.bf16.mxu0 %v786
    %883 = vmatpush1.bf16.msra.mxu0 %v785
    %884 = vmatprep.subr.bf16.mxu0 %v790
    %885 = vmatpush1.bf16.msra.mxu0 %v789
    %886 = vmatprep.subr.bf16.mxu0 %v794
    %887 = vmatpush1.bf16.msra.mxu0 %v793
    %888 = vmatprep.subr.bf16.mxu0 %v798
    %889 = vmatpush1.bf16.msra.mxu0 %v797
    %890 = vmatprep.subr.bf16.mxu0 %v802
    %891 = vmatpush1.bf16.msra.mxu0 %v801
    %892 = vmatprep.subr.bf16.mxu0 0
    %893 = vmatpush1.bf16.msra.mxu0 0
    %894 = vmatprep.subr.bf16.mxu0 0
    %895 = vmatpush1.bf16.msra.mxu0 0
    %896 = vmatprep.subr.bf16.mxu0 0
    %897 = vmatpush1.bf16.msra.mxu0 0
    %898 = vmatprep.subr.bf16.mxu0 0
    %899 = vmatpush1.bf16.msra.mxu0 0
    %900 = vmatprep.subr.bf16.mxu0 0
    %901 = vmatpush1.bf16.msra.mxu0 0
    %902 = vmatprep.subr.bf16.mxu0 0
    %903 = vmatpush1.bf16.msra.mxu0 0
    %904 = vmatprep.subr.bf16.mxu0 0
    %905 = vmatpush1.bf16.msra.mxu0 0
    %906 = vmatprep.subr.bf16.mxu0 0
    %907 = vmatpush1.bf16.msra.mxu0 0
    %908 = vmatprep.mubr.bf16.mxu0 0
    %909 = vmatmul.mubr.bf16.gmra.mrb[0].mxu0 %v620
    %v910 = vpop.f32.mrb[0].mxu0
    %v911 = vadd.f32 %v666, %v910
    %v912 = vpop.f32.mrb[0].mxu0
    %v913 = vadd.f32 %v670, %v912
    %v914 = vpop.f32.mrb[0].mxu0
    %v915 = vpop.f32.mrb[0].mxu0
    %916 = vdwg.mxu0
    %v917 = vld [vmem:[#allocation8] sm:$0xff]
    %v918 = vld [vmem:[#allocation8 + $0x8] sm:$0xff]
    %v919 = vld [vmem:[#allocation8 + $0x10] sm:$0xff]
    %v920 = vld [vmem:[#allocation8 + $0x18] sm:$0xff]
    %v921 = vld [vmem:[#allocation8 + $0x20] sm:$0xff]
    %v922 = vld [vmem:[#allocation8 + $0x28] sm:$0xff]
    %v923 = vld [vmem:[#allocation8 + $0x30] sm:$0xff]
    %v924 = vld [vmem:[#allocation8 + $0x38] sm:$0xff]
    %v925 = vld [vmem:[#allocation8 + $0x40] sm:$0xff]
    %v926 = vld [vmem:[#allocation8 + $0x48] sm:$0xff]
    %v927 = vld [vmem:[#allocation8 + $0x50] sm:$0xff]
    %v928 = vld [vmem:[#allocation8 + $0x58] sm:$0xff]
    %v929 = vld [vmem:[#allocation8 + $0x60] sm:$0xff]
    %v930 = vld [vmem:[#allocation8 + $0x68] sm:$0xff]
    %v931 = vld [vmem:[#allocation8 + $0x70] sm:$0xff]
    %v932 = vld [vmem:[#allocation8 + $0x78] sm:$0xff]
    %v933 = vld [vmem:[#allocation8 + $0x80] sm:$0xff]
    %v934 = vld [vmem:[#allocation8 + $0x88] sm:$0xff]
    %v935 = vld [vmem:[#allocation8 + $0x90] sm:$0xff]
    %v936 = vld [vmem:[#allocation8 + $0x98] sm:$0xff]
    %v937 = vld [vmem:[#allocation8 + $0xa0] sm:$0xff]
    %v938 = vld [vmem:[#allocation8 + $0xa8] sm:$0xff]
    %v939 = vld [vmem:[#allocation8 + $0xb0] sm:$0xff]
    %v940 = vld [vmem:[#allocation8 + $0xb8] sm:$0xff]
    %v941 = vld [vmem:[#allocation8 + $0xc0] sm:$0xff]
    %v942 = vld [vmem:[#allocation8 + $0xc8] sm:$0xff]
    %v943 = vld [vmem:[#allocation8 + $0xd0] sm:$0xff]
    %v944 = vld [vmem:[#allocation8 + $0xd8] sm:$0xff]
    %v945 = vld [vmem:[#allocation8 + $0xe0] sm:$0xff]
    %v946 = vld [vmem:[#allocation8 + $0xe8] sm:$0xff]
    %v947 = vld [vmem:[#allocation8 + $0xf0] sm:$0xff]
    %v948 = vld [vmem:[#allocation8 + $0xf8] sm:$0xff]
    %v981 = vunpack.c.l.b16 %v917
    %v982 = vunpack.c.h.b16 %v917
    %v983 = vunpack.c.l.b16 %v918
    %v984 = vunpack.c.h.b16 %v918
    %v985 = vunpack.c.l.b16 %v919
    %v986 = vunpack.c.h.b16 %v919
    %v987 = vunpack.c.l.b16 %v920
    %v988 = vunpack.c.h.b16 %v920
    %v989 = vunpack.c.l.b16 %v921
    %v990 = vunpack.c.h.b16 %v921
    %v991 = vunpack.c.l.b16 %v922
    %v992 = vunpack.c.h.b16 %v922
    %v993 = vunpack.c.l.b16 %v923
    %v994 = vunpack.c.h.b16 %v923
    %v995 = vunpack.c.l.b16 %v924
    %v996 = vunpack.c.h.b16 %v924
    %v997 = vunpack.c.l.b16 %v925
    %v998 = vunpack.c.h.b16 %v925
    %v999 = vunpack.c.l.b16 %v926
    %v1000 = vunpack.c.h.b16 %v926
    %v1001 = vunpack.c.l.b16 %v927
    %v1002 = vunpack.c.h.b16 %v927
    %v1003 = vunpack.c.l.b16 %v928
    %v1004 = vunpack.c.h.b16 %v928
    %v1005 = vunpack.c.l.b16 %v929
    %v1006 = vunpack.c.h.b16 %v929
    %v1007 = vunpack.c.l.b16 %v930
    %v1008 = vunpack.c.h.b16 %v930
    %v1009 = vunpack.c.l.b16 %v931
    %v1010 = vunpack.c.h.b16 %v931
    %v1011 = vunpack.c.l.b16 %v932
    %v1012 = vunpack.c.h.b16 %v932
    %v1013 = vunpack.c.l.b16 %v933
    %v1014 = vunpack.c.h.b16 %v933
    %v1015 = vunpack.c.l.b16 %v934
    %v1016 = vunpack.c.h.b16 %v934
    %v1017 = vunpack.c.l.b16 %v935
    %v1018 = vunpack.c.h.b16 %v935
    %v1019 = vunpack.c.l.b16 %v936
    %v1020 = vunpack.c.h.b16 %v936
    %v1021 = vunpack.c.l.b16 %v937
    %v1022 = vunpack.c.h.b16 %v937
    %v1023 = vunpack.c.l.b16 %v938
    %v1024 = vunpack.c.h.b16 %v938
    %v1025 = vunpack.c.l.b16 %v939
    %v1026 = vunpack.c.h.b16 %v939
    %v1027 = vunpack.c.l.b16 %v940
    %v1028 = vunpack.c.h.b16 %v940
    %v1029 = vunpack.c.l.b16 %v941
    %v1030 = vunpack.c.h.b16 %v941
    %v1031 = vunpack.c.l.b16 %v942
    %v1032 = vunpack.c.h.b16 %v942
    %v1033 = vunpack.c.l.b16 %v943
    %v1034 = vunpack.c.h.b16 %v943
    %v1035 = vunpack.c.l.b16 %v944
    %v1036 = vunpack.c.h.b16 %v944
    %v1037 = vunpack.c.l.b16 %v945
    %v1038 = vunpack.c.h.b16 %v945
    %v1039 = vunpack.c.l.b16 %v946
    %v1040 = vunpack.c.h.b16 %v946
    %v1041 = vunpack.c.l.b16 %v947
    %v1042 = vunpack.c.h.b16 %v947
    %v1043 = vunpack.c.l.b16 %v948
    %v1044 = vunpack.c.h.b16 %v948
    %v1045 = vpack.c.b16 %v985, %v981
    %v1046 = vpack.c.b16 %v986, %v982
    %v1047 = vpack.c.b16 %v987, %v983
    %v1048 = vpack.c.b16 %v988, %v984
    %v1049 = vpack.c.b16 %v993, %v989
    %v1050 = vpack.c.b16 %v994, %v990
    %v1051 = vpack.c.b16 %v995, %v991
    %v1052 = vpack.c.b16 %v996, %v992
    %v1053 = vpack.c.b16 %v1001, %v997
    %v1054 = vpack.c.b16 %v1002, %v998
    %v1055 = vpack.c.b16 %v1003, %v999
    %v1056 = vpack.c.b16 %v1004, %v1000
    %v1057 = vpack.c.b16 %v1009, %v1005
    %v1058 = vpack.c.b16 %v1010, %v1006
    %v1059 = vpack.c.b16 %v1011, %v1007
    %v1060 = vpack.c.b16 %v1012, %v1008
    %v1061 = vpack.c.b16 %v1017, %v1013
    %v1062 = vpack.c.b16 %v1018, %v1014
    %v1063 = vpack.c.b16 %v1019, %v1015
    %v1064 = vpack.c.b16 %v1020, %v1016
    %v1065 = vpack.c.b16 %v1025, %v1021
    %v1066 = vpack.c.b16 %v1026, %v1022
    %v1067 = vpack.c.b16 %v1027, %v1023
    %v1068 = vpack.c.b16 %v1028, %v1024
    %v1069 = vpack.c.b16 %v1033, %v1029
    %v1070 = vpack.c.b16 %v1034, %v1030
    %v1071 = vpack.c.b16 %v1035, %v1031
    %v1072 = vpack.c.b16 %v1036, %v1032
    %v1073 = vpack.c.b16 %v1041, %v1037
    %v1074 = vpack.c.b16 %v1042, %v1038
    %v1075 = vpack.c.b16 %v1043, %v1039
    %v1076 = vpack.c.b16 %v1044, %v1040
    %1109 = vmatprep.subr.bf16.mxu0 %v1046
    %1110 = vmatpush1.bf16.msra.mxu0 %v1045
    %1111 = vmatprep.subr.bf16.mxu0 %v1050
    %1112 = vmatpush1.bf16.msra.mxu0 %v1049
    %1113 = vmatprep.subr.bf16.mxu0 %v1054
    %1114 = vmatpush1.bf16.msra.mxu0 %v1053
    %1115 = vmatprep.subr.bf16.mxu0 %v1058
    %1116 = vmatpush1.bf16.msra.mxu0 %v1057
    %1117 = vmatprep.subr.bf16.mxu0 %v1062
    %1118 = vmatpush1.bf16.msra.mxu0 %v1061
    %1119 = vmatprep.subr.bf16.mxu0 %v1066
    %1120 = vmatpush1.bf16.msra.mxu0 %v1065
    %1121 = vmatprep.subr.bf16.mxu0 %v1070
    %1122 = vmatpush1.bf16.msra.mxu0 %v1069
    %1123 = vmatprep.subr.bf16.mxu0 %v1074
    %1124 = vmatpush1.bf16.msra.mxu0 %v1073
    %1125 = vmatprep.subr.bf16.mxu0 0
    %1126 = vmatpush1.bf16.msra.mxu0 0
    %1127 = vmatprep.subr.bf16.mxu0 0
    %1128 = vmatpush1.bf16.msra.mxu0 0
    %1129 = vmatprep.subr.bf16.mxu0 0
    %1130 = vmatpush1.bf16.msra.mxu0 0
    %1131 = vmatprep.subr.bf16.mxu0 0
    %1132 = vmatpush1.bf16.msra.mxu0 0
    %1133 = vmatprep.subr.bf16.mxu0 0
    %1134 = vmatpush1.bf16.msra.mxu0 0
    %1135 = vmatprep.subr.bf16.mxu0 0
    %1136 = vmatpush1.bf16.msra.mxu0 0
    %1137 = vmatprep.subr.bf16.mxu0 0
    %1138 = vmatpush1.bf16.msra.mxu0 0
    %1139 = vmatprep.subr.bf16.mxu0 0
    %1140 = vmatpush1.bf16.msra.mxu0 0
    %1141 = vmatprep.mubr.bf16.mxu0 0
    %1142 = vmatmul.mubr.bf16.gmra.mrb[0].mxu0 0
    %v1143 = vpop.f32.mrb[0].mxu0
    %v1144 = vadd.f32 0.0, %v1143
    %v1145 = vpop.f32.mrb[0].mxu0
    %v1146 = vadd.f32 0.0, %v1145
    %v1147 = vpop.f32.mrb[0].mxu0
    %v1148 = vpop.f32.mrb[0].mxu0
    %1149 = vdwg.mxu0
    %1150 = vmatprep.subr.bf16.mxu0 %v1048
    %1151 = vmatpush1.bf16.msra.mxu0 %v1047
    %1152 = vmatprep.subr.bf16.mxu0 %v1052
    %1153 = vmatpush1.bf16.msra.mxu0 %v1051
    %1154 = vmatprep.subr.bf16.mxu0 %v1056
    %1155 = vmatpush1.bf16.msra.mxu0 %v1055
    %1156 = vmatprep.subr.bf16.mxu0 %v1060
    %1157 = vmatpush1.bf16.msra.mxu0 %v1059
    %1158 = vmatprep.subr.bf16.mxu0 %v1064
    %1159 = vmatpush1.bf16.msra.mxu0 %v1063
    %1160 = vmatprep.subr.bf16.mxu0 %v1068
    %1161 = vmatpush1.bf16.msra.mxu0 %v1067
    %1162 = vmatprep.subr.bf16.mxu0 %v1072
    %1163 = vmatpush1.bf16.msra.mxu0 %v1071
    %1164 = vmatprep.subr.bf16.mxu0 %v1076
    %1165 = vmatpush1.bf16.msra.mxu0 %v1075
    %1166 = vmatprep.subr.bf16.mxu0 0
    %1167 = vmatpush1.bf16.msra.mxu0 0
    %1168 = vmatprep.subr.bf16.mxu0 0
    %1169 = vmatpush1.bf16.msra.mxu0 0
    %1170 = vmatprep.subr.bf16.mxu0 0
    %1171 = vmatpush1.bf16.msra.mxu0 0
    %1172 = vmatprep.subr.bf16.mxu0 0
    %1173 = vmatpush1.bf16.msra.mxu0 0
    %1174 = vmatprep.subr.bf16.mxu0 0
    %1175 = vmatpush1.bf16.msra.mxu0 0
    %1176 = vmatprep.subr.bf16.mxu0 0
    %1177 = vmatpush1.bf16.msra.mxu0 0
    %1178 = vmatprep.subr.bf16.mxu0 0
    %1179 = vmatpush1.bf16.msra.mxu0 0
    %1180 = vmatprep.subr.bf16.mxu0 0
    %1181 = vmatpush1.bf16.msra.mxu0 0
    %1182 = vmatprep.mubr.bf16.mxu0 0
    %1183 = vmatmul.mubr.bf16.gmra.mrb[0].mxu0 0
    %v1184 = vpop.f32.mrb[0].mxu0
    %v1185 = vadd.f32 0.0, %v1184
    %v1186 = vpop.f32.mrb[0].mxu0
    %v1187 = vadd.f32 0.0, %v1186
    %v1188 = vpop.f32.mrb[0].mxu0
    %v1189 = vpop.f32.mrb[0].mxu0
    %1190 = vdwg.mxu0
    %v1191 = vadd.f32 %v870, %v1144
    %v1192 = vadd.f32 %v872, %v1146
    %v1193 = vadd.f32 %v911, %v1185
    %v1194 = vadd.f32 %v913, %v1187
    %v1195 = vxor.u32 %v1191, 2147483648
    %v1196 = vmul.f32 %v1195, 1.442695
    %v1197 = vpow.pop %v1196
    %v1198 = vadd.f32 %v1197, 1.0
    %v1199 = vrcp.pop %v1198
    %v1200 = vmul.f32 1.0, %v1199
    %v1201 = vxor.u32 %v1192, 2147483648
    %v1202 = vmul.f32 %v1201, 1.442695
    %v1203 = vpow.pop %v1202
    %v1204 = vadd.f32 %v1203, 1.0
    %v1205 = vrcp.pop %v1204
    %v1206 = vmul.f32 1.0, %v1205
    %v1207 = vtanh.pop %v1193
    %v1208 = vxor.u32 %v1194, 2147483648
    %v1209 = vmul.f32 %v1208, 1.442695
    %v1210 = vpow.pop %v1209
    %v1211 = vadd.f32 %v1210, 1.0
    %v1212 = vrcp.pop %v1211
    %v1213 = vmul.f32 1.0, %v1212
    %v1214 = vmul.f32 %v1206, 0.0
    %v1215 = vmul.f32 %v1200, %v1207
    %v1216 = vadd.f32 %v1214, %v1215
    %v1217 = vtanh.pop %v1216
    %v1218 = vmul.f32 %v1213, %v1217
    %1219 = vmatprep.subr.bf16.mxu0 %v447
    %1220 = vmatpush1.bf16.msra.mxu0 %v446
    %1221 = vmatprep.subr.bf16.mxu0 %v451
    %1222 = vmatpush1.bf16.msra.mxu0 %v450
    %1223 = vmatprep.subr.bf16.mxu0 %v455
    %1224 = vmatpush1.bf16.msra.mxu0 %v454
    %1225 = vmatprep.subr.bf16.mxu0 %v459
    %1226 = vmatpush1.bf16.msra.mxu0 %v458
    %1227 = vmatprep.subr.bf16.mxu0 %v463
    %1228 = vmatpush1.bf16.msra.mxu0 %v462
    %1229 = vmatprep.subr.bf16.mxu0 %v467
    %1230 = vmatpush1.bf16.msra.mxu0 %v466
    %1231 = vmatprep.subr.bf16.mxu0 %v471
    %1232 = vmatpush1.bf16.msra.mxu0 %v470
    %1233 = vmatprep.subr.bf16.mxu0 %v475
    %1234 = vmatpush1.bf16.msra.mxu0 %v474
    %1235 = vmatprep.subr.bf16.mxu0 0
    %1236 = vmatpush1.bf16.msra.mxu0 0
    %1237 = vmatprep.subr.bf16.mxu0 0
    %1238 = vmatpush1.bf16.msra.mxu0 0
    %1239 = vmatprep.subr.bf16.mxu0 0
    %1240 = vmatpush1.bf16.msra.mxu0 0
    %1241 = vmatprep.subr.bf16.mxu0 0
    %1242 = vmatpush1.bf16.msra.mxu0 0
    %1243 = vmatprep.subr.bf16.mxu0 0
    %1244 = vmatpush1.bf16.msra.mxu0 0
    %1245 = vmatprep.subr.bf16.mxu0 0
    %1246 = vmatpush1.bf16.msra.mxu0 0
    %1247 = vmatprep.subr.bf16.mxu0 0
    %1248 = vmatpush1.bf16.msra.mxu0 0
    %1249 = vmatprep.subr.bf16.mxu0 0
    %1250 = vmatpush1.bf16.msra.mxu0 0
    %1251 = vmatprep.mubr.bf16.mxu0 0
    %1252 = vmatmul.mubr.bf16.gmra.mrb[0].mxu0 %v620
    %v1253 = vpop.f32.mrb[0].mxu0
    %v1254 = vadd.f32 0.0, %v1253
    %v1255 = vpop.f32.mrb[0].mxu0
    %v1256 = vadd.f32 0.0, %v1255
    %v1257 = vpop.f32.mrb[0].mxu0
    %v1258 = vpop.f32.mrb[0].mxu0
    %1259 = vdwg.mxu0
    %1260 = vmatprep.subr.bf16.mxu0 %v449
    %1261 = vmatpush1.bf16.msra.mxu0 %v448
    %1262 = vmatprep.subr.bf16.mxu0 %v453
    %1263 = vmatpush1.bf16.msra.mxu0 %v452
    %1264 = vmatprep.subr.bf16.mxu0 %v457
    %1265 = vmatpush1.bf16.msra.mxu0 %v456
    %1266 = vmatprep.subr.bf16.mxu0 %v461
    %1267 = vmatpush1.bf16.msra.mxu0 %v460
    %1268 = vmatprep.subr.bf16.mxu0 %v465
    %1269 = vmatpush1.bf16.msra.mxu0 %v464
    %1270 = vmatprep.subr.bf16.mxu0 %v469
    %1271 = vmatpush1.bf16.msra.mxu0 %v468
    %1272 = vmatprep.subr.bf16.mxu0 %v473
    %1273 = vmatpush1.bf16.msra.mxu0 %v472
    %1274 = vmatprep.subr.bf16.mxu0 %v477
    %1275 = vmatpush1.bf16.msra.mxu0 %v476
    %1276 = vmatprep.subr.bf16.mxu0 0
    %1277 = vmatpush1.bf16.msra.mxu0 0
    %1278 = vmatprep.subr.bf16.mxu0 0
    %1279 = vmatpush1.bf16.msra.mxu0 0
    %1280 = vmatprep.subr.bf16.mxu0 0
    %1281 = vmatpush1.bf16.msra.mxu0 0
    %1282 = vmatprep.subr.bf16.mxu0 0
    %1283 = vmatpush1.bf16.msra.mxu0 0
    %1284 = vmatprep.subr.bf16.mxu0 0
    %1285 = vmatpush1.bf16.msra.mxu0 0
    %1286 = vmatprep.subr.bf16.mxu0 0
    %1287 = vmatpush1.bf16.msra.mxu0 0
    %1288 = vmatprep.subr.bf16.mxu0 0
    %1289 = vmatpush1.bf16.msra.mxu0 0
    %1290 = vmatprep.subr.bf16.mxu0 0
    %1291 = vmatpush1.bf16.msra.mxu0 0
    %1292 = vmatprep.mubr.bf16.mxu0 0
    %1293 = vmatmul.mubr.bf16.gmra.mrb[0].mxu0 %v620
    %v1294 = vpop.f32.mrb[0].mxu0
    %v1295 = vadd.f32 0.0, %v1294
    %v1296 = vpop.f32.mrb[0].mxu0
    %v1297 = vadd.f32 0.0, %v1296
    %v1298 = vpop.f32.mrb[0].mxu0
    %v1299 = vpop.f32.mrb[0].mxu0
    %1300 = vdwg.mxu0
    %v1301 = vadd.f32 %v211, %v1254
    %v1302 = vadd.f32 %v213, %v1256
    %v1303 = vadd.f32 %v284, %v1295
    %v1304 = vadd.f32 %v286, %v1297
    %v1305 = vxor.u32 %v1301, 2147483648
    %v1306 = vmul.f32 %v1305, 1.442695
    %v1307 = vpow.pop %v1306
    %v1308 = vadd.f32 %v1307, 1.0
    %v1309 = vrcp.pop %v1308
    %v1310 = vmul.f32 1.0, %v1309
    %v1311 = vxor.u32 %v1302, 2147483648
    %v1312 = vmul.f32 %v1311, 1.442695
    %v1313 = vpow.pop %v1312
    %v1314 = vadd.f32 %v1313, 1.0
    %v1315 = vrcp.pop %v1314
    %v1316 = vmul.f32 1.0, %v1315
    %v1317 = vtanh.pop %v1303
    %v1318 = vxor.u32 %v1304, 2147483648
    %v1319 = vmul.f32 %v1318, 1.442695
    %v1320 = vpow.pop %v1319
    %v1321 = vadd.f32 %v1320, 1.0
    %v1322 = vrcp.pop %v1321
    %v1323 = vmul.f32 1.0, %v1322
    %v1324 = vmul.f32 %v1316, %v617
    %v1325 = vmul.f32 %v1310, %v1317
    %v1326 = vadd.f32 %v1324, %v1325
    %v1327 = vtanh.pop %v1326
    %v1328 = vmul.f32 %v1323, %v1327
    %v1329 = vpack.c.bf16 %v1328, %v1328
    %1330 = vmatprep.subr.bf16.mxu0 %v772
    %1331 = vmatpush1.bf16.msra.mxu0 %v771
    %1332 = vmatprep.subr.bf16.mxu0 %v776
    %1333 = vmatpush1.bf16.msra.mxu0 %v775
    %1334 = vmatprep.subr.bf16.mxu0 %v780
    %1335 = vmatpush1.bf16.msra.mxu0 %v779
    %1336 = vmatprep.subr.bf16.mxu0 %v784
    %1337 = vmatpush1.bf16.msra.mxu0 %v783
    %1338 = vmatprep.subr.bf16.mxu0 %v788
    %1339 = vmatpush1.bf16.msra.mxu0 %v787
    %1340 = vmatprep.subr.bf16.mxu0 %v792
    %1341 = vmatpush1.bf16.msra.mxu0 %v791
    %1342 = vmatprep.subr.bf16.mxu0 %v796
    %1343 = vmatpush1.bf16.msra.mxu0 %v795
    %1344 = vmatprep.subr.bf16.mxu0 %v800
    %1345 = vmatpush1.bf16.msra.mxu0 %v799
    %1346 = vmatprep.subr.bf16.mxu0 0
    %1347 = vmatpush1.bf16.msra.mxu0 0
    %1348 = vmatprep.subr.bf16.mxu0 0
    %1349 = vmatpush1.bf16.msra.mxu0 0
    %1350 = vmatprep.subr.bf16.mxu0 0
    %1351 = vmatpush1.bf16.msra.mxu0 0
    %1352 = vmatprep.subr.bf16.mxu0 0
    %1353 = vmatpush1.bf16.msra.mxu0 0
    %1354 = vmatprep.subr.bf16.mxu0 0
    %1355 = vmatpush1.bf16.msra.mxu0 0
    %1356 = vmatprep.subr.bf16.mxu0 0
    %1357 = vmatpush1.bf16.msra.mxu0 0
    %1358 = vmatprep.subr.bf16.mxu0 0
    %1359 = vmatpush1.bf16.msra.mxu0 0
    %1360 = vmatprep.subr.bf16.mxu0 0
    %1361 = vmatpush1.bf16.msra.mxu0 0
    %1362 = vmatprep.mubr.bf16.mxu0 0
    %1363 = vmatmul.mubr.bf16.gmra.mrb[0].mxu0 %v1329
    %v1364 = vpop.f32.mrb[0].mxu0
    %v1365 = vadd.f32 %v658, %v1364
    %v1366 = vpop.f32.mrb[0].mxu0
    %v1367 = vadd.f32 %v662, %v1366
    %v1368 = vpop.f32.mrb[0].mxu0
    %v1369 = vpop.f32.mrb[0].mxu0
    %1370 = vdwg.mxu0
    %1371 = vmatprep.subr.bf16.mxu0 %v774
    %1372 = vmatpush1.bf16.msra.mxu0 %v773
    %1373 = vmatprep.subr.bf16.mxu0 %v778
    %1374 = vmatpush1.bf16.msra.mxu0 %v777
    %1375 = vmatprep.subr.bf16.mxu0 %v782
    %1376 = vmatpush1.bf16.msra.mxu0 %v781
    %1377 = vmatprep.subr.bf16.mxu0 %v786
    %1378 = vmatpush1.bf16.msra.mxu0 %v785
    %1379 = vmatprep.subr.bf16.mxu0 %v790
    %1380 = vmatpush1.bf16.msra.mxu0 %v789
    %1381 = vmatprep.subr.bf16.mxu0 %v794
    %1382 = vmatpush1.bf16.msra.mxu0 %v793
    %1383 = vmatprep.subr.bf16.mxu0 %v798
    %1384 = vmatpush1.bf16.msra.mxu0 %v797
    %1385 = vmatprep.subr.bf16.mxu0 %v802
    %1386 = vmatpush1.bf16.msra.mxu0 %v801
    %1387 = vmatprep.subr.bf16.mxu0 0
    %1388 = vmatpush1.bf16.msra.mxu0 0
    %1389 = vmatprep.subr.bf16.mxu0 0
    %1390 = vmatpush1.bf16.msra.mxu0 0
    %1391 = vmatprep.subr.bf16.mxu0 0
    %1392 = vmatpush1.bf16.msra.mxu0 0
    %1393 = vmatprep.subr.bf16.mxu0 0
    %1394 = vmatpush1.bf16.msra.mxu0 0
    %1395 = vmatprep.subr.bf16.mxu0 0
    %1396 = vmatpush1.bf16.msra.mxu0 0
    %1397 = vmatprep.subr.bf16.mxu0 0
    %1398 = vmatpush1.bf16.msra.mxu0 0
    %1399 = vmatprep.subr.bf16.mxu0 0
    %1400 = vmatpush1.bf16.msra.mxu0 0
    %1401 = vmatprep.subr.bf16.mxu0 0
    %1402 = vmatpush1.bf16.msra.mxu0 0
    %1403 = vmatprep.mubr.bf16.mxu0 0
    %1404 = vmatmul.mubr.bf16.gmra.mrb[0].mxu0 %v1329
    %v1405 = vpop.f32.mrb[0].mxu0
    %v1406 = vadd.f32 %v666, %v1405
    %v1407 = vpop.f32.mrb[0].mxu0
    %v1408 = vadd.f32 %v670, %v1407
    %v1409 = vpop.f32.mrb[0].mxu0
    %v1410 = vpop.f32.mrb[0].mxu0
    %1411 = vdwg.mxu0
    %v1412 = vpack.c.bf16 %v1218, %v1218
    %1413 = vmatprep.subr.bf16.mxu0 %v1046
    %1414 = vmatpush1.bf16.msra.mxu0 %v1045
    %1415 = vmatprep.subr.bf16.mxu0 %v1050
    %1416 = vmatpush1.bf16.msra.mxu0 %v1049
    %1417 = vmatprep.subr.bf16.mxu0 %v1054
    %1418 = vmatpush1.bf16.msra.mxu0 %v1053
    %1419 = vmatprep.subr.bf16.mxu0 %v1058
    %1420 = vmatpush1.bf16.msra.mxu0 %v1057
    %1421 = vmatprep.subr.bf16.mxu0 %v1062
    %1422 = vmatpush1.bf16.msra.mxu0 %v1061
    %1423 = vmatprep.subr.bf16.mxu0 %v1066
    %1424 = vmatpush1.bf16.msra.mxu0 %v1065
    %1425 = vmatprep.subr.bf16.mxu0 %v1070
    %1426 = vmatpush1.bf16.msra.mxu0 %v1069
    %1427 = vmatprep.subr.bf16.mxu0 %v1074
    %1428 = vmatpush1.bf16.msra.mxu0 %v1073
    %1429 = vmatprep.subr.bf16.mxu0 0
    %1430 = vmatpush1.bf16.msra.mxu0 0
    %1431 = vmatprep.subr.bf16.mxu0 0
    %1432 = vmatpush1.bf16.msra.mxu0 0
    %1433 = vmatprep.subr.bf16.mxu0 0
    %1434 = vmatpush1.bf16.msra.mxu0 0
    %1435 = vmatprep.subr.bf16.mxu0 0
    %1436 = vmatpush1.bf16.msra.mxu0 0
    %1437 = vmatprep.subr.bf16.mxu0 0
    %1438 = vmatpush1.bf16.msra.mxu0 0
    %1439 = vmatprep.subr.bf16.mxu0 0
    %1440 = vmatpush1.bf16.msra.mxu0 0
    %1441 = vmatprep.subr.bf16.mxu0 0
    %1442 = vmatpush1.bf16.msra.mxu0 0
    %1443 = vmatprep.subr.bf16.mxu0 0
    %1444 = vmatpush1.bf16.msra.mxu0 0
    %1445 = vmatprep.mubr.bf16.mxu0 0
    %1446 = vmatmul.mubr.bf16.gmra.mrb[0].mxu0 %v1412
    %v1447 = vpop.f32.mrb[0].mxu0
    %v1448 = vadd.f32 0.0, %v1447
    %v1449 = vpop.f32.mrb[0].mxu0
    %v1450 = vadd.f32 0.0, %v1449
    %v1451 = vpop.f32.mrb[0].mxu0
    %v1452 = vpop.f32.mrb[0].mxu0
    %1453 = vdwg.mxu0
    %1454 = vmatprep.subr.bf16.mxu0 %v1048
    %1455 = vmatpush1.bf16.msra.mxu0 %v1047
    %1456 = vmatprep.subr.bf16.mxu0 %v1052
    %1457 = vmatpush1.bf16.msra.mxu0 %v1051
    %1458 = vmatprep.subr.bf16.mxu0 %v1056
    %1459 = vmatpush1.bf16.msra.mxu0 %v1055
    %1460 = vmatprep.subr.bf16.mxu0 %v1060
    %1461 = vmatpush1.bf16.msra.mxu0 %v1059
    %1462 = vmatprep.subr.bf16.mxu0 %v1064
    %1463 = vmatpush1.bf16.msra.mxu0 %v1063
    %1464 = vmatprep.subr.bf16.mxu0 %v1068
    %1465 = vmatpush1.bf16.msra.mxu0 %v1067
    %1466 = vmatprep.subr.bf16.mxu0 %v1072
    %1467 = vmatpush1.bf16.msra.mxu0 %v1071
    %1468 = vmatprep.subr.bf16.mxu0 %v1076
    %1469 = vmatpush1.bf16.msra.mxu0 %v1075
    %1470 = vmatprep.subr.bf16.mxu0 0
    %1471 = vmatpush1.bf16.msra.mxu0 0
    %1472 = vmatprep.subr.bf16.mxu0 0
    %1473 = vmatpush1.bf16.msra.mxu0 0
    %1474 = vmatprep.subr.bf16.mxu0 0
    %1475 = vmatpush1.bf16.msra.mxu0 0
    %1476 = vmatprep.subr.bf16.mxu0 0
    %1477 = vmatpush1.bf16.msra.mxu0 0
    %1478 = vmatprep.subr.bf16.mxu0 0
    %1479 = vmatpush1.bf16.msra.mxu0 0
    %1480 = vmatprep.subr.bf16.mxu0 0
    %1481 = vmatpush1.bf16.msra.mxu0 0
    %1482 = vmatprep.subr.bf16.mxu0 0
    %1483 = vmatpush1.bf16.msra.mxu0 0
    %1484 = vmatprep.subr.bf16.mxu0 0
    %1485 = vmatpush1.bf16.msra.mxu0 0
    %1486 = vmatprep.mubr.bf16.mxu0 0
    %1487 = vmatmul.mubr.bf16.gmra.mrb[0].mxu0 %v1412
    %v1488 = vpop.f32.mrb[0].mxu0
    %v1489 = vadd.f32 0.0, %v1488
    %v1490 = vpop.f32.mrb[0].mxu0
    %v1491 = vadd.f32 0.0, %v1490
    %v1492 = vpop.f32.mrb[0].mxu0
    %v1493 = vpop.f32.mrb[0].mxu0
    %1494 = vdwg.mxu0
    %v1495 = vadd.f32 %v1365, %v1448
    %v1496 = vadd.f32 %v1367, %v1450
    %v1497 = vadd.f32 %v1406, %v1489
    %v1498 = vadd.f32 %v1408, %v1491
    %v1499 = vxor.u32 %v1495, 2147483648
    %v1500 = vmul.f32 %v1499, 1.442695
    %v1501 = vpow.pop %v1500
    %v1502 = vadd.f32 %v1501, 1.0
    %v1503 = vrcp.pop %v1502
    %v1504 = vmul.f32 1.0, %v1503
    %v1505 = vxor.u32 %v1496, 2147483648
    %v1506 = vmul.f32 %v1505, 1.442695
    %v1507 = vpow.pop %v1506
    %v1508 = vadd.f32 %v1507, 1.0
    %v1509 = vrcp.pop %v1508
    %v1510 = vmul.f32 1.0, %v1509
    %v1511 = vtanh.pop %v1497
    %v1512 = vxor.u32 %v1498, 2147483648
    %v1513 = vmul.f32 %v1512, 1.442695
    %v1514 = vpow.pop %v1513
    %v1515 = vadd.f32 %v1514, 1.0
    %v1516 = vrcp.pop %v1515
    %v1517 = vmul.f32 1.0, %v1516
    %v1518 = vmul.f32 %v1510, %v1216
    %v1519 = vmul.f32 %v1504, %v1511
    %v1520 = vadd.f32 %v1518, %v1519
    %v1521 = vtanh.pop %v1520
    %v1522 = vmul.f32 %v1517, %v1521
    %1523 = vmatprep.subr.bf16.mxu0 %v447
    %1524 = vmatpush1.bf16.msra.mxu0 %v446
    %1525 = vmatprep.subr.bf16.mxu0 %v451
    %1526 = vmatpush1.bf16.msra.mxu0 %v450
    %1527 = vmatprep.subr.bf16.mxu0 %v455
    %1528 = vmatpush1.bf16.msra.mxu0 %v454
    %1529 = vmatprep.subr.bf16.mxu0 %v459
    %1530 = vmatpush1.bf16.msra.mxu0 %v458
    %1531 = vmatprep.subr.bf16.mxu0 %v463
    %1532 = vmatpush1.bf16.msra.mxu0 %v462
    %1533 = vmatprep.subr.bf16.mxu0 %v467
    %1534 = vmatpush1.bf16.msra.mxu0 %v466
    %1535 = vmatprep.subr.bf16.mxu0 %v471
    %1536 = vmatpush1.bf16.msra.mxu0 %v470
    %1537 = vmatprep.subr.bf16.mxu0 %v475
    %1538 = vmatpush1.bf16.msra.mxu0 %v474
    %1539 = vmatprep.subr.bf16.mxu0 0
    %1540 = vmatpush1.bf16.msra.mxu0 0
    %1541 = vmatprep.subr.bf16.mxu0 0
    %1542 = vmatpush1.bf16.msra.mxu0 0
    %1543 = vmatprep.subr.bf16.mxu0 0
    %1544 = vmatpush1.bf16.msra.mxu0 0
    %1545 = vmatprep.subr.bf16.mxu0 0
    %1546 = vmatpush1.bf16.msra.mxu0 0
    %1547 = vmatprep.subr.bf16.mxu0 0
    %1548 = vmatpush1.bf16.msra.mxu0 0
    %1549 = vmatprep.subr.bf16.mxu0 0
    %1550 = vmatpush1.bf16.msra.mxu0 0
    %1551 = vmatprep.subr.bf16.mxu0 0
    %1552 = vmatpush1.bf16.msra.mxu0 0
    %1553 = vmatprep.subr.bf16.mxu0 0
    %1554 = vmatpush1.bf16.msra.mxu0 0
    %1555 = vmatprep.mubr.bf16.mxu0 0
    %1556 = vmatmul.mubr.bf16.gmra.mrb[0].mxu0 %v1329
    %v1557 = vpop.f32.mrb[0].mxu0
    %v1558 = vadd.f32 0.0, %v1557
    %v1559 = vpop.f32.mrb[0].mxu0
    %v1560 = vadd.f32 0.0, %v1559
    %v1561 = vpop.f32.mrb[0].mxu0
    %v1562 = vpop.f32.mrb[0].mxu0
    %1563 = vdwg.mxu0
    %1564 = vmatprep.subr.bf16.mxu0 %v449
    %1565 = vmatpush1.bf16.msra.mxu0 %v448
    %1566 = vmatprep.subr.bf16.mxu0 %v453
    %1567 = vmatpush1.bf16.msra.mxu0 %v452
    %1568 = vmatprep.subr.bf16.mxu0 %v457
    %1569 = vmatpush1.bf16.msra.mxu0 %v456
    %1570 = vmatprep.subr.bf16.mxu0 %v461
    %1571 = vmatpush1.bf16.msra.mxu0 %v460
    %1572 = vmatprep.subr.bf16.mxu0 %v465
    %1573 = vmatpush1.bf16.msra.mxu0 %v464
    %1574 = vmatprep.subr.bf16.mxu0 %v469
    %1575 = vmatpush1.bf16.msra.mxu0 %v468
    %1576 = vmatprep.subr.bf16.mxu0 %v473
    %1577 = vmatpush1.bf16.msra.mxu0 %v472
    %1578 = vmatprep.subr.bf16.mxu0 %v477
    %1579 = vmatpush1.bf16.msra.mxu0 %v476
    %1580 = vmatprep.subr.bf16.mxu0 0
    %1581 = vmatpush1.bf16.msra.mxu0 0
    %1582 = vmatprep.subr.bf16.mxu0 0
    %1583 = vmatpush1.bf16.msra.mxu0 0
    %1584 = vmatprep.subr.bf16.mxu0 0
    %1585 = vmatpush1.bf16.msra.mxu0 0
    %1586 = vmatprep.subr.bf16.mxu0 0
    %1587 = vmatpush1.bf16.msra.mxu0 0
    %1588 = vmatprep.subr.bf16.mxu0 0
    %1589 = vmatpush1.bf16.msra.mxu0 0
    %1590 = vmatprep.subr.bf16.mxu0 0
    %1591 = vmatpush1.bf16.msra.mxu0 0
    %1592 = vmatprep.subr.bf16.mxu0 0
    %1593 = vmatpush1.bf16.msra.mxu0 0
    %1594 = vmatprep.subr.bf16.mxu0 0
    %1595 = vmatpush1.bf16.msra.mxu0 0
    %1596 = vmatprep.mubr.bf16.mxu0 0
    %1597 = vmatmul.mubr.bf16.gmra.mrb[0].mxu0 %v1329
    %v1598 = vpop.f32.mrb[0].mxu0
    %v1599 = vadd.f32 0.0, %v1598
    %v1600 = vpop.f32.mrb[0].mxu0
    %v1601 = vadd.f32 0.0, %v1600
    %v1602 = vpop.f32.mrb[0].mxu0
    %v1603 = vpop.f32.mrb[0].mxu0
    %1604 = vdwg.mxu0
    %v1605 = vadd.f32 %v217, %v1558
    %v1606 = vadd.f32 %v219, %v1560
    %v1607 = vadd.f32 %v290, %v1599
    %v1608 = vadd.f32 %v292, %v1601
    %v1609 = vxor.u32 %v1605, 2147483648
    %v1610 = vmul.f32 %v1609, 1.442695
    %v1611 = vpow.pop %v1610
    %v1612 = vadd.f32 %v1611, 1.0
    %v1613 = vrcp.pop %v1612
    %v1614 = vmul.f32 1.0, %v1613
    %v1615 = vxor.u32 %v1606, 2147483648
    %v1616 = vmul.f32 %v1615, 1.442695
    %v1617 = vpow.pop %v1616
    %v1618 = vadd.f32 %v1617, 1.0
    %v1619 = vrcp.pop %v1618
    %v1620 = vmul.f32 1.0, %v1619
    %v1621 = vtanh.pop %v1607
    %v1622 = vxor.u32 %v1608, 2147483648
    %v1623 = vmul.f32 %v1622, 1.442695
    %v1624 = vpow.pop %v1623
    %v1625 = vadd.f32 %v1624, 1.0
    %v1626 = vrcp.pop %v1625
    %v1627 = vmul.f32 1.0, %v1626
    %v1628 = vmul.f32 %v1620, %v1326
    %v1629 = vmul.f32 %v1614, %v1621
    %v1630 = vadd.f32 %v1628, %v1629
    %v1631 = vtanh.pop %v1630
    %v1632 = vmul.f32 %v1627, %v1631
    %v1633 = vpack.c.bf16 %v1632, %v1632
    %1634 = vmatprep.subr.bf16.mxu0 %v772
    %1635 = vmatpush1.bf16.msra.mxu0 %v771
    %1636 = vmatprep.subr.bf16.mxu0 %v776
    %1637 = vmatpush1.bf16.msra.mxu0 %v775
    %1638 = vmatprep.subr.bf16.mxu0 %v780
    %1639 = vmatpush1.bf16.msra.mxu0 %v779
    %1640 = vmatprep.subr.bf16.mxu0 %v784
    %1641 = vmatpush1.bf16.msra.mxu0 %v783
    %1642 = vmatprep.subr.bf16.mxu0 %v788
    %1643 = vmatpush1.bf16.msra.mxu0 %v787
    %1644 = vmatprep.subr.bf16.mxu0 %v792
    %1645 = vmatpush1.bf16.msra.mxu0 %v791
    %1646 = vmatprep.subr.bf16.mxu0 %v796
    %1647 = vmatpush1.bf16.msra.mxu0 %v795
    %1648 = vmatprep.subr.bf16.mxu0 %v800
    %1649 = vmatpush1.bf16.msra.mxu0 %v799
    %1650 = vmatprep.subr.bf16.mxu0 0
    %1651 = vmatpush1.bf16.msra.mxu0 0
    %1652 = vmatprep.subr.bf16.mxu0 0
    %1653 = vmatpush1.bf16.msra.mxu0 0
    %1654 = vmatprep.subr.bf16.mxu0 0
    %1655 = vmatpush1.bf16.msra.mxu0 0
    %1656 = vmatprep.subr.bf16.mxu0 0
    %1657 = vmatpush1.bf16.msra.mxu0 0
    %1658 = vmatprep.subr.bf16.mxu0 0
    %1659 = vmatpush1.bf16.msra.mxu0 0
    %1660 = vmatprep.subr.bf16.mxu0 0
    %1661 = vmatpush1.bf16.msra.mxu0 0
    %1662 = vmatprep.subr.bf16.mxu0 0
    %1663 = vmatpush1.bf16.msra.mxu0 0
    %1664 = vmatprep.subr.bf16.mxu0 0
    %1665 = vmatpush1.bf16.msra.mxu0 0
    %1666 = vmatprep.mubr.bf16.mxu0 0
    %1667 = vmatmul.mubr.bf16.gmra.mrb[0].mxu0 %v1633
    %v1668 = vpop.f32.mrb[0].mxu0
    %v1669 = vadd.f32 %v658, %v1668
    %v1670 = vpop.f32.mrb[0].mxu0
    %v1671 = vadd.f32 %v662, %v1670
    %v1672 = vpop.f32.mrb[0].mxu0
    %v1673 = vpop.f32.mrb[0].mxu0
    %1674 = vdwg.mxu0
    %1675 = vmatprep.subr.bf16.mxu0 %v774
    %1676 = vmatpush1.bf16.msra.mxu0 %v773
    %1677 = vmatprep.subr.bf16.mxu0 %v778
    %1678 = vmatpush1.bf16.msra.mxu0 %v777
    %1679 = vmatprep.subr.bf16.mxu0 %v782
    %1680 = vmatpush1.bf16.msra.mxu0 %v781
    %1681 = vmatprep.subr.bf16.mxu0 %v786
    %1682 = vmatpush1.bf16.msra.mxu0 %v785
    %1683 = vmatprep.subr.bf16.mxu0 %v790
    %1684 = vmatpush1.bf16.msra.mxu0 %v789
    %1685 = vmatprep.subr.bf16.mxu0 %v794
    %1686 = vmatpush1.bf16.msra.mxu0 %v793
    %1687 = vmatprep.subr.bf16.mxu0 %v798
    %1688 = vmatpush1.bf16.msra.mxu0 %v797
    %1689 = vmatprep.subr.bf16.mxu0 %v802
    %1690 = vmatpush1.bf16.msra.mxu0 %v801
    %1691 = vmatprep.subr.bf16.mxu0 0
    %1692 = vmatpush1.bf16.msra.mxu0 0
    %1693 = vmatprep.subr.bf16.mxu0 0
    %1694 = vmatpush1.bf16.msra.mxu0 0
    %1695 = vmatprep.subr.bf16.mxu0 0
    %1696 = vmatpush1.bf16.msra.mxu0 0
    %1697 = vmatprep.subr.bf16.mxu0 0
    %1698 = vmatpush1.bf16.msra.mxu0 0
    %1699 = vmatprep.subr.bf16.mxu0 0
    %1700 = vmatpush1.bf16.msra.mxu0 0
    %1701 = vmatprep.subr.bf16.mxu0 0
    %1702 = vmatpush1.bf16.msra.mxu0 0
    %1703 = vmatprep.subr.bf16.mxu0 0
    %1704 = vmatpush1.bf16.msra.mxu0 0
    %1705 = vmatprep.subr.bf16.mxu0 0
    %1706 = vmatpush1.bf16.msra.mxu0 0
    %1707 = vmatprep.mubr.bf16.mxu0 0
    %1708 = vmatmul.mubr.bf16.gmra.mrb[0].mxu0 %v1633
    %v1709 = vpop.f32.mrb[0].mxu0
    %v1710 = vadd.f32 %v666, %v1709
    %v1711 = vpop.f32.mrb[0].mxu0
    %v1712 = vadd.f32 %v670, %v1711
    %v1713 = vpop.f32.mrb[0].mxu0
    %v1714 = vpop.f32.mrb[0].mxu0
    %1715 = vdwg.mxu0
    %v1716 = vpack.c.bf16 %v1522, %v1522
    %1717 = vmatprep.subr.bf16.mxu0 %v1046
    %1718 = vmatpush1.bf16.msra.mxu0 %v1045
    %1719 = vmatprep.subr.bf16.mxu0 %v1050
    %1720 = vmatpush1.bf16.msra.mxu0 %v1049
    %1721 = vmatprep.subr.bf16.mxu0 %v1054
    %1722 = vmatpush1.bf16.msra.mxu0 %v1053
    %1723 = vmatprep.subr.bf16.mxu0 %v1058
    %1724 = vmatpush1.bf16.msra.mxu0 %v1057
    %1725 = vmatprep.subr.bf16.mxu0 %v1062
    %1726 = vmatpush1.bf16.msra.mxu0 %v1061
    %1727 = vmatprep.subr.bf16.mxu0 %v1066
    %1728 = vmatpush1.bf16.msra.mxu0 %v1065
    %1729 = vmatprep.subr.bf16.mxu0 %v1070
    %1730 = vmatpush1.bf16.msra.mxu0 %v1069
    %1731 = vmatprep.subr.bf16.mxu0 %v1074
    %1732 = vmatpush1.bf16.msra.mxu0 %v1073
    %1733 = vmatprep.subr.bf16.mxu0 0
    %1734 = vmatpush1.bf16.msra.mxu0 0
    %1735 = vmatprep.subr.bf16.mxu0 0
    %1736 = vmatpush1.bf16.msra.mxu0 0
    %1737 = vmatprep.subr.bf16.mxu0 0
    %1738 = vmatpush1.bf16.msra.mxu0 0
    %1739 = vmatprep.subr.bf16.mxu0 0
    %1740 = vmatpush1.bf16.msra.mxu0 0
    %1741 = vmatprep.subr.bf16.mxu0 0
    %1742 = vmatpush1.bf16.msra.mxu0 0
    %1743 = vmatprep.subr.bf16.mxu0 0
    %1744 = vmatpush1.bf16.msra.mxu0 0
    %1745 = vmatprep.subr.bf16.mxu0 0
    %1746 = vmatpush1.bf16.msra.mxu0 0
    %1747 = vmatprep.subr.bf16.mxu0 0
    %1748 = vmatpush1.bf16.msra.mxu0 0
    %1749 = vmatprep.mubr.bf16.mxu0 0
    %1750 = vmatmul.mubr.bf16.gmra.mrb[0].mxu0 %v1716
    %v1751 = vpop.f32.mrb[0].mxu0
    %v1752 = vadd.f32 0.0, %v1751
    %v1753 = vpop.f32.mrb[0].mxu0
    %v1754 = vadd.f32 0.0, %v1753
    %v1755 = vpop.f32.mrb[0].mxu0
    %v1756 = vpop.f32.mrb[0].mxu0
    %1757 = vdwg.mxu0
    %1758 = vmatprep.subr.bf16.mxu0 %v1048
    %1759 = vmatpush1.bf16.msra.mxu0 %v1047
    %1760 = vmatprep.subr.bf16.mxu0 %v1052
    %1761 = vmatpush1.bf16.msra.mxu0 %v1051
    %1762 = vmatprep.subr.bf16.mxu0 %v1056
    %1763 = vmatpush1.bf16.msra.mxu0 %v1055
    %1764 = vmatprep.subr.bf16.mxu0 %v1060
    %1765 = vmatpush1.bf16.msra.mxu0 %v1059
    %1766 = vmatprep.subr.bf16.mxu0 %v1064
    %1767 = vmatpush1.bf16.msra.mxu0 %v1063
    %1768 = vmatprep.subr.bf16.mxu0 %v1068
    %1769 = vmatpush1.bf16.msra.mxu0 %v1067
    %1770 = vmatprep.subr.bf16.mxu0 %v1072
    %1771 = vmatpush1.bf16.msra.mxu0 %v1071
    %1772 = vmatprep.subr.bf16.mxu0 %v1076
    %1773 = vmatpush1.bf16.msra.mxu0 %v1075
    %1774 = vmatprep.subr.bf16.mxu0 0
    %1775 = vmatpush1.bf16.msra.mxu0 0
    %1776 = vmatprep.subr.bf16.mxu0 0
    %1777 = vmatpush1.bf16.msra.mxu0 0
    %1778 = vmatprep.subr.bf16.mxu0 0
    %1779 = vmatpush1.bf16.msra.mxu0 0
    %1780 = vmatprep.subr.bf16.mxu0 0
    %1781 = vmatpush1.bf16.msra.mxu0 0
    %1782 = vmatprep.subr.bf16.mxu0 0
    %1783 = vmatpush1.bf16.msra.mxu0 0
    %1784 = vmatprep.subr.bf16.mxu0 0
    %1785 = vmatpush1.bf16.msra.mxu0 0
    %1786 = vmatprep.subr.bf16.mxu0 0
    %1787 = vmatpush1.bf16.msra.mxu0 0
    %1788 = vmatprep.subr.bf16.mxu0 0
    %1789 = vmatpush1.bf16.msra.mxu0 0
    %1790 = vmatprep.mubr.bf16.mxu0 0
    %1791 = vmatmul.mubr.bf16.gmra.mrb[0].mxu0 %v1716
    %v1792 = vpop.f32.mrb[0].mxu0
    %v1793 = vadd.f32 0.0, %v1792
    %v1794 = vpop.f32.mrb[0].mxu0
    %v1795 = vadd.f32 0.0, %v1794
    %v1796 = vpop.f32.mrb[0].mxu0
    %v1797 = vpop.f32.mrb[0].mxu0
    %1798 = vdwg.mxu0
    %v1799 = vadd.f32 %v1669, %v1752
    %v1800 = vadd.f32 %v1671, %v1754
    %v1801 = vadd.f32 %v1710, %v1793
    %v1802 = vadd.f32 %v1712, %v1795
    %v1803 = vxor.u32 %v1799, 2147483648
    %v1804 = vmul.f32 %v1803, 1.442695
    %v1805 = vpow.pop %v1804
    %v1806 = vadd.f32 %v1805, 1.0
    %v1807 = vrcp.pop %v1806
    %v1808 = vmul.f32 1.0, %v1807
    %v1809 = vxor.u32 %v1800, 2147483648
    %v1810 = vmul.f32 %v1809, 1.442695
    %v1811 = vpow.pop %v1810
    %v1812 = vadd.f32 %v1811, 1.0
    %v1813 = vrcp.pop %v1812
    %v1814 = vmul.f32 1.0, %v1813
    %v1815 = vtanh.pop %v1801
    %v1816 = vxor.u32 %v1802, 2147483648
    %v1817 = vmul.f32 %v1816, 1.442695
    %v1818 = vpow.pop %v1817
    %v1819 = vadd.f32 %v1818, 1.0
    %v1820 = vrcp.pop %v1819
    %v1821 = vmul.f32 1.0, %v1820
    %v1822 = vmul.f32 %v1814, %v1520
    %v1823 = vmul.f32 %v1808, %v1815
    %v1824 = vadd.f32 %v1822, %v1823
    %v1825 = vtanh.pop %v1824
    %v1826 = vmul.f32 %v1821, %v1825
    %1827 = vmatprep.subr.bf16.mxu0 %v447
    %1828 = vmatpush1.bf16.msra.mxu0 %v446
    %1829 = vmatprep.subr.bf16.mxu0 %v451
    %1830 = vmatpush1.bf16.msra.mxu0 %v450
    %1831 = vmatprep.subr.bf16.mxu0 %v455
    %1832 = vmatpush1.bf16.msra.mxu0 %v454
    %1833 = vmatprep.subr.bf16.mxu0 %v459
    %1834 = vmatpush1.bf16.msra.mxu0 %v458
    %1835 = vmatprep.subr.bf16.mxu0 %v463
    %1836 = vmatpush1.bf16.msra.mxu0 %v462
    %1837 = vmatprep.subr.bf16.mxu0 %v467
    %1838 = vmatpush1.bf16.msra.mxu0 %v466
    %1839 = vmatprep.subr.bf16.mxu0 %v471
    %1840 = vmatpush1.bf16.msra.mxu0 %v470
    %1841 = vmatprep.subr.bf16.mxu0 %v475
    %1842 = vmatpush1.bf16.msra.mxu0 %v474
    %1843 = vmatprep.subr.bf16.mxu0 0
    %1844 = vmatpush1.bf16.msra.mxu0 0
    %1845 = vmatprep.subr.bf16.mxu0 0
    %1846 = vmatpush1.bf16.msra.mxu0 0
    %1847 = vmatprep.subr.bf16.mxu0 0
    %1848 = vmatpush1.bf16.msra.mxu0 0
    %1849 = vmatprep.subr.bf16.mxu0 0
    %1850 = vmatpush1.bf16.msra.mxu0 0
    %1851 = vmatprep.subr.bf16.mxu0 0
    %1852 = vmatpush1.bf16.msra.mxu0 0
    %1853 = vmatprep.subr.bf16.mxu0 0
    %1854 = vmatpush1.bf16.msra.mxu0 0
    %1855 = vmatprep.subr.bf16.mxu0 0
    %1856 = vmatpush1.bf16.msra.mxu0 0
    %1857 = vmatprep.subr.bf16.mxu0 0
    %1858 = vmatpush1.bf16.msra.mxu0 0
    %1859 = vmatprep.mubr.bf16.mxu0 0
    %1860 = vmatmul.mubr.bf16.gmra.mrb[0].mxu0 %v1633
    %v1861 = vpop.f32.mrb[0].mxu0
    %v1862 = vadd.f32 0.0, %v1861
    %v1863 = vpop.f32.mrb[0].mxu0
    %v1864 = vadd.f32 0.0, %v1863
    %v1865 = vpop.f32.mrb[0].mxu0
    %v1866 = vpop.f32.mrb[0].mxu0
    %1867 = vdwg.mxu0
    %1868 = vmatprep.subr.bf16.mxu0 %v449
    %1869 = vmatpush1.bf16.msra.mxu0 %v448
    %1870 = vmatprep.subr.bf16.mxu0 %v453
    %1871 = vmatpush1.bf16.msra.mxu0 %v452
    %1872 = vmatprep.subr.bf16.mxu0 %v457
    %1873 = vmatpush1.bf16.msra.mxu0 %v456
    %1874 = vmatprep.subr.bf16.mxu0 %v461
    %1875 = vmatpush1.bf16.msra.mxu0 %v460
    %1876 = vmatprep.subr.bf16.mxu0 %v465
    %1877 = vmatpush1.bf16.msra.mxu0 %v464
    %1878 = vmatprep.subr.bf16.mxu0 %v469
    %1879 = vmatpush1.bf16.msra.mxu0 %v468
    %1880 = vmatprep.subr.bf16.mxu0 %v473
    %1881 = vmatpush1.bf16.msra.mxu0 %v472
    %1882 = vmatprep.subr.bf16.mxu0 %v477
    %1883 = vmatpush1.bf16.msra.mxu0 %v476
    %1884 = vmatprep.subr.bf16.mxu0 0
    %1885 = vmatpush1.bf16.msra.mxu0 0
    %1886 = vmatprep.subr.bf16.mxu0 0
    %1887 = vmatpush1.bf16.msra.mxu0 0
    %1888 = vmatprep.subr.bf16.mxu0 0
    %1889 = vmatpush1.bf16.msra.mxu0 0
    %1890 = vmatprep.subr.bf16.mxu0 0
    %1891 = vmatpush1.bf16.msra.mxu0 0
    %1892 = vmatprep.subr.bf16.mxu0 0
    %1893 = vmatpush1.bf16.msra.mxu0 0
    %1894 = vmatprep.subr.bf16.mxu0 0
    %1895 = vmatpush1.bf16.msra.mxu0 0
    %1896 = vmatprep.subr.bf16.mxu0 0
    %1897 = vmatpush1.bf16.msra.mxu0 0
    %1898 = vmatprep.subr.bf16.mxu0 0
    %1899 = vmatpush1.bf16.msra.mxu0 0
    %1900 = vmatprep.mubr.bf16.mxu0 0
    %1901 = vmatmul.mubr.bf16.gmra.mrb[0].mxu0 %v1633
    %v1902 = vpop.f32.mrb[0].mxu0
    %v1903 = vadd.f32 0.0, %v1902
    %v1904 = vpop.f32.mrb[0].mxu0
    %v1905 = vadd.f32 0.0, %v1904
    %v1906 = vpop.f32.mrb[0].mxu0
    %v1907 = vpop.f32.mrb[0].mxu0
    %1908 = vdwg.mxu0
    %v1909 = vadd.f32 %v221, %v1862
    %v1910 = vadd.f32 %v223, %v1864
    %v1911 = vadd.f32 %v294, %v1903
    %v1912 = vadd.f32 %v296, %v1905
    %v1913 = vxor.u32 %v1909, 2147483648
    %v1914 = vmul.f32 %v1913, 1.442695
    %v1915 = vpow.pop %v1914
    %v1916 = vadd.f32 %v1915, 1.0
    %v1917 = vrcp.pop %v1916
    %v1918 = vmul.f32 1.0, %v1917
    %v1919 = vxor.u32 %v1910, 2147483648
    %v1920 = vmul.f32 %v1919, 1.442695
    %v1921 = vpow.pop %v1920
    %v1922 = vadd.f32 %v1921, 1.0
    %v1923 = vrcp.pop %v1922
    %v1924 = vmul.f32 1.0, %v1923
    %v1925 = vtanh.pop %v1911
    %v1926 = vxor.u32 %v1912, 2147483648
    %v1927 = vmul.f32 %v1926, 1.442695
    %v1928 = vpow.pop %v1927
    %v1929 = vadd.f32 %v1928, 1.0
    %v1930 = vrcp.pop %v1929
    %v1931 = vmul.f32 1.0, %v1930
    %v1932 = vmul.f32 %v1924, %v1630
    %v1933 = vmul.f32 %v1918, %v1925
    %v1934 = vadd.f32 %v1932, %v1933
    %v1935 = vtanh.pop %v1934
    %v1936 = vmul.f32 %v1931, %v1935
    %v1937 = vpack.c.bf16 %v1936, %v1936
    %1938 = vmatprep.subr.bf16.mxu0 %v772
    %1939 = vmatpush1.bf16.msra.mxu0 %v771
    %1940 = vmatprep.subr.bf16.mxu0 %v776
    %1941 = vmatpush1.bf16.msra.mxu0 %v775
    %1942 = vmatprep.subr.bf16.mxu0 %v780
    %1943 = vmatpush1.bf16.msra.mxu0 %v779
    %1944 = vmatprep.subr.bf16.mxu0 %v784
    %1945 = vmatpush1.bf16.msra.mxu0 %v783
    %1946 = vmatprep.subr.bf16.mxu0 %v788
    %1947 = vmatpush1.bf16.msra.mxu0 %v787
    %1948 = vmatprep.subr.bf16.mxu0 %v792
    %1949 = vmatpush1.bf16.msra.mxu0 %v791
    %1950 = vmatprep.subr.bf16.mxu0 %v796
    %1951 = vmatpush1.bf16.msra.mxu0 %v795
    %1952 = vmatprep.subr.bf16.mxu0 %v800
    %1953 = vmatpush1.bf16.msra.mxu0 %v799
    %1954 = vmatprep.subr.bf16.mxu0 0
    %1955 = vmatpush1.bf16.msra.mxu0 0
    %1956 = vmatprep.subr.bf16.mxu0 0
    %1957 = vmatpush1.bf16.msra.mxu0 0
    %1958 = vmatprep.subr.bf16.mxu0 0
    %1959 = vmatpush1.bf16.msra.mxu0 0
    %1960 = vmatprep.subr.bf16.mxu0 0
    %1961 = vmatpush1.bf16.msra.mxu0 0
    %1962 = vmatprep.subr.bf16.mxu0 0
    %1963 = vmatpush1.bf16.msra.mxu0 0
    %1964 = vmatprep.subr.bf16.mxu0 0
    %1965 = vmatpush1.bf16.msra.mxu0 0
    %1966 = vmatprep.subr.bf16.mxu0 0
    %1967 = vmatpush1.bf16.msra.mxu0 0
    %1968 = vmatprep.subr.bf16.mxu0 0
    %1969 = vmatpush1.bf16.msra.mxu0 0
    %1970 = vmatprep.mubr.bf16.mxu0 0
    %1971 = vmatmul.mubr.bf16.gmra.mrb[0].mxu0 %v1937
    %v1972 = vpop.f32.mrb[0].mxu0
    %v1973 = vadd.f32 %v658, %v1972
    %v1974 = vpop.f32.mrb[0].mxu0
    %v1975 = vadd.f32 %v662, %v1974
    %v1976 = vpop.f32.mrb[0].mxu0
    %v1977 = vpop.f32.mrb[0].mxu0
    %1978 = vdwg.mxu0
    %1979 = vmatprep.subr.bf16.mxu0 %v774
    %1980 = vmatpush1.bf16.msra.mxu0 %v773
    %1981 = vmatprep.subr.bf16.mxu0 %v778
    %1982 = vmatpush1.bf16.msra.mxu0 %v777
    %1983 = vmatprep.subr.bf16.mxu0 %v782
    %1984 = vmatpush1.bf16.msra.mxu0 %v781
    %1985 = vmatprep.subr.bf16.mxu0 %v786
    %1986 = vmatpush1.bf16.msra.mxu0 %v785
    %1987 = vmatprep.subr.bf16.mxu0 %v790
    %1988 = vmatpush1.bf16.msra.mxu0 %v789
    %1989 = vmatprep.subr.bf16.mxu0 %v794
    %1990 = vmatpush1.bf16.msra.mxu0 %v793
    %1991 = vmatprep.subr.bf16.mxu0 %v798
    %1992 = vmatpush1.bf16.msra.mxu0 %v797
    %1993 = vmatprep.subr.bf16.mxu0 %v802
    %1994 = vmatpush1.bf16.msra.mxu0 %v801
    %1995 = vmatprep.subr.bf16.mxu0 0
    %1996 = vmatpush1.bf16.msra.mxu0 0
    %1997 = vmatprep.subr.bf16.mxu0 0
    %1998 = vmatpush1.bf16.msra.mxu0 0
    %1999 = vmatprep.subr.bf16.mxu0 0
    %2000 = vmatpush1.bf16.msra.mxu0 0
    %2001 = vmatprep.subr.bf16.mxu0 0
    %2002 = vmatpush1.bf16.msra.mxu0 0
    %2003 = vmatprep.subr.bf16.mxu0 0
    %2004 = vmatpush1.bf16.msra.mxu0 0
    %2005 = vmatprep.subr.bf16.mxu0 0
    %2006 = vmatpush1.bf16.msra.mxu0 0
    %2007 = vmatprep.subr.bf16.mxu0 0
    %2008 = vmatpush1.bf16.msra.mxu0 0
    %2009 = vmatprep.subr.bf16.mxu0 0
    %2010 = vmatpush1.bf16.msra.mxu0 0
    %2011 = vmatprep.mubr.bf16.mxu0 0
    %2012 = vmatmul.mubr.bf16.gmra.mrb[0].mxu0 %v1937
    %v2013 = vpop.f32.mrb[0].mxu0
    %v2014 = vadd.f32 %v666, %v2013
    %v2015 = vpop.f32.mrb[0].mxu0
    %v2016 = vadd.f32 %v670, %v2015
    %v2017 = vpop.f32.mrb[0].mxu0
    %v2018 = vpop.f32.mrb[0].mxu0
    %2019 = vdwg.mxu0
    %v2020 = vpack.c.bf16 %v1826, %v1826
    %2021 = vmatprep.subr.bf16.mxu0 %v1046
    %2022 = vmatpush1.bf16.msra.mxu0 %v1045
    %2023 = vmatprep.subr.bf16.mxu0 %v1050
    %2024 = vmatpush1.bf16.msra.mxu0 %v1049
    %2025 = vmatprep.subr.bf16.mxu0 %v1054
    %2026 = vmatpush1.bf16.msra.mxu0 %v1053
    %2027 = vmatprep.subr.bf16.mxu0 %v1058
    %2028 = vmatpush1.bf16.msra.mxu0 %v1057
    %2029 = vmatprep.subr.bf16.mxu0 %v1062
    %2030 = vmatpush1.bf16.msra.mxu0 %v1061
    %2031 = vmatprep.subr.bf16.mxu0 %v1066
    %2032 = vmatpush1.bf16.msra.mxu0 %v1065
    %2033 = vmatprep.subr.bf16.mxu0 %v1070
    %2034 = vmatpush1.bf16.msra.mxu0 %v1069
    %2035 = vmatprep.subr.bf16.mxu0 %v1074
    %2036 = vmatpush1.bf16.msra.mxu0 %v1073
    %2037 = vmatprep.subr.bf16.mxu0 0
    %2038 = vmatpush1.bf16.msra.mxu0 0
    %2039 = vmatprep.subr.bf16.mxu0 0
    %2040 = vmatpush1.bf16.msra.mxu0 0
    %2041 = vmatprep.subr.bf16.mxu0 0
    %2042 = vmatpush1.bf16.msra.mxu0 0
    %2043 = vmatprep.subr.bf16.mxu0 0
    %2044 = vmatpush1.bf16.msra.mxu0 0
    %2045 = vmatprep.subr.bf16.mxu0 0
    %2046 = vmatpush1.bf16.msra.mxu0 0
    %2047 = vmatprep.subr.bf16.mxu0 0
    %2048 = vmatpush1.bf16.msra.mxu0 0
    %2049 = vmatprep.subr.bf16.mxu0 0
    %2050 = vmatpush1.bf16.msra.mxu0 0
    %2051 = vmatprep.subr.bf16.mxu0 0
    %2052 = vmatpush1.bf16.msra.mxu0 0
    %2053 = vmatprep.mubr.bf16.mxu0 0
    %2054 = vmatmul.mubr.bf16.gmra.mrb[0].mxu0 %v2020
    %v2055 = vpop.f32.mrb[0].mxu0
    %v2056 = vadd.f32 0.0, %v2055
    %v2057 = vpop.f32.mrb[0].mxu0
    %v2058 = vadd.f32 0.0, %v2057
    %v2059 = vpop.f32.mrb[0].mxu0
    %v2060 = vpop.f32.mrb[0].mxu0
    %2061 = vdwg.mxu0
    %2062 = vmatprep.subr.bf16.mxu0 %v1048
    %2063 = vmatpush1.bf16.msra.mxu0 %v1047
    %2064 = vmatprep.subr.bf16.mxu0 %v1052
    %2065 = vmatpush1.bf16.msra.mxu0 %v1051
    %2066 = vmatprep.subr.bf16.mxu0 %v1056
    %2067 = vmatpush1.bf16.msra.mxu0 %v1055
    %2068 = vmatprep.subr.bf16.mxu0 %v1060
    %2069 = vmatpush1.bf16.msra.mxu0 %v1059
    %2070 = vmatprep.subr.bf16.mxu0 %v1064
    %2071 = vmatpush1.bf16.msra.mxu0 %v1063
    %2072 = vmatprep.subr.bf16.mxu0 %v1068
    %2073 = vmatpush1.bf16.msra.mxu0 %v1067
    %2074 = vmatprep.subr.bf16.mxu0 %v1072
    %2075 = vmatpush1.bf16.msra.mxu0 %v1071
    %2076 = vmatprep.subr.bf16.mxu0 %v1076
    %2077 = vmatpush1.bf16.msra.mxu0 %v1075
    %2078 = vmatprep.subr.bf16.mxu0 0
    %2079 = vmatpush1.bf16.msra.mxu0 0
    %2080 = vmatprep.subr.bf16.mxu0 0
    %2081 = vmatpush1.bf16.msra.mxu0 0
    %2082 = vmatprep.subr.bf16.mxu0 0
    %2083 = vmatpush1.bf16.msra.mxu0 0
    %2084 = vmatprep.subr.bf16.mxu0 0
    %2085 = vmatpush1.bf16.msra.mxu0 0
    %2086 = vmatprep.subr.bf16.mxu0 0
    %2087 = vmatpush1.bf16.msra.mxu0 0
    %2088 = vmatprep.subr.bf16.mxu0 0
    %2089 = vmatpush1.bf16.msra.mxu0 0
    %2090 = vmatprep.subr.bf16.mxu0 0
    %2091 = vmatpush1.bf16.msra.mxu0 0
    %2092 = vmatprep.subr.bf16.mxu0 0
    %2093 = vmatpush1.bf16.msra.mxu0 0
    %2094 = vmatprep.mubr.bf16.mxu0 0
    %2095 = vmatmul.mubr.bf16.gmra.mrb[0].mxu0 %v2020
    %v2096 = vpop.f32.mrb[0].mxu0
    %v2097 = vadd.f32 0.0, %v2096
    %v2098 = vpop.f32.mrb[0].mxu0
    %v2099 = vadd.f32 0.0, %v2098
    %v2100 = vpop.f32.mrb[0].mxu0
    %v2101 = vpop.f32.mrb[0].mxu0
    %2102 = vdwg.mxu0
    %v2103 = vadd.f32 %v1973, %v2056
    %v2104 = vadd.f32 %v1975, %v2058
    %v2105 = vadd.f32 %v2014, %v2097
    %v2106 = vadd.f32 %v2016, %v2099
    %v2107 = vxor.u32 %v2103, 2147483648
    %v2108 = vmul.f32 %v2107, 1.442695
    %v2109 = vpow.pop %v2108
    %v2110 = vadd.f32 %v2109, 1.0
    %v2111 = vrcp.pop %v2110
    %v2112 = vmul.f32 1.0, %v2111
    %v2113 = vxor.u32 %v2104, 2147483648
    %v2114 = vmul.f32 %v2113, 1.442695
    %v2115 = vpow.pop %v2114
    %v2116 = vadd.f32 %v2115, 1.0
    %v2117 = vrcp.pop %v2116
    %v2118 = vmul.f32 1.0, %v2117
    %v2119 = vtanh.pop %v2105
    %v2120 = vxor.u32 %v2106, 2147483648
    %v2121 = vmul.f32 %v2120, 1.442695
    %v2122 = vpow.pop %v2121
    %v2123 = vadd.f32 %v2122, 1.0
    %v2124 = vrcp.pop %v2123
    %v2125 = vmul.f32 1.0, %v2124
    %v2126 = vmul.f32 %v2118, %v1824
    %v2127 = vmul.f32 %v2112, %v2119
    %v2128 = vadd.f32 %v2126, %v2127
    %v2129 = vtanh.pop %v2128
    %v2130 = vmul.f32 %v2125, %v2129
    %2131 = vmatprep.subr.bf16.mxu0 %v447
    %2132 = vmatpush1.bf16.msra.mxu0 %v446
    %2133 = vmatprep.subr.bf16.mxu0 %v451
    %2134 = vmatpush1.bf16.msra.mxu0 %v450
    %2135 = vmatprep.subr.bf16.mxu0 %v455
    %2136 = vmatpush1.bf16.msra.mxu0 %v454
    %2137 = vmatprep.subr.bf16.mxu0 %v459
    %2138 = vmatpush1.bf16.msra.mxu0 %v458
    %2139 = vmatprep.subr.bf16.mxu0 %v463
    %2140 = vmatpush1.bf16.msra.mxu0 %v462
    %2141 = vmatprep.subr.bf16.mxu0 %v467
    %2142 = vmatpush1.bf16.msra.mxu0 %v466
    %2143 = vmatprep.subr.bf16.mxu0 %v471
    %2144 = vmatpush1.bf16.msra.mxu0 %v470
    %2145 = vmatprep.subr.bf16.mxu0 %v475
    %2146 = vmatpush1.bf16.msra.mxu0 %v474
    %2147 = vmatprep.subr.bf16.mxu0 0
    %2148 = vmatpush1.bf16.msra.mxu0 0
    %2149 = vmatprep.subr.bf16.mxu0 0
    %2150 = vmatpush1.bf16.msra.mxu0 0
    %2151 = vmatprep.subr.bf16.mxu0 0
    %2152 = vmatpush1.bf16.msra.mxu0 0
    %2153 = vmatprep.subr.bf16.mxu0 0
    %2154 = vmatpush1.bf16.msra.mxu0 0
    %2155 = vmatprep.subr.bf16.mxu0 0
    %2156 = vmatpush1.bf16.msra.mxu0 0
    %2157 = vmatprep.subr.bf16.mxu0 0
    %2158 = vmatpush1.bf16.msra.mxu0 0
    %2159 = vmatprep.subr.bf16.mxu0 0
    %2160 = vmatpush1.bf16.msra.mxu0 0
    %2161 = vmatprep.subr.bf16.mxu0 0
    %2162 = vmatpush1.bf16.msra.mxu0 0
    %2163 = vmatprep.mubr.bf16.mxu0 0
    %2164 = vmatmul.mubr.bf16.gmra.mrb[0].mxu0 %v1937
    %v2165 = vpop.f32.mrb[0].mxu0
    %v2166 = vadd.f32 0.0, %v2165
    %v2167 = vpop.f32.mrb[0].mxu0
    %v2168 = vadd.f32 0.0, %v2167
    %v2169 = vpop.f32.mrb[0].mxu0
    %v2170 = vpop.f32.mrb[0].mxu0
    %2171 = vdwg.mxu0
    %2172 = vmatprep.subr.bf16.mxu0 %v449
    %2173 = vmatpush1.bf16.msra.mxu0 %v448
    %2174 = vmatprep.subr.bf16.mxu0 %v453
    %2175 = vmatpush1.bf16.msra.mxu0 %v452
    %2176 = vmatprep.subr.bf16.mxu0 %v457
    %2177 = vmatpush1.bf16.msra.mxu0 %v456
    %2178 = vmatprep.subr.bf16.mxu0 %v461
    %2179 = vmatpush1.bf16.msra.mxu0 %v460
    %2180 = vmatprep.subr.bf16.mxu0 %v465
    %2181 = vmatpush1.bf16.msra.mxu0 %v464
    %2182 = vmatprep.subr.bf16.mxu0 %v469
    %2183 = vmatpush1.bf16.msra.mxu0 %v468
    %2184 = vmatprep.subr.bf16.mxu0 %v473
    %2185 = vmatpush1.bf16.msra.mxu0 %v472
    %2186 = vmatprep.subr.bf16.mxu0 %v477
    %2187 = vmatpush1.bf16.msra.mxu0 %v476
    %2188 = vmatprep.subr.bf16.mxu0 0
    %2189 = vmatpush1.bf16.msra.mxu0 0
    %2190 = vmatprep.subr.bf16.mxu0 0
    %2191 = vmatpush1.bf16.msra.mxu0 0
    %2192 = vmatprep.subr.bf16.mxu0 0
    %2193 = vmatpush1.bf16.msra.mxu0 0
    %2194 = vmatprep.subr.bf16.mxu0 0
    %2195 = vmatpush1.bf16.msra.mxu0 0
    %2196 = vmatprep.subr.bf16.mxu0 0
    %2197 = vmatpush1.bf16.msra.mxu0 0
    %2198 = vmatprep.subr.bf16.mxu0 0
    %2199 = vmatpush1.bf16.msra.mxu0 0
    %2200 = vmatprep.subr.bf16.mxu0 0
    %2201 = vmatpush1.bf16.msra.mxu0 0
    %2202 = vmatprep.subr.bf16.mxu0 0
    %2203 = vmatpush1.bf16.msra.mxu0 0
    %2204 = vmatprep.mubr.bf16.mxu0 0
    %2205 = vmatmul.mubr.bf16.gmra.mrb[0].mxu0 %v1937
    %v2206 = vpop.f32.mrb[0].mxu0
    %v2207 = vadd.f32 0.0, %v2206
    %v2208 = vpop.f32.mrb[0].mxu0
    %v2209 = vadd.f32 0.0, %v2208
    %v2210 = vpop.f32.mrb[0].mxu0
    %v2211 = vpop.f32.mrb[0].mxu0
    %2212 = vdwg.mxu0
    %v2213 = vadd.f32 %v227, %v2166
    %v2214 = vadd.f32 %v229, %v2168
    %v2215 = vadd.f32 %v300, %v2207
    %v2216 = vadd.f32 %v302, %v2209
    %v2217 = vxor.u32 %v2213, 2147483648
    %v2218 = vmul.f32 %v2217, 1.442695
    %v2219 = vpow.pop %v2218
    %v2220 = vadd.f32 %v2219, 1.0
    %v2221 = vrcp.pop %v2220
    %v2222 = vmul.f32 1.0, %v2221
    %v2223 = vxor.u32 %v2214, 2147483648
    %v2224 = vmul.f32 %v2223, 1.442695
    %v2225 = vpow.pop %v2224
    %v2226 = vadd.f32 %v2225, 1.0
    %v2227 = vrcp.pop %v2226
    %v2228 = vmul.f32 1.0, %v2227
    %v2229 = vtanh.pop %v2215
    %v2230 = vxor.u32 %v2216, 2147483648
    %v2231 = vmul.f32 %v2230, 1.442695
    %v2232 = vpow.pop %v2231
    %v2233 = vadd.f32 %v2232, 1.0
    %v2234 = vrcp.pop %v2233
    %v2235 = vmul.f32 1.0, %v2234
    %v2236 = vmul.f32 %v2228, %v1934
    %v2237 = vmul.f32 %v2222, %v2229
    %v2238 = vadd.f32 %v2236, %v2237
    %v2239 = vtanh.pop %v2238
    %v2240 = vmul.f32 %v2235, %v2239
    %v2241 = vpack.c.bf16 %v2240, %v2240
    %2242 = vmatprep.subr.bf16.mxu0 %v772
    %2243 = vmatpush1.bf16.msra.mxu0 %v771
    %2244 = vmatprep.subr.bf16.mxu0 %v776
    %2245 = vmatpush1.bf16.msra.mxu0 %v775
    %2246 = vmatprep.subr.bf16.mxu0 %v780
    %2247 = vmatpush1.bf16.msra.mxu0 %v779
    %2248 = vmatprep.subr.bf16.mxu0 %v784
    %2249 = vmatpush1.bf16.msra.mxu0 %v783
    %2250 = vmatprep.subr.bf16.mxu0 %v788
    %2251 = vmatpush1.bf16.msra.mxu0 %v787
    %2252 = vmatprep.subr.bf16.mxu0 %v792
    %2253 = vmatpush1.bf16.msra.mxu0 %v791
    %2254 = vmatprep.subr.bf16.mxu0 %v796
    %2255 = vmatpush1.bf16.msra.mxu0 %v795
    %2256 = vmatprep.subr.bf16.mxu0 %v800
    %2257 = vmatpush1.bf16.msra.mxu0 %v799
    %2258 = vmatprep.subr.bf16.mxu0 0
    %2259 = vmatpush1.bf16.msra.mxu0 0
    %2260 = vmatprep.subr.bf16.mxu0 0
    %2261 = vmatpush1.bf16.msra.mxu0 0
    %2262 = vmatprep.subr.bf16.mxu0 0
    %2263 = vmatpush1.bf16.msra.mxu0 0
    %2264 = vmatprep.subr.bf16.mxu0 0
    %2265 = vmatpush1.bf16.msra.mxu0 0
    %2266 = vmatprep.subr.bf16.mxu0 0
    %2267 = vmatpush1.bf16.msra.mxu0 0
    %2268 = vmatprep.subr.bf16.mxu0 0
    %2269 = vmatpush1.bf16.msra.mxu0 0
    %2270 = vmatprep.subr.bf16.mxu0 0
    %2271 = vmatpush1.bf16.msra.mxu0 0
    %2272 = vmatprep.subr.bf16.mxu0 0
    %2273 = vmatpush1.bf16.msra.mxu0 0
    %2274 = vmatprep.mubr.bf16.mxu0 0
    %2275 = vmatmul.mubr.bf16.gmra.mrb[0].mxu0 %v2241
    %v2276 = vpop.f32.mrb[0].mxu0
    %v2277 = vadd.f32 %v658, %v2276
    %v2278 = vpop.f32.mrb[0].mxu0
    %v2279 = vadd.f32 %v662, %v2278
    %v2280 = vpop.f32.mrb[0].mxu0
    %v2281 = vpop.f32.mrb[0].mxu0
    %2282 = vdwg.mxu0
    %2283 = vmatprep.subr.bf16.mxu0 %v774
    %2284 = vmatpush1.bf16.msra.mxu0 %v773
    %2285 = vmatprep.subr.bf16.mxu0 %v778
    %2286 = vmatpush1.bf16.msra.mxu0 %v777
    %2287 = vmatprep.subr.bf16.mxu0 %v782
    %2288 = vmatpush1.bf16.msra.mxu0 %v781
    %2289 = vmatprep.subr.bf16.mxu0 %v786
    %2290 = vmatpush1.bf16.msra.mxu0 %v785
    %2291 = vmatprep.subr.bf16.mxu0 %v790
    %2292 = vmatpush1.bf16.msra.mxu0 %v789
    %2293 = vmatprep.subr.bf16.mxu0 %v794
    %2294 = vmatpush1.bf16.msra.mxu0 %v793
    %2295 = vmatprep.subr.bf16.mxu0 %v798
    %2296 = vmatpush1.bf16.msra.mxu0 %v797
    %2297 = vmatprep.subr.bf16.mxu0 %v802
    %2298 = vmatpush1.bf16.msra.mxu0 %v801
    %2299 = vmatprep.subr.bf16.mxu0 0
    %2300 = vmatpush1.bf16.msra.mxu0 0
    %2301 = vmatprep.subr.bf16.mxu0 0
    %2302 = vmatpush1.bf16.msra.mxu0 0
    %2303 = vmatprep.subr.bf16.mxu0 0
    %2304 = vmatpush1.bf16.msra.mxu0 0
    %2305 = vmatprep.subr.bf16.mxu0 0
    %2306 = vmatpush1.bf16.msra.mxu0 0
    %2307 = vmatprep.subr.bf16.mxu0 0
    %2308 = vmatpush1.bf16.msra.mxu0 0
    %2309 = vmatprep.subr.bf16.mxu0 0
    %2310 = vmatpush1.bf16.msra.mxu0 0
    %2311 = vmatprep.subr.bf16.mxu0 0
    %2312 = vmatpush1.bf16.msra.mxu0 0
    %2313 = vmatprep.subr.bf16.mxu0 0
    %2314 = vmatpush1.bf16.msra.mxu0 0
    %2315 = vmatprep.mubr.bf16.mxu0 0
    %2316 = vmatmul.mubr.bf16.gmra.mrb[0].mxu0 %v2241
    %v2317 = vpop.f32.mrb[0].mxu0
    %v2318 = vadd.f32 %v666, %v2317
    %v2319 = vpop.f32.mrb[0].mxu0
    %v2320 = vadd.f32 %v670, %v2319
    %v2321 = vpop.f32.mrb[0].mxu0
    %v2322 = vpop.f32.mrb[0].mxu0
    %2323 = vdwg.mxu0
    %v2324 = vpack.c.bf16 %v2130, %v2130
    %2325 = vmatprep.subr.bf16.mxu0 %v1046
    %2326 = vmatpush1.bf16.msra.mxu0 %v1045
    %2327 = vmatprep.subr.bf16.mxu0 %v1050
    %2328 = vmatpush1.bf16.msra.mxu0 %v1049
    %2329 = vmatprep.subr.bf16.mxu0 %v1054
    %2330 = vmatpush1.bf16.msra.mxu0 %v1053
    %2331 = vmatprep.subr.bf16.mxu0 %v1058
    %2332 = vmatpush1.bf16.msra.mxu0 %v1057
    %2333 = vmatprep.subr.bf16.mxu0 %v1062
    %2334 = vmatpush1.bf16.msra.mxu0 %v1061
    %2335 = vmatprep.subr.bf16.mxu0 %v1066
    %2336 = vmatpush1.bf16.msra.mxu0 %v1065
    %2337 = vmatprep.subr.bf16.mxu0 %v1070
    %2338 = vmatpush1.bf16.msra.mxu0 %v1069
    %2339 = vmatprep.subr.bf16.mxu0 %v1074
    %2340 = vmatpush1.bf16.msra.mxu0 %v1073
    %2341 = vmatprep.subr.bf16.mxu0 0
    %2342 = vmatpush1.bf16.msra.mxu0 0
    %2343 = vmatprep.subr.bf16.mxu0 0
    %2344 = vmatpush1.bf16.msra.mxu0 0
    %2345 = vmatprep.subr.bf16.mxu0 0
    %2346 = vmatpush1.bf16.msra.mxu0 0
    %2347 = vmatprep.subr.bf16.mxu0 0
    %2348 = vmatpush1.bf16.msra.mxu0 0
    %2349 = vmatprep.subr.bf16.mxu0 0
    %2350 = vmatpush1.bf16.msra.mxu0 0
    %2351 = vmatprep.subr.bf16.mxu0 0
    %2352 = vmatpush1.bf16.msra.mxu0 0
    %2353 = vmatprep.subr.bf16.mxu0 0
    %2354 = vmatpush1.bf16.msra.mxu0 0
    %2355 = vmatprep.subr.bf16.mxu0 0
    %2356 = vmatpush1.bf16.msra.mxu0 0
    %2357 = vmatprep.mubr.bf16.mxu0 0
    %2358 = vmatmul.mubr.bf16.gmra.mrb[0].mxu0 %v2324
    %v2359 = vpop.f32.mrb[0].mxu0
    %v2360 = vadd.f32 0.0, %v2359
    %v2361 = vpop.f32.mrb[0].mxu0
    %v2362 = vadd.f32 0.0, %v2361
    %v2363 = vpop.f32.mrb[0].mxu0
    %v2364 = vpop.f32.mrb[0].mxu0
    %2365 = vdwg.mxu0
    %2366 = vmatprep.subr.bf16.mxu0 %v1048
    %2367 = vmatpush1.bf16.msra.mxu0 %v1047
    %2368 = vmatprep.subr.bf16.mxu0 %v1052
    %2369 = vmatpush1.bf16.msra.mxu0 %v1051
    %2370 = vmatprep.subr.bf16.mxu0 %v1056
    %2371 = vmatpush1.bf16.msra.mxu0 %v1055
    %2372 = vmatprep.subr.bf16.mxu0 %v1060
    %2373 = vmatpush1.bf16.msra.mxu0 %v1059
    %2374 = vmatprep.subr.bf16.mxu0 %v1064
    %2375 = vmatpush1.bf16.msra.mxu0 %v1063
    %2376 = vmatprep.subr.bf16.mxu0 %v1068
    %2377 = vmatpush1.bf16.msra.mxu0 %v1067
    %2378 = vmatprep.subr.bf16.mxu0 %v1072
    %2379 = vmatpush1.bf16.msra.mxu0 %v1071
    %2380 = vmatprep.subr.bf16.mxu0 %v1076
    %2381 = vmatpush1.bf16.msra.mxu0 %v1075
    %2382 = vmatprep.subr.bf16.mxu0 0
    %2383 = vmatpush1.bf16.msra.mxu0 0
    %2384 = vmatprep.subr.bf16.mxu0 0
    %2385 = vmatpush1.bf16.msra.mxu0 0
    %2386 = vmatprep.subr.bf16.mxu0 0
    %2387 = vmatpush1.bf16.msra.mxu0 0
    %2388 = vmatprep.subr.bf16.mxu0 0
    %2389 = vmatpush1.bf16.msra.mxu0 0
    %2390 = vmatprep.subr.bf16.mxu0 0
    %2391 = vmatpush1.bf16.msra.mxu0 0
    %2392 = vmatprep.subr.bf16.mxu0 0
    %2393 = vmatpush1.bf16.msra.mxu0 0
    %2394 = vmatprep.subr.bf16.mxu0 0
    %2395 = vmatpush1.bf16.msra.mxu0 0
    %2396 = vmatprep.subr.bf16.mxu0 0
    %2397 = vmatpush1.bf16.msra.mxu0 0
    %2398 = vmatprep.mubr.bf16.mxu0 0
    %2399 = vmatmul.mubr.bf16.gmra.mrb[0].mxu0 %v2324
    %v2400 = vpop.f32.mrb[0].mxu0
    %v2401 = vadd.f32 0.0, %v2400
    %v2402 = vpop.f32.mrb[0].mxu0
    %v2403 = vadd.f32 0.0, %v2402
    %v2404 = vpop.f32.mrb[0].mxu0
    %v2405 = vpop.f32.mrb[0].mxu0
    %2406 = vdwg.mxu0
    %v2407 = vadd.f32 %v2277, %v2360
    %v2408 = vadd.f32 %v2279, %v2362
    %v2409 = vadd.f32 %v2318, %v2401
    %v2410 = vadd.f32 %v2320, %v2403
    %v2411 = vxor.u32 %v2407, 2147483648
    %v2412 = vmul.f32 %v2411, 1.442695
    %v2413 = vpow.pop %v2412
    %v2414 = vadd.f32 %v2413, 1.0
    %v2415 = vrcp.pop %v2414
    %v2416 = vmul.f32 1.0, %v2415
    %v2417 = vxor.u32 %v2408, 2147483648
    %v2418 = vmul.f32 %v2417, 1.442695
    %v2419 = vpow.pop %v2418
    %v2420 = vadd.f32 %v2419, 1.0
    %v2421 = vrcp.pop %v2420
    %v2422 = vmul.f32 1.0, %v2421
    %v2423 = vtanh.pop %v2409
    %v2424 = vxor.u32 %v2410, 2147483648
    %v2425 = vmul.f32 %v2424, 1.442695
    %v2426 = vpow.pop %v2425
    %v2427 = vadd.f32 %v2426, 1.0
    %v2428 = vrcp.pop %v2427
    %v2429 = vmul.f32 1.0, %v2428
    %v2430 = vmul.f32 %v2422, %v2128
    %v2431 = vmul.f32 %v2416, %v2423
    %v2432 = vadd.f32 %v2430, %v2431
    %v2433 = vtanh.pop %v2432
    %v2434 = vmul.f32 %v2429, %v2433
    %2435 = vmatprep.subr.bf16.mxu0 %v447
    %2436 = vmatpush1.bf16.msra.mxu0 %v446
    %2437 = vmatprep.subr.bf16.mxu0 %v451
    %2438 = vmatpush1.bf16.msra.mxu0 %v450
    %2439 = vmatprep.subr.bf16.mxu0 %v455
    %2440 = vmatpush1.bf16.msra.mxu0 %v454
    %2441 = vmatprep.subr.bf16.mxu0 %v459
    %2442 = vmatpush1.bf16.msra.mxu0 %v458
    %2443 = vmatprep.subr.bf16.mxu0 %v463
    %2444 = vmatpush1.bf16.msra.mxu0 %v462
    %2445 = vmatprep.subr.bf16.mxu0 %v467
    %2446 = vmatpush1.bf16.msra.mxu0 %v466
    %2447 = vmatprep.subr.bf16.mxu0 %v471
    %2448 = vmatpush1.bf16.msra.mxu0 %v470
    %2449 = vmatprep.subr.bf16.mxu0 %v475
    %2450 = vmatpush1.bf16.msra.mxu0 %v474
    %2451 = vmatprep.subr.bf16.mxu0 0
    %2452 = vmatpush1.bf16.msra.mxu0 0
    %2453 = vmatprep.subr.bf16.mxu0 0
    %2454 = vmatpush1.bf16.msra.mxu0 0
    %2455 = vmatprep.subr.bf16.mxu0 0
    %2456 = vmatpush1.bf16.msra.mxu0 0
    %2457 = vmatprep.subr.bf16.mxu0 0
    %2458 = vmatpush1.bf16.msra.mxu0 0
    %2459 = vmatprep.subr.bf16.mxu0 0
    %2460 = vmatpush1.bf16.msra.mxu0 0
    %2461 = vmatprep.subr.bf16.mxu0 0
    %2462 = vmatpush1.bf16.msra.mxu0 0
    %2463 = vmatprep.subr.bf16.mxu0 0
    %2464 = vmatpush1.bf16.msra.mxu0 0
    %2465 = vmatprep.subr.bf16.mxu0 0
    %2466 = vmatpush1.bf16.msra.mxu0 0
    %2467 = vmatprep.mubr.bf16.mxu0 0
    %2468 = vmatmul.mubr.bf16.gmra.mrb[0].mxu0 %v2241
    %v2469 = vpop.f32.mrb[0].mxu0
    %v2470 = vadd.f32 0.0, %v2469
    %v2471 = vpop.f32.mrb[0].mxu0
    %v2472 = vadd.f32 0.0, %v2471
    %v2473 = vpop.f32.mrb[0].mxu0
    %v2474 = vpop.f32.mrb[0].mxu0
    %2475 = vdwg.mxu0
    %2476 = vmatprep.subr.bf16.mxu0 %v449
    %2477 = vmatpush1.bf16.msra.mxu0 %v448
    %2478 = vmatprep.subr.bf16.mxu0 %v453
    %2479 = vmatpush1.bf16.msra.mxu0 %v452
    %2480 = vmatprep.subr.bf16.mxu0 %v457
    %2481 = vmatpush1.bf16.msra.mxu0 %v456
    %2482 = vmatprep.subr.bf16.mxu0 %v461
    %2483 = vmatpush1.bf16.msra.mxu0 %v460
    %2484 = vmatprep.subr.bf16.mxu0 %v465
    %2485 = vmatpush1.bf16.msra.mxu0 %v464
    %2486 = vmatprep.subr.bf16.mxu0 %v469
    %2487 = vmatpush1.bf16.msra.mxu0 %v468
    %2488 = vmatprep.subr.bf16.mxu0 %v473
    %2489 = vmatpush1.bf16.msra.mxu0 %v472
    %2490 = vmatprep.subr.bf16.mxu0 %v477
    %2491 = vmatpush1.bf16.msra.mxu0 %v476
    %2492 = vmatprep.subr.bf16.mxu0 0
    %2493 = vmatpush1.bf16.msra.mxu0 0
    %2494 = vmatprep.subr.bf16.mxu0 0
    %2495 = vmatpush1.bf16.msra.mxu0 0
    %2496 = vmatprep.subr.bf16.mxu0 0
    %2497 = vmatpush1.bf16.msra.mxu0 0
    %2498 = vmatprep.subr.bf16.mxu0 0
    %2499 = vmatpush1.bf16.msra.mxu0 0
    %2500 = vmatprep.subr.bf16.mxu0 0
    %2501 = vmatpush1.bf16.msra.mxu0 0
    %2502 = vmatprep.subr.bf16.mxu0 0
    %2503 = vmatpush1.bf16.msra.mxu0 0
    %2504 = vmatprep.subr.bf16.mxu0 0
    %2505 = vmatpush1.bf16.msra.mxu0 0
    %2506 = vmatprep.subr.bf16.mxu0 0
    %2507 = vmatpush1.bf16.msra.mxu0 0
    %2508 = vmatprep.mubr.bf16.mxu0 0
    %2509 = vmatmul.mubr.bf16.gmra.mrb[0].mxu0 %v2241
    %v2510 = vpop.f32.mrb[0].mxu0
    %v2511 = vadd.f32 0.0, %v2510
    %v2512 = vpop.f32.mrb[0].mxu0
    %v2513 = vadd.f32 0.0, %v2512
    %v2514 = vpop.f32.mrb[0].mxu0
    %v2515 = vpop.f32.mrb[0].mxu0
    %2516 = vdwg.mxu0
    %v2517 = vadd.f32 %v231, %v2470
    %v2518 = vadd.f32 %v233, %v2472
    %v2519 = vadd.f32 %v304, %v2511
    %v2520 = vadd.f32 %v306, %v2513
    %v2521 = vxor.u32 %v2517, 2147483648
    %v2522 = vmul.f32 %v2521, 1.442695
    %v2523 = vpow.pop %v2522
    %v2524 = vadd.f32 %v2523, 1.0
    %v2525 = vrcp.pop %v2524
    %v2526 = vmul.f32 1.0, %v2525
    %v2527 = vxor.u32 %v2518, 2147483648
    %v2528 = vmul.f32 %v2527, 1.442695
    %v2529 = vpow.pop %v2528
    %v2530 = vadd.f32 %v2529, 1.0
    %v2531 = vrcp.pop %v2530
    %v2532 = vmul.f32 1.0, %v2531
    %v2533 = vtanh.pop %v2519
    %v2534 = vxor.u32 %v2520, 2147483648
    %v2535 = vmul.f32 %v2534, 1.442695
    %v2536 = vpow.pop %v2535
    %v2537 = vadd.f32 %v2536, 1.0
    %v2538 = vrcp.pop %v2537
    %v2539 = vmul.f32 1.0, %v2538
    %v2540 = vmul.f32 %v2532, %v2238
    %v2541 = vmul.f32 %v2526, %v2533
    %v2542 = vadd.f32 %v2540, %v2541
    %v2543 = vtanh.pop %v2542
    %v2544 = vmul.f32 %v2539, %v2543
    %v2545 = vpack.c.bf16 %v2544, %v2544
    %2546 = vmatprep.subr.bf16.mxu0 %v772
    %2547 = vmatpush1.bf16.msra.mxu0 %v771
    %2548 = vmatprep.subr.bf16.mxu0 %v776
    %2549 = vmatpush1.bf16.msra.mxu0 %v775
    %2550 = vmatprep.subr.bf16.mxu0 %v780
    %2551 = vmatpush1.bf16.msra.mxu0 %v779
    %2552 = vmatprep.subr.bf16.mxu0 %v784
    %2553 = vmatpush1.bf16.msra.mxu0 %v783
    %2554 = vmatprep.subr.bf16.mxu0 %v788
    %2555 = vmatpush1.bf16.msra.mxu0 %v787
    %2556 = vmatprep.subr.bf16.mxu0 %v792
    %2557 = vmatpush1.bf16.msra.mxu0 %v791
    %2558 = vmatprep.subr.bf16.mxu0 %v796
    %2559 = vmatpush1.bf16.msra.mxu0 %v795
    %2560 = vmatprep.subr.bf16.mxu0 %v800
    %2561 = vmatpush1.bf16.msra.mxu0 %v799
    %2562 = vmatprep.subr.bf16.mxu0 0
    %2563 = vmatpush1.bf16.msra.mxu0 0
    %2564 = vmatprep.subr.bf16.mxu0 0
    %2565 = vmatpush1.bf16.msra.mxu0 0
    %2566 = vmatprep.subr.bf16.mxu0 0
    %2567 = vmatpush1.bf16.msra.mxu0 0
    %2568 = vmatprep.subr.bf16.mxu0 0
    %2569 = vmatpush1.bf16.msra.mxu0 0
    %2570 = vmatprep.subr.bf16.mxu0 0
    %2571 = vmatpush1.bf16.msra.mxu0 0
    %2572 = vmatprep.subr.bf16.mxu0 0
    %2573 = vmatpush1.bf16.msra.mxu0 0
    %2574 = vmatprep.subr.bf16.mxu0 0
    %2575 = vmatpush1.bf16.msra.mxu0 0
    %2576 = vmatprep.subr.bf16.mxu0 0
    %2577 = vmatpush1.bf16.msra.mxu0 0
    %2578 = vmatprep.mubr.bf16.mxu0 0
    %2579 = vmatmul.mubr.bf16.gmra.mrb[0].mxu0 %v2545
    %v2580 = vpop.f32.mrb[0].mxu0
    %v2581 = vadd.f32 %v658, %v2580
    %v2582 = vpop.f32.mrb[0].mxu0
    %v2583 = vadd.f32 %v662, %v2582
    %v2584 = vpop.f32.mrb[0].mxu0
    %v2585 = vpop.f32.mrb[0].mxu0
    %2586 = vdwg.mxu0
    %2587 = vmatprep.subr.bf16.mxu0 %v774
    %2588 = vmatpush1.bf16.msra.mxu0 %v773
    %2589 = vmatprep.subr.bf16.mxu0 %v778
    %2590 = vmatpush1.bf16.msra.mxu0 %v777
    %2591 = vmatprep.subr.bf16.mxu0 %v782
    %2592 = vmatpush1.bf16.msra.mxu0 %v781
    %2593 = vmatprep.subr.bf16.mxu0 %v786
    %2594 = vmatpush1.bf16.msra.mxu0 %v785
    %2595 = vmatprep.subr.bf16.mxu0 %v790
    %2596 = vmatpush1.bf16.msra.mxu0 %v789
    %2597 = vmatprep.subr.bf16.mxu0 %v794
    %2598 = vmatpush1.bf16.msra.mxu0 %v793
    %2599 = vmatprep.subr.bf16.mxu0 %v798
    %2600 = vmatpush1.bf16.msra.mxu0 %v797
    %2601 = vmatprep.subr.bf16.mxu0 %v802
    %2602 = vmatpush1.bf16.msra.mxu0 %v801
    %2603 = vmatprep.subr.bf16.mxu0 0
    %2604 = vmatpush1.bf16.msra.mxu0 0
    %2605 = vmatprep.subr.bf16.mxu0 0
    %2606 = vmatpush1.bf16.msra.mxu0 0
    %2607 = vmatprep.subr.bf16.mxu0 0
    %2608 = vmatpush1.bf16.msra.mxu0 0
    %2609 = vmatprep.subr.bf16.mxu0 0
    %2610 = vmatpush1.bf16.msra.mxu0 0
    %2611 = vmatprep.subr.bf16.mxu0 0
    %2612 = vmatpush1.bf16.msra.mxu0 0
    %2613 = vmatprep.subr.bf16.mxu0 0
    %2614 = vmatpush1.bf16.msra.mxu0 0
    %2615 = vmatprep.subr.bf16.mxu0 0
    %2616 = vmatpush1.bf16.msra.mxu0 0
    %2617 = vmatprep.subr.bf16.mxu0 0
    %2618 = vmatpush1.bf16.msra.mxu0 0
    %2619 = vmatprep.mubr.bf16.mxu0 0
    %2620 = vmatmul.mubr.bf16.gmra.mrb[0].mxu0 %v2545
    %v2621 = vpop.f32.mrb[0].mxu0
    %v2622 = vadd.f32 %v666, %v2621
    %v2623 = vpop.f32.mrb[0].mxu0
    %v2624 = vadd.f32 %v670, %v2623
    %v2625 = vpop.f32.mrb[0].mxu0
    %v2626 = vpop.f32.mrb[0].mxu0
    %2627 = vdwg.mxu0
    %v2628 = vpack.c.bf16 %v2434, %v2434
    %2629 = vmatprep.subr.bf16.mxu0 %v1046
    %2630 = vmatpush1.bf16.msra.mxu0 %v1045
    %2631 = vmatprep.subr.bf16.mxu0 %v1050
    %2632 = vmatpush1.bf16.msra.mxu0 %v1049
    %2633 = vmatprep.subr.bf16.mxu0 %v1054
    %2634 = vmatpush1.bf16.msra.mxu0 %v1053
    %2635 = vmatprep.subr.bf16.mxu0 %v1058
    %2636 = vmatpush1.bf16.msra.mxu0 %v1057
    %2637 = vmatprep.subr.bf16.mxu0 %v1062
    %2638 = vmatpush1.bf16.msra.mxu0 %v1061
    %2639 = vmatprep.subr.bf16.mxu0 %v1066
    %2640 = vmatpush1.bf16.msra.mxu0 %v1065
    %2641 = vmatprep.subr.bf16.mxu0 %v1070
    %2642 = vmatpush1.bf16.msra.mxu0 %v1069
    %2643 = vmatprep.subr.bf16.mxu0 %v1074
    %2644 = vmatpush1.bf16.msra.mxu0 %v1073
    %2645 = vmatprep.subr.bf16.mxu0 0
    %2646 = vmatpush1.bf16.msra.mxu0 0
    %2647 = vmatprep.subr.bf16.mxu0 0
    %2648 = vmatpush1.bf16.msra.mxu0 0
    %2649 = vmatprep.subr.bf16.mxu0 0
    %2650 = vmatpush1.bf16.msra.mxu0 0
    %2651 = vmatprep.subr.bf16.mxu0 0
    %2652 = vmatpush1.bf16.msra.mxu0 0
    %2653 = vmatprep.subr.bf16.mxu0 0
    %2654 = vmatpush1.bf16.msra.mxu0 0
    %2655 = vmatprep.subr.bf16.mxu0 0
    %2656 = vmatpush1.bf16.msra.mxu0 0
    %2657 = vmatprep.subr.bf16.mxu0 0
    %2658 = vmatpush1.bf16.msra.mxu0 0
    %2659 = vmatprep.subr.bf16.mxu0 0
    %2660 = vmatpush1.bf16.msra.mxu0 0
    %2661 = vmatprep.mubr.bf16.mxu0 0
    %2662 = vmatmul.mubr.bf16.gmra.mrb[0].mxu0 %v2628
    %v2663 = vpop.f32.mrb[0].mxu0
    %v2664 = vadd.f32 0.0, %v2663
    %v2665 = vpop.f32.mrb[0].mxu0
    %v2666 = vadd.f32 0.0, %v2665
    %v2667 = vpop.f32.mrb[0].mxu0
    %v2668 = vpop.f32.mrb[0].mxu0
    %2669 = vdwg.mxu0
    %2670 = vmatprep.subr.bf16.mxu0 %v1048
    %2671 = vmatpush1.bf16.msra.mxu0 %v1047
    %2672 = vmatprep.subr.bf16.mxu0 %v1052
    %2673 = vmatpush1.bf16.msra.mxu0 %v1051
    %2674 = vmatprep.subr.bf16.mxu0 %v1056
    %2675 = vmatpush1.bf16.msra.mxu0 %v1055
    %2676 = vmatprep.subr.bf16.mxu0 %v1060
    %2677 = vmatpush1.bf16.msra.mxu0 %v1059
    %2678 = vmatprep.subr.bf16.mxu0 %v1064
    %2679 = vmatpush1.bf16.msra.mxu0 %v1063
    %2680 = vmatprep.subr.bf16.mxu0 %v1068
    %2681 = vmatpush1.bf16.msra.mxu0 %v1067
    %2682 = vmatprep.subr.bf16.mxu0 %v1072
    %2683 = vmatpush1.bf16.msra.mxu0 %v1071
    %2684 = vmatprep.subr.bf16.mxu0 %v1076
    %2685 = vmatpush1.bf16.msra.mxu0 %v1075
    %2686 = vmatprep.subr.bf16.mxu0 0
    %2687 = vmatpush1.bf16.msra.mxu0 0
    %2688 = vmatprep.subr.bf16.mxu0 0
    %2689 = vmatpush1.bf16.msra.mxu0 0
    %2690 = vmatprep.subr.bf16.mxu0 0
    %2691 = vmatpush1.bf16.msra.mxu0 0
    %2692 = vmatprep.subr.bf16.mxu0 0
    %2693 = vmatpush1.bf16.msra.mxu0 0
    %2694 = vmatprep.subr.bf16.mxu0 0
    %2695 = vmatpush1.bf16.msra.mxu0 0
    %2696 = vmatprep.subr.bf16.mxu0 0
    %2697 = vmatpush1.bf16.msra.mxu0 0
    %2698 = vmatprep.subr.bf16.mxu0 0
    %2699 = vmatpush1.bf16.msra.mxu0 0
    %2700 = vmatprep.subr.bf16.mxu0 0
    %2701 = vmatpush1.bf16.msra.mxu0 0
    %2702 = vmatprep.mubr.bf16.mxu0 0
    %2703 = vmatmul.mubr.bf16.gmra.mrb[0].mxu0 %v2628
    %v2704 = vpop.f32.mrb[0].mxu0
    %v2705 = vadd.f32 0.0, %v2704
    %v2706 = vpop.f32.mrb[0].mxu0
    %v2707 = vadd.f32 0.0, %v2706
    %v2708 = vpop.f32.mrb[0].mxu0
    %v2709 = vpop.f32.mrb[0].mxu0
    %2710 = vdwg.mxu0
    %v2711 = vadd.f32 %v2581, %v2664
    %v2712 = vadd.f32 %v2583, %v2666
    %v2713 = vadd.f32 %v2622, %v2705
    %v2714 = vadd.f32 %v2624, %v2707
    %v2715 = vxor.u32 %v2711, 2147483648
    %v2716 = vmul.f32 %v2715, 1.442695
    %v2717 = vpow.pop %v2716
    %v2718 = vadd.f32 %v2717, 1.0
    %v2719 = vrcp.pop %v2718
    %v2720 = vmul.f32 1.0, %v2719
    %v2721 = vxor.u32 %v2712, 2147483648
    %v2722 = vmul.f32 %v2721, 1.442695
    %v2723 = vpow.pop %v2722
    %v2724 = vadd.f32 %v2723, 1.0
    %v2725 = vrcp.pop %v2724
    %v2726 = vmul.f32 1.0, %v2725
    %v2727 = vtanh.pop %v2713
    %v2728 = vxor.u32 %v2714, 2147483648
    %v2729 = vmul.f32 %v2728, 1.442695
    %v2730 = vpow.pop %v2729
    %v2731 = vadd.f32 %v2730, 1.0
    %v2732 = vrcp.pop %v2731
    %v2733 = vmul.f32 1.0, %v2732
    %v2734 = vmul.f32 %v2726, %v2432
    %v2735 = vmul.f32 %v2720, %v2727
    %v2736 = vadd.f32 %v2734, %v2735
    %v2737 = vtanh.pop %v2736
    %v2738 = vmul.f32 %v2733, %v2737
    %2739 = vmatprep.subr.bf16.mxu0 %v447
    %2740 = vmatpush1.bf16.msra.mxu0 %v446
    %2741 = vmatprep.subr.bf16.mxu0 %v451
    %2742 = vmatpush1.bf16.msra.mxu0 %v450
    %2743 = vmatprep.subr.bf16.mxu0 %v455
    %2744 = vmatpush1.bf16.msra.mxu0 %v454
    %2745 = vmatprep.subr.bf16.mxu0 %v459
    %2746 = vmatpush1.bf16.msra.mxu0 %v458
    %2747 = vmatprep.subr.bf16.mxu0 %v463
    %2748 = vmatpush1.bf16.msra.mxu0 %v462
    %2749 = vmatprep.subr.bf16.mxu0 %v467
    %2750 = vmatpush1.bf16.msra.mxu0 %v466
    %2751 = vmatprep.subr.bf16.mxu0 %v471
    %2752 = vmatpush1.bf16.msra.mxu0 %v470
    %2753 = vmatprep.subr.bf16.mxu0 %v475
    %2754 = vmatpush1.bf16.msra.mxu0 %v474
    %2755 = vmatprep.subr.bf16.mxu0 0
    %2756 = vmatpush1.bf16.msra.mxu0 0
    %2757 = vmatprep.subr.bf16.mxu0 0
    %2758 = vmatpush1.bf16.msra.mxu0 0
    %2759 = vmatprep.subr.bf16.mxu0 0
    %2760 = vmatpush1.bf16.msra.mxu0 0
    %2761 = vmatprep.subr.bf16.mxu0 0
    %2762 = vmatpush1.bf16.msra.mxu0 0
    %2763 = vmatprep.subr.bf16.mxu0 0
    %2764 = vmatpush1.bf16.msra.mxu0 0
    %2765 = vmatprep.subr.bf16.mxu0 0
    %2766 = vmatpush1.bf16.msra.mxu0 0
    %2767 = vmatprep.subr.bf16.mxu0 0
    %2768 = vmatpush1.bf16.msra.mxu0 0
    %2769 = vmatprep.subr.bf16.mxu0 0
    %2770 = vmatpush1.bf16.msra.mxu0 0
    %2771 = vmatprep.mubr.bf16.mxu0 0
    %2772 = vmatmul.mubr.bf16.gmra.mrb[0].mxu0 %v2545
    %v2773 = vpop.f32.mrb[0].mxu0
    %v2774 = vadd.f32 0.0, %v2773
    %v2775 = vpop.f32.mrb[0].mxu0
    %v2776 = vadd.f32 0.0, %v2775
    %v2777 = vpop.f32.mrb[0].mxu0
    %v2778 = vpop.f32.mrb[0].mxu0
    %2779 = vdwg.mxu0
    %2780 = vmatprep.subr.bf16.mxu0 %v449
    %2781 = vmatpush1.bf16.msra.mxu0 %v448
    %2782 = vmatprep.subr.bf16.mxu0 %v453
    %2783 = vmatpush1.bf16.msra.mxu0 %v452
    %2784 = vmatprep.subr.bf16.mxu0 %v457
    %2785 = vmatpush1.bf16.msra.mxu0 %v456
    %2786 = vmatprep.subr.bf16.mxu0 %v461
    %2787 = vmatpush1.bf16.msra.mxu0 %v460
    %2788 = vmatprep.subr.bf16.mxu0 %v465
    %2789 = vmatpush1.bf16.msra.mxu0 %v464
    %2790 = vmatprep.subr.bf16.mxu0 %v469
    %2791 = vmatpush1.bf16.msra.mxu0 %v468
    %2792 = vmatprep.subr.bf16.mxu0 %v473
    %2793 = vmatpush1.bf16.msra.mxu0 %v472
    %2794 = vmatprep.subr.bf16.mxu0 %v477
    %2795 = vmatpush1.bf16.msra.mxu0 %v476
    %2796 = vmatprep.subr.bf16.mxu0 0
    %2797 = vmatpush1.bf16.msra.mxu0 0
    %2798 = vmatprep.subr.bf16.mxu0 0
    %2799 = vmatpush1.bf16.msra.mxu0 0
    %2800 = vmatprep.subr.bf16.mxu0 0
    %2801 = vmatpush1.bf16.msra.mxu0 0
    %2802 = vmatprep.subr.bf16.mxu0 0
    %2803 = vmatpush1.bf16.msra.mxu0 0
    %2804 = vmatprep.subr.bf16.mxu0 0
    %2805 = vmatpush1.bf16.msra.mxu0 0
    %2806 = vmatprep.subr.bf16.mxu0 0
    %2807 = vmatpush1.bf16.msra.mxu0 0
    %2808 = vmatprep.subr.bf16.mxu0 0
    %2809 = vmatpush1.bf16.msra.mxu0 0
    %2810 = vmatprep.subr.bf16.mxu0 0
    %2811 = vmatpush1.bf16.msra.mxu0 0
    %2812 = vmatprep.mubr.bf16.mxu0 0
    %2813 = vmatmul.mubr.bf16.gmra.mrb[0].mxu0 %v2545
    %v2814 = vpop.f32.mrb[0].mxu0
    %v2815 = vadd.f32 0.0, %v2814
    %v2816 = vpop.f32.mrb[0].mxu0
    %v2817 = vadd.f32 0.0, %v2816
    %v2818 = vpop.f32.mrb[0].mxu0
    %v2819 = vpop.f32.mrb[0].mxu0
    %2820 = vdwg.mxu0
    %v2821 = vadd.f32 %v237, %v2774
    %v2822 = vadd.f32 %v239, %v2776
    %v2823 = vadd.f32 %v310, %v2815
    %v2824 = vadd.f32 %v312, %v2817
    %v2825 = vxor.u32 %v2821, 2147483648
    %v2826 = vmul.f32 %v2825, 1.442695
    %v2827 = vpow.pop %v2826
    %v2828 = vadd.f32 %v2827, 1.0
    %v2829 = vrcp.pop %v2828
    %v2830 = vmul.f32 1.0, %v2829
    %v2831 = vxor.u32 %v2822, 2147483648
    %v2832 = vmul.f32 %v2831, 1.442695
    %v2833 = vpow.pop %v2832
    %v2834 = vadd.f32 %v2833, 1.0
    %v2835 = vrcp.pop %v2834
    %v2836 = vmul.f32 1.0, %v2835
    %v2837 = vtanh.pop %v2823
    %v2838 = vxor.u32 %v2824, 2147483648
    %v2839 = vmul.f32 %v2838, 1.442695
    %v2840 = vpow.pop %v2839
    %v2841 = vadd.f32 %v2840, 1.0
    %v2842 = vrcp.pop %v2841
    %v2843 = vmul.f32 1.0, %v2842
    %v2844 = vmul.f32 %v2836, %v2542
    %v2845 = vmul.f32 %v2830, %v2837
    %v2846 = vadd.f32 %v2844, %v2845
    %v2847 = vtanh.pop %v2846
    %v2848 = vmul.f32 %v2843, %v2847
    %v2849 = vpack.c.bf16 %v2848, %v2848
    %2850 = vmatprep.subr.bf16.mxu0 %v772
    %2851 = vmatpush1.bf16.msra.mxu0 %v771
    %2852 = vmatprep.subr.bf16.mxu0 %v776
    %2853 = vmatpush1.bf16.msra.mxu0 %v775
    %2854 = vmatprep.subr.bf16.mxu0 %v780
    %2855 = vmatpush1.bf16.msra.mxu0 %v779
    %2856 = vmatprep.subr.bf16.mxu0 %v784
    %2857 = vmatpush1.bf16.msra.mxu0 %v783
    %2858 = vmatprep.subr.bf16.mxu0 %v788
    %2859 = vmatpush1.bf16.msra.mxu0 %v787
    %2860 = vmatprep.subr.bf16.mxu0 %v792
    %2861 = vmatpush1.bf16.msra.mxu0 %v791
    %2862 = vmatprep.subr.bf16.mxu0 %v796
    %2863 = vmatpush1.bf16.msra.mxu0 %v795
    %2864 = vmatprep.subr.bf16.mxu0 %v800
    %2865 = vmatpush1.bf16.msra.mxu0 %v799
    %2866 = vmatprep.subr.bf16.mxu0 0
    %2867 = vmatpush1.bf16.msra.mxu0 0
    %2868 = vmatprep.subr.bf16.mxu0 0
    %2869 = vmatpush1.bf16.msra.mxu0 0
    %2870 = vmatprep.subr.bf16.mxu0 0
    %2871 = vmatpush1.bf16.msra.mxu0 0
    %2872 = vmatprep.subr.bf16.mxu0 0
    %2873 = vmatpush1.bf16.msra.mxu0 0
    %2874 = vmatprep.subr.bf16.mxu0 0
    %2875 = vmatpush1.bf16.msra.mxu0 0
    %2876 = vmatprep.subr.bf16.mxu0 0
    %2877 = vmatpush1.bf16.msra.mxu0 0
    %2878 = vmatprep.subr.bf16.mxu0 0
    %2879 = vmatpush1.bf16.msra.mxu0 0
    %2880 = vmatprep.subr.bf16.mxu0 0
    %2881 = vmatpush1.bf16.msra.mxu0 0
    %2882 = vmatprep.mubr.bf16.mxu0 0
    %2883 = vmatmul.mubr.bf16.gmra.mrb[0].mxu0 %v2849
    %v2884 = vpop.f32.mrb[0].mxu0
    %v2885 = vadd.f32 %v658, %v2884
    %v2886 = vpop.f32.mrb[0].mxu0
    %v2887 = vadd.f32 %v662, %v2886
    %v2888 = vpop.f32.mrb[0].mxu0
    %v2889 = vpop.f32.mrb[0].mxu0
    %2890 = vdwg.mxu0
    %2891 = vmatprep.subr.bf16.mxu0 %v774
    %2892 = vmatpush1.bf16.msra.mxu0 %v773
    %2893 = vmatprep.subr.bf16.mxu0 %v778
    %2894 = vmatpush1.bf16.msra.mxu0 %v777
    %2895 = vmatprep.subr.bf16.mxu0 %v782
    %2896 = vmatpush1.bf16.msra.mxu0 %v781
    %2897 = vmatprep.subr.bf16.mxu0 %v786
    %2898 = vmatpush1.bf16.msra.mxu0 %v785
    %2899 = vmatprep.subr.bf16.mxu0 %v790
    %2900 = vmatpush1.bf16.msra.mxu0 %v789
    %2901 = vmatprep.subr.bf16.mxu0 %v794
    %2902 = vmatpush1.bf16.msra.mxu0 %v793
    %2903 = vmatprep.subr.bf16.mxu0 %v798
    %2904 = vmatpush1.bf16.msra.mxu0 %v797
    %2905 = vmatprep.subr.bf16.mxu0 %v802
    %2906 = vmatpush1.bf16.msra.mxu0 %v801
    %2907 = vmatprep.subr.bf16.mxu0 0
    %2908 = vmatpush1.bf16.msra.mxu0 0
    %2909 = vmatprep.subr.bf16.mxu0 0
    %2910 = vmatpush1.bf16.msra.mxu0 0
    %2911 = vmatprep.subr.bf16.mxu0 0
    %2912 = vmatpush1.bf16.msra.mxu0 0
    %2913 = vmatprep.subr.bf16.mxu0 0
    %2914 = vmatpush1.bf16.msra.mxu0 0
    %2915 = vmatprep.subr.bf16.mxu0 0
    %2916 = vmatpush1.bf16.msra.mxu0 0
    %2917 = vmatprep.subr.bf16.mxu0 0
    %2918 = vmatpush1.bf16.msra.mxu0 0
    %2919 = vmatprep.subr.bf16.mxu0 0
    %2920 = vmatpush1.bf16.msra.mxu0 0
    %2921 = vmatprep.subr.bf16.mxu0 0
    %2922 = vmatpush1.bf16.msra.mxu0 0
    %2923 = vmatprep.mubr.bf16.mxu0 0
    %2924 = vmatmul.mubr.bf16.gmra.mrb[0].mxu0 %v2849
    %v2925 = vpop.f32.mrb[0].mxu0
    %v2926 = vadd.f32 %v666, %v2925
    %v2927 = vpop.f32.mrb[0].mxu0
    %v2928 = vadd.f32 %v670, %v2927
    %v2929 = vpop.f32.mrb[0].mxu0
    %v2930 = vpop.f32.mrb[0].mxu0
    %2931 = vdwg.mxu0
    %v2932 = vpack.c.bf16 %v2738, %v2738
    %2933 = vmatprep.subr.bf16.mxu0 %v1046
    %2934 = vmatpush1.bf16.msra.mxu0 %v1045
    %2935 = vmatprep.subr.bf16.mxu0 %v1050
    %2936 = vmatpush1.bf16.msra.mxu0 %v1049
    %2937 = vmatprep.subr.bf16.mxu0 %v1054
    %2938 = vmatpush1.bf16.msra.mxu0 %v1053
    %2939 = vmatprep.subr.bf16.mxu0 %v1058
    %2940 = vmatpush1.bf16.msra.mxu0 %v1057
    %2941 = vmatprep.subr.bf16.mxu0 %v1062
    %2942 = vmatpush1.bf16.msra.mxu0 %v1061
    %2943 = vmatprep.subr.bf16.mxu0 %v1066
    %2944 = vmatpush1.bf16.msra.mxu0 %v1065
    %2945 = vmatprep.subr.bf16.mxu0 %v1070
    %2946 = vmatpush1.bf16.msra.mxu0 %v1069
    %2947 = vmatprep.subr.bf16.mxu0 %v1074
    %2948 = vmatpush1.bf16.msra.mxu0 %v1073
    %2949 = vmatprep.subr.bf16.mxu0 0
    %2950 = vmatpush1.bf16.msra.mxu0 0
    %2951 = vmatprep.subr.bf16.mxu0 0
    %2952 = vmatpush1.bf16.msra.mxu0 0
    %2953 = vmatprep.subr.bf16.mxu0 0
    %2954 = vmatpush1.bf16.msra.mxu0 0
    %2955 = vmatprep.subr.bf16.mxu0 0
    %2956 = vmatpush1.bf16.msra.mxu0 0
    %2957 = vmatprep.subr.bf16.mxu0 0
    %2958 = vmatpush1.bf16.msra.mxu0 0
    %2959 = vmatprep.subr.bf16.mxu0 0
    %2960 = vmatpush1.bf16.msra.mxu0 0
    %2961 = vmatprep.subr.bf16.mxu0 0
    %2962 = vmatpush1.bf16.msra.mxu0 0
    %2963 = vmatprep.subr.bf16.mxu0 0
    %2964 = vmatpush1.bf16.msra.mxu0 0
    %2965 = vmatprep.mubr.bf16.mxu0 0
    %2966 = vmatmul.mubr.bf16.gmra.mrb[0].mxu0 %v2932
    %v2967 = vpop.f32.mrb[0].mxu0
    %v2968 = vadd.f32 0.0, %v2967
    %v2969 = vpop.f32.mrb[0].mxu0
    %v2970 = vadd.f32 0.0, %v2969
    %v2971 = vpop.f32.mrb[0].mxu0
    %v2972 = vpop.f32.mrb[0].mxu0
    %2973 = vdwg.mxu0
    %2974 = vmatprep.subr.bf16.mxu0 %v1048
    %2975 = vmatpush1.bf16.msra.mxu0 %v1047
    %2976 = vmatprep.subr.bf16.mxu0 %v1052
    %2977 = vmatpush1.bf16.msra.mxu0 %v1051
    %2978 = vmatprep.subr.bf16.mxu0 %v1056
    %2979 = vmatpush1.bf16.msra.mxu0 %v1055
    %2980 = vmatprep.subr.bf16.mxu0 %v1060
    %2981 = vmatpush1.bf16.msra.mxu0 %v1059
    %2982 = vmatprep.subr.bf16.mxu0 %v1064
    %2983 = vmatpush1.bf16.msra.mxu0 %v1063
    %2984 = vmatprep.subr.bf16.mxu0 %v1068
    %2985 = vmatpush1.bf16.msra.mxu0 %v1067
    %2986 = vmatprep.subr.bf16.mxu0 %v1072
    %2987 = vmatpush1.bf16.msra.mxu0 %v1071
    %2988 = vmatprep.subr.bf16.mxu0 %v1076
    %2989 = vmatpush1.bf16.msra.mxu0 %v1075
    %2990 = vmatprep.subr.bf16.mxu0 0
    %2991 = vmatpush1.bf16.msra.mxu0 0
    %2992 = vmatprep.subr.bf16.mxu0 0
    %2993 = vmatpush1.bf16.msra.mxu0 0
    %2994 = vmatprep.subr.bf16.mxu0 0
    %2995 = vmatpush1.bf16.msra.mxu0 0
    %2996 = vmatprep.subr.bf16.mxu0 0
    %2997 = vmatpush1.bf16.msra.mxu0 0
    %2998 = vmatprep.subr.bf16.mxu0 0
    %2999 = vmatpush1.bf16.msra.mxu0 0
    %3000 = vmatprep.subr.bf16.mxu0 0
    %3001 = vmatpush1.bf16.msra.mxu0 0
    %3002 = vmatprep.subr.bf16.mxu0 0
    %3003 = vmatpush1.bf16.msra.mxu0 0
    %3004 = vmatprep.subr.bf16.mxu0 0
    %3005 = vmatpush1.bf16.msra.mxu0 0
    %3006 = vmatprep.mubr.bf16.mxu0 0
    %3007 = vmatmul.mubr.bf16.gmra.mrb[0].mxu0 %v2932
    %v3008 = vpop.f32.mrb[0].mxu0
    %v3009 = vadd.f32 0.0, %v3008
    %v3010 = vpop.f32.mrb[0].mxu0
    %v3011 = vadd.f32 0.0, %v3010
    %v3012 = vpop.f32.mrb[0].mxu0
    %v3013 = vpop.f32.mrb[0].mxu0
    %3014 = vdwg.mxu0
    %v3015 = vadd.f32 %v2885, %v2968
    %v3016 = vadd.f32 %v2887, %v2970
    %v3017 = vadd.f32 %v2926, %v3009
    %v3018 = vadd.f32 %v2928, %v3011
    %v3019 = vxor.u32 %v3015, 2147483648
    %v3020 = vmul.f32 %v3019, 1.442695
    %v3021 = vpow.pop %v3020
    %v3022 = vadd.f32 %v3021, 1.0
    %v3023 = vrcp.pop %v3022
    %v3024 = vmul.f32 1.0, %v3023
    %v3025 = vxor.u32 %v3016, 2147483648
    %v3026 = vmul.f32 %v3025, 1.442695
    %v3027 = vpow.pop %v3026
    %v3028 = vadd.f32 %v3027, 1.0
    %v3029 = vrcp.pop %v3028
    %v3030 = vmul.f32 1.0, %v3029
    %v3031 = vtanh.pop %v3017
    %v3032 = vxor.u32 %v3018, 2147483648
    %v3033 = vmul.f32 %v3032, 1.442695
    %v3034 = vpow.pop %v3033
    %v3035 = vadd.f32 %v3034, 1.0
    %v3036 = vrcp.pop %v3035
    %v3037 = vmul.f32 1.0, %v3036
    %v3038 = vmul.f32 %v3030, %v2736
    %v3039 = vmul.f32 %v3024, %v3031
    %v3040 = vadd.f32 %v3038, %v3039
    %v3041 = vtanh.pop %v3040
    %v3042 = vmul.f32 %v3037, %v3041
    %3043 = vmatprep.subr.bf16.mxu0 %v447
    %3044 = vmatpush1.bf16.msra.mxu0 %v446
    %3045 = vmatprep.subr.bf16.mxu0 %v451
    %3046 = vmatpush1.bf16.msra.mxu0 %v450
    %3047 = vmatprep.subr.bf16.mxu0 %v455
    %3048 = vmatpush1.bf16.msra.mxu0 %v454
    %3049 = vmatprep.subr.bf16.mxu0 %v459
    %3050 = vmatpush1.bf16.msra.mxu0 %v458
    %3051 = vmatprep.subr.bf16.mxu0 %v463
    %3052 = vmatpush1.bf16.msra.mxu0 %v462
    %3053 = vmatprep.subr.bf16.mxu0 %v467
    %3054 = vmatpush1.bf16.msra.mxu0 %v466
    %3055 = vmatprep.subr.bf16.mxu0 %v471
    %3056 = vmatpush1.bf16.msra.mxu0 %v470
    %3057 = vmatprep.subr.bf16.mxu0 %v475
    %3058 = vmatpush1.bf16.msra.mxu0 %v474
    %3059 = vmatprep.subr.bf16.mxu0 0
    %3060 = vmatpush1.bf16.msra.mxu0 0
    %3061 = vmatprep.subr.bf16.mxu0 0
    %3062 = vmatpush1.bf16.msra.mxu0 0
    %3063 = vmatprep.subr.bf16.mxu0 0
    %3064 = vmatpush1.bf16.msra.mxu0 0
    %3065 = vmatprep.subr.bf16.mxu0 0
    %3066 = vmatpush1.bf16.msra.mxu0 0
    %3067 = vmatprep.subr.bf16.mxu0 0
    %3068 = vmatpush1.bf16.msra.mxu0 0
    %3069 = vmatprep.subr.bf16.mxu0 0
    %3070 = vmatpush1.bf16.msra.mxu0 0
    %3071 = vmatprep.subr.bf16.mxu0 0
    %3072 = vmatpush1.bf16.msra.mxu0 0
    %3073 = vmatprep.subr.bf16.mxu0 0
    %3074 = vmatpush1.bf16.msra.mxu0 0
    %3075 = vmatprep.mubr.bf16.mxu0 0
    %3076 = vmatmul.mubr.bf16.gmra.mrb[0].mxu0 %v2849
    %v3077 = vpop.f32.mrb[0].mxu0
    %v3078 = vadd.f32 0.0, %v3077
    %v3079 = vpop.f32.mrb[0].mxu0
    %v3080 = vadd.f32 0.0, %v3079
    %v3081 = vpop.f32.mrb[0].mxu0
    %v3082 = vpop.f32.mrb[0].mxu0
    %3083 = vdwg.mxu0
    %3084 = vmatprep.subr.bf16.mxu0 %v449
    %3085 = vmatpush1.bf16.msra.mxu0 %v448
    %3086 = vmatprep.subr.bf16.mxu0 %v453
    %3087 = vmatpush1.bf16.msra.mxu0 %v452
    %3088 = vmatprep.subr.bf16.mxu0 %v457
    %3089 = vmatpush1.bf16.msra.mxu0 %v456
    %3090 = vmatprep.subr.bf16.mxu0 %v461
    %3091 = vmatpush1.bf16.msra.mxu0 %v460
    %3092 = vmatprep.subr.bf16.mxu0 %v465
    %3093 = vmatpush1.bf16.msra.mxu0 %v464
    %3094 = vmatprep.subr.bf16.mxu0 %v469
    %3095 = vmatpush1.bf16.msra.mxu0 %v468
    %3096 = vmatprep.subr.bf16.mxu0 %v473
    %3097 = vmatpush1.bf16.msra.mxu0 %v472
    %3098 = vmatprep.subr.bf16.mxu0 %v477
    %3099 = vmatpush1.bf16.msra.mxu0 %v476
    %3100 = vmatprep.subr.bf16.mxu0 0
    %3101 = vmatpush1.bf16.msra.mxu0 0
    %3102 = vmatprep.subr.bf16.mxu0 0
    %3103 = vmatpush1.bf16.msra.mxu0 0
    %3104 = vmatprep.subr.bf16.mxu0 0
    %3105 = vmatpush1.bf16.msra.mxu0 0
    %3106 = vmatprep.subr.bf16.mxu0 0
    %3107 = vmatpush1.bf16.msra.mxu0 0
    %3108 = vmatprep.subr.bf16.mxu0 0
    %3109 = vmatpush1.bf16.msra.mxu0 0
    %3110 = vmatprep.subr.bf16.mxu0 0
    %3111 = vmatpush1.bf16.msra.mxu0 0
    %3112 = vmatprep.subr.bf16.mxu0 0
    %3113 = vmatpush1.bf16.msra.mxu0 0
    %3114 = vmatprep.subr.bf16.mxu0 0
    %3115 = vmatpush1.bf16.msra.mxu0 0
    %3116 = vmatprep.mubr.bf16.mxu0 0
    %3117 = vmatmul.mubr.bf16.gmra.mrb[0].mxu0 %v2849
    %v3118 = vpop.f32.mrb[0].mxu0
    %v3119 = vadd.f32 0.0, %v3118
    %v3120 = vpop.f32.mrb[0].mxu0
    %v3121 = vadd.f32 0.0, %v3120
    %v3122 = vpop.f32.mrb[0].mxu0
    %v3123 = vpop.f32.mrb[0].mxu0
    %3124 = vdwg.mxu0
    %v3125 = vadd.f32 %v241, %v3078
    %v3126 = vadd.f32 %v243, %v3080
    %v3127 = vadd.f32 %v314, %v3119
    %v3128 = vadd.f32 %v316, %v3121
    %v3129 = vxor.u32 %v3125, 2147483648
    %v3130 = vmul.f32 %v3129, 1.442695
    %v3131 = vpow.pop %v3130
    %v3132 = vadd.f32 %v3131, 1.0
    %v3133 = vrcp.pop %v3132
    %v3134 = vmul.f32 1.0, %v3133
    %v3135 = vxor.u32 %v3126, 2147483648
    %v3136 = vmul.f32 %v3135, 1.442695
    %v3137 = vpow.pop %v3136
    %v3138 = vadd.f32 %v3137, 1.0
    %v3139 = vrcp.pop %v3138
    %v3140 = vmul.f32 1.0, %v3139
    %v3141 = vtanh.pop %v3127
    %v3142 = vxor.u32 %v3128, 2147483648
    %v3143 = vmul.f32 %v3142, 1.442695
    %v3144 = vpow.pop %v3143
    %v3145 = vadd.f32 %v3144, 1.0
    %v3146 = vrcp.pop %v3145
    %v3147 = vmul.f32 1.0, %v3146
    %v3148 = vmul.f32 %v3140, %v2846
    %v3149 = vmul.f32 %v3134, %v3141
    %v3150 = vadd.f32 %v3148, %v3149
    %v3151 = vtanh.pop %v3150
    %v3152 = vmul.f32 %v3147, %v3151
    %v3153 = vpack.c.bf16 %v3152, %v3152
    %3154 = vmatprep.subr.bf16.mxu0 %v772
    %3155 = vmatpush1.bf16.msra.mxu0 %v771
    %3156 = vmatprep.subr.bf16.mxu0 %v776
    %3157 = vmatpush1.bf16.msra.mxu0 %v775
    %3158 = vmatprep.subr.bf16.mxu0 %v780
    %3159 = vmatpush1.bf16.msra.mxu0 %v779
    %3160 = vmatprep.subr.bf16.mxu0 %v784
    %3161 = vmatpush1.bf16.msra.mxu0 %v783
    %3162 = vmatprep.subr.bf16.mxu0 %v788
    %3163 = vmatpush1.bf16.msra.mxu0 %v787
    %3164 = vmatprep.subr.bf16.mxu0 %v792
    %3165 = vmatpush1.bf16.msra.mxu0 %v791
    %3166 = vmatprep.subr.bf16.mxu0 %v796
    %3167 = vmatpush1.bf16.msra.mxu0 %v795
    %3168 = vmatprep.subr.bf16.mxu0 %v800
    %3169 = vmatpush1.bf16.msra.mxu0 %v799
    %3170 = vmatprep.subr.bf16.mxu0 0
    %3171 = vmatpush1.bf16.msra.mxu0 0
    %3172 = vmatprep.subr.bf16.mxu0 0
    %3173 = vmatpush1.bf16.msra.mxu0 0
    %3174 = vmatprep.subr.bf16.mxu0 0
    %3175 = vmatpush1.bf16.msra.mxu0 0
    %3176 = vmatprep.subr.bf16.mxu0 0
    %3177 = vmatpush1.bf16.msra.mxu0 0
    %3178 = vmatprep.subr.bf16.mxu0 0
    %3179 = vmatpush1.bf16.msra.mxu0 0
    %3180 = vmatprep.subr.bf16.mxu0 0
    %3181 = vmatpush1.bf16.msra.mxu0 0
    %3182 = vmatprep.subr.bf16.mxu0 0
    %3183 = vmatpush1.bf16.msra.mxu0 0
    %3184 = vmatprep.subr.bf16.mxu0 0
    %3185 = vmatpush1.bf16.msra.mxu0 0
    %3186 = vmatprep.mubr.bf16.mxu0 0
    %3187 = vmatmul.mubr.bf16.gmra.mrb[0].mxu0 %v3153
    %v3188 = vpop.f32.mrb[0].mxu0
    %v3189 = vadd.f32 %v658, %v3188
    %v3190 = vpop.f32.mrb[0].mxu0
    %v3191 = vadd.f32 %v662, %v3190
    %v3192 = vpop.f32.mrb[0].mxu0
    %v3193 = vpop.f32.mrb[0].mxu0
    %3194 = vdwg.mxu0
    %3195 = vmatprep.subr.bf16.mxu0 %v774
    %3196 = vmatpush1.bf16.msra.mxu0 %v773
    %3197 = vmatprep.subr.bf16.mxu0 %v778
    %3198 = vmatpush1.bf16.msra.mxu0 %v777
    %3199 = vmatprep.subr.bf16.mxu0 %v782
    %3200 = vmatpush1.bf16.msra.mxu0 %v781
    %3201 = vmatprep.subr.bf16.mxu0 %v786
    %3202 = vmatpush1.bf16.msra.mxu0 %v785
    %3203 = vmatprep.subr.bf16.mxu0 %v790
    %3204 = vmatpush1.bf16.msra.mxu0 %v789
    %3205 = vmatprep.subr.bf16.mxu0 %v794
    %3206 = vmatpush1.bf16.msra.mxu0 %v793
    %3207 = vmatprep.subr.bf16.mxu0 %v798
    %3208 = vmatpush1.bf16.msra.mxu0 %v797
    %3209 = vmatprep.subr.bf16.mxu0 %v802
    %3210 = vmatpush1.bf16.msra.mxu0 %v801
    %3211 = vmatprep.subr.bf16.mxu0 0
    %3212 = vmatpush1.bf16.msra.mxu0 0
    %3213 = vmatprep.subr.bf16.mxu0 0
    %3214 = vmatpush1.bf16.msra.mxu0 0
    %3215 = vmatprep.subr.bf16.mxu0 0
    %3216 = vmatpush1.bf16.msra.mxu0 0
    %3217 = vmatprep.subr.bf16.mxu0 0
    %3218 = vmatpush1.bf16.msra.mxu0 0
    %3219 = vmatprep.subr.bf16.mxu0 0
    %3220 = vmatpush1.bf16.msra.mxu0 0
    %3221 = vmatprep.subr.bf16.mxu0 0
    %3222 = vmatpush1.bf16.msra.mxu0 0
    %3223 = vmatprep.subr.bf16.mxu0 0
    %3224 = vmatpush1.bf16.msra.mxu0 0
    %3225 = vmatprep.subr.bf16.mxu0 0
    %3226 = vmatpush1.bf16.msra.mxu0 0
    %3227 = vmatprep.mubr.bf16.mxu0 0
    %3228 = vmatmul.mubr.bf16.gmra.mrb[0].mxu0 %v3153
    %v3229 = vpop.f32.mrb[0].mxu0
    %v3230 = vadd.f32 %v666, %v3229
    %v3231 = vpop.f32.mrb[0].mxu0
    %v3232 = vadd.f32 %v670, %v3231
    %v3233 = vpop.f32.mrb[0].mxu0
    %v3234 = vpop.f32.mrb[0].mxu0
    %3235 = vdwg.mxu0
    %v3236 = vpack.c.bf16 %v3042, %v3042
    %3237 = vmatprep.subr.bf16.mxu0 %v1046
    %3238 = vmatpush1.bf16.msra.mxu0 %v1045
    %3239 = vmatprep.subr.bf16.mxu0 %v1050
    %3240 = vmatpush1.bf16.msra.mxu0 %v1049
    %3241 = vmatprep.subr.bf16.mxu0 %v1054
    %3242 = vmatpush1.bf16.msra.mxu0 %v1053
    %3243 = vmatprep.subr.bf16.mxu0 %v1058
    %3244 = vmatpush1.bf16.msra.mxu0 %v1057
    %3245 = vmatprep.subr.bf16.mxu0 %v1062
    %3246 = vmatpush1.bf16.msra.mxu0 %v1061
    %3247 = vmatprep.subr.bf16.mxu0 %v1066
    %3248 = vmatpush1.bf16.msra.mxu0 %v1065
    %3249 = vmatprep.subr.bf16.mxu0 %v1070
    %3250 = vmatpush1.bf16.msra.mxu0 %v1069
    %3251 = vmatprep.subr.bf16.mxu0 %v1074
    %3252 = vmatpush1.bf16.msra.mxu0 %v1073
    %3253 = vmatprep.subr.bf16.mxu0 0
    %3254 = vmatpush1.bf16.msra.mxu0 0
    %3255 = vmatprep.subr.bf16.mxu0 0
    %3256 = vmatpush1.bf16.msra.mxu0 0
    %3257 = vmatprep.subr.bf16.mxu0 0
    %3258 = vmatpush1.bf16.msra.mxu0 0
    %3259 = vmatprep.subr.bf16.mxu0 0
    %3260 = vmatpush1.bf16.msra.mxu0 0
    %3261 = vmatprep.subr.bf16.mxu0 0
    %3262 = vmatpush1.bf16.msra.mxu0 0
    %3263 = vmatprep.subr.bf16.mxu0 0
    %3264 = vmatpush1.bf16.msra.mxu0 0
    %3265 = vmatprep.subr.bf16.mxu0 0
    %3266 = vmatpush1.bf16.msra.mxu0 0
    %3267 = vmatprep.subr.bf16.mxu0 0
    %3268 = vmatpush1.bf16.msra.mxu0 0
    %3269 = vmatprep.mubr.bf16.mxu0 0
    %3270 = vmatmul.mubr.bf16.gmra.mrb[0].mxu0 %v3236
    %v3271 = vpop.f32.mrb[0].mxu0
    %v3272 = vadd.f32 0.0, %v3271
    %v3273 = vpop.f32.mrb[0].mxu0
    %v3274 = vadd.f32 0.0, %v3273
    %v3275 = vpop.f32.mrb[0].mxu0
    %v3276 = vpop.f32.mrb[0].mxu0
    %3277 = vdwg.mxu0
    %3278 = vmatprep.subr.bf16.mxu0 %v1048
    %3279 = vmatpush1.bf16.msra.mxu0 %v1047
    %3280 = vmatprep.subr.bf16.mxu0 %v1052
    %3281 = vmatpush1.bf16.msra.mxu0 %v1051
    %3282 = vmatprep.subr.bf16.mxu0 %v1056
    %3283 = vmatpush1.bf16.msra.mxu0 %v1055
    %3284 = vmatprep.subr.bf16.mxu0 %v1060
    %3285 = vmatpush1.bf16.msra.mxu0 %v1059
    %3286 = vmatprep.subr.bf16.mxu0 %v1064
    %3287 = vmatpush1.bf16.msra.mxu0 %v1063
    %3288 = vmatprep.subr.bf16.mxu0 %v1068
    %3289 = vmatpush1.bf16.msra.mxu0 %v1067
    %3290 = vmatprep.subr.bf16.mxu0 %v1072
    %3291 = vmatpush1.bf16.msra.mxu0 %v1071
    %3292 = vmatprep.subr.bf16.mxu0 %v1076
    %3293 = vmatpush1.bf16.msra.mxu0 %v1075
    %3294 = vmatprep.subr.bf16.mxu0 0
    %3295 = vmatpush1.bf16.msra.mxu0 0
    %3296 = vmatprep.subr.bf16.mxu0 0
    %3297 = vmatpush1.bf16.msra.mxu0 0
    %3298 = vmatprep.subr.bf16.mxu0 0
    %3299 = vmatpush1.bf16.msra.mxu0 0
    %3300 = vmatprep.subr.bf16.mxu0 0
    %3301 = vmatpush1.bf16.msra.mxu0 0
    %3302 = vmatprep.subr.bf16.mxu0 0
    %3303 = vmatpush1.bf16.msra.mxu0 0
    %3304 = vmatprep.subr.bf16.mxu0 0
    %3305 = vmatpush1.bf16.msra.mxu0 0
    %3306 = vmatprep.subr.bf16.mxu0 0
    %3307 = vmatpush1.bf16.msra.mxu0 0
    %3308 = vmatprep.subr.bf16.mxu0 0
    %3309 = vmatpush1.bf16.msra.mxu0 0
    %3310 = vmatprep.mubr.bf16.mxu0 0
    %3311 = vmatmul.mubr.bf16.gmra.mrb[0].mxu0 %v3236
    %v3312 = vpop.f32.mrb[0].mxu0
    %v3313 = vadd.f32 0.0, %v3312
    %v3314 = vpop.f32.mrb[0].mxu0
    %v3315 = vadd.f32 0.0, %v3314
    %v3316 = vpop.f32.mrb[0].mxu0
    %v3317 = vpop.f32.mrb[0].mxu0
    %3318 = vdwg.mxu0
    %v3319 = vadd.f32 %v3189, %v3272
    %v3320 = vadd.f32 %v3191, %v3274
    %v3321 = vadd.f32 %v3230, %v3313
    %v3322 = vadd.f32 %v3232, %v3315
    %v3323 = vxor.u32 %v3319, 2147483648
    %v3324 = vmul.f32 %v3323, 1.442695
    %v3325 = vpow.pop %v3324
    %v3326 = vadd.f32 %v3325, 1.0
    %v3327 = vrcp.pop %v3326
    %v3328 = vmul.f32 1.0, %v3327
    %v3329 = vxor.u32 %v3320, 2147483648
    %v3330 = vmul.f32 %v3329, 1.442695
    %v3331 = vpow.pop %v3330
    %v3332 = vadd.f32 %v3331, 1.0
    %v3333 = vrcp.pop %v3332
    %v3334 = vmul.f32 1.0, %v3333
    %v3335 = vtanh.pop %v3321
    %v3336 = vxor.u32 %v3322, 2147483648
    %v3337 = vmul.f32 %v3336, 1.442695
    %v3338 = vpow.pop %v3337
    %v3339 = vadd.f32 %v3338, 1.0
    %v3340 = vrcp.pop %v3339
    %v3341 = vmul.f32 1.0, %v3340
    %v3342 = vmul.f32 %v3334, %v3040
    %v3343 = vmul.f32 %v3328, %v3335
    %v3344 = vadd.f32 %v3342, %v3343
    %v3345 = vtanh.pop %v3344
    %v3346 = vmul.f32 %v3341, %v3345
    %v3347 = vld [vmem:[%s7] sm:$0xff]
    %v3348 = vld [vmem:[%s7 + $0x8] sm:$0xff]
    %v3349 = vld [vmem:[%s7 + $0x10] sm:$0xff]
    %v3350 = vld [vmem:[%s7 + $0x18] sm:$0xff]
    %v3351 = vld [vmem:[%s7 + $0x20] sm:$0xff]
    %v3352 = vld [vmem:[%s7 + $0x28] sm:$0xff]
    %v3353 = vld [vmem:[%s7 + $0x30] sm:$0xff]
    %v3354 = vld [vmem:[%s7 + $0x38] sm:$0xff]
    %v3355 = vld [vmem:[%s7 + $0x40] sm:$0xff]
    %v3356 = vld [vmem:[%s7 + $0x48] sm:$0xff]
    %v3357 = vld [vmem:[%s7 + $0x50] sm:$0xff]
    %v3358 = vld [vmem:[%s7 + $0x58] sm:$0xff]
    %v3359 = vld [vmem:[%s7 + $0x60] sm:$0xff]
    %v3360 = vld [vmem:[%s7 + $0x68] sm:$0xff]
    %v3361 = vld [vmem:[%s7 + $0x70] sm:$0xff]
    %v3362 = vld [vmem:[%s7 + $0x78] sm:$0xff]
    %v3363 = vld [vmem:[#allocation2] sm:$0x1]
    %v3365 = vlaneseq
    %v3366 = vshrl.u32 %v3365, 7
    %v3367 = vsub.s32 0, %v3366
    %v3368 = vrot.slane %v3363, %v3367
    %3370 = vmatprep.subr.mxu0 0.0
    %3371 = vmatpush1.msra.mxu0 %v3347
    %3372 = vmatprep.subr.mxu0 0.0
    %3373 = vmatpush1.msra.mxu0 %v3348
    %3374 = vmatprep.subr.mxu0 0.0
    %3375 = vmatpush1.msra.mxu0 %v3349
    %3376 = vmatprep.subr.mxu0 0.0
    %3377 = vmatpush1.msra.mxu0 %v3350
    %3378 = vmatprep.subr.mxu0 0.0
    %3379 = vmatpush1.msra.mxu0 %v3351
    %3380 = vmatprep.subr.mxu0 0.0
    %3381 = vmatpush1.msra.mxu0 %v3352
    %3382 = vmatprep.subr.mxu0 0.0
    %3383 = vmatpush1.msra.mxu0 %v3353
    %3384 = vmatprep.subr.mxu0 0.0
    %3385 = vmatpush1.msra.mxu0 %v3354
    %3386 = vmatprep.subr.mxu0 0.0
    %3387 = vmatpush1.msra.mxu0 %v3355
    %3388 = vmatprep.subr.mxu0 0.0
    %3389 = vmatpush1.msra.mxu0 %v3356
    %3390 = vmatprep.subr.mxu0 0.0
    %3391 = vmatpush1.msra.mxu0 %v3357
    %3392 = vmatprep.subr.mxu0 0.0
    %3393 = vmatpush1.msra.mxu0 %v3358
    %3394 = vmatprep.subr.mxu0 0.0
    %3395 = vmatpush1.msra.mxu0 %v3359
    %3396 = vmatprep.subr.mxu0 0.0
    %3397 = vmatpush1.msra.mxu0 %v3360
    %3398 = vmatprep.subr.mxu0 0.0
    %3399 = vmatpush1.msra.mxu0 %v3361
    %3400 = vmatprep.subr.mxu0 0.0
    %3401 = vmatpush1.msra.mxu0 %v3362
    %3402 = vmatprep.subr.mxu0 0.0
    %3403 = vmatpush1.msra.mxu0 0.0
    %3404 = vmatprep.subr.mxu0 0.0
    %3405 = vmatpush1.msra.mxu0 0.0
    %3406 = vmatprep.subr.mxu0 0.0
    %3407 = vmatpush1.msra.mxu0 0.0
    %3408 = vmatprep.subr.mxu0 0.0
    %3409 = vmatpush1.msra.mxu0 0.0
    %3410 = vmatprep.subr.mxu0 0.0
    %3411 = vmatpush1.msra.mxu0 0.0
    %3412 = vmatprep.subr.mxu0 0.0
    %3413 = vmatpush1.msra.mxu0 0.0
    %3414 = vmatprep.subr.mxu0 0.0
    %3415 = vmatpush1.msra.mxu0 0.0
    %3416 = vmatprep.subr.mxu0 0.0
    %3417 = vmatpush1.msra.mxu0 0.0
    %3418 = vmatprep.subr.mxu0 0.0
    %3419 = vmatpush1.msra.mxu0 0.0
    %3420 = vmatprep.subr.mxu0 0.0
    %3421 = vmatpush1.msra.mxu0 0.0
    %3422 = vmatprep.subr.mxu0 0.0
    %3423 = vmatpush1.msra.mxu0 0.0
    %3424 = vmatprep.subr.mxu0 0.0
    %3425 = vmatpush1.msra.mxu0 0.0
    %3426 = vmatprep.subr.mxu0 0.0
    %3427 = vmatpush1.msra.mxu0 0.0
    %3428 = vmatprep.subr.mxu0 0.0
    %3429 = vmatpush1.msra.mxu0 0.0
    %3430 = vmatprep.subr.mxu0 0.0
    %3431 = vmatpush1.msra.mxu0 0.0
    %3432 = vmatprep.subr.mxu0 0.0
    %3433 = vmatpush1.msra.mxu0 0.0
    %3434 = vmatprep.mubr.f32.mxu0 0.0
    %3435 = vmatmul.mubr.f32.gmra.mrb[0].mxu0 %v3346
    %v3436 = vpop.f32.mrb[0].mxu0
    %v3437 = vadd.f32 %v3368, %v3436
    %v3438 = vpop.f32.mrb[0].mxu0
    %3439 = vdwg.mxu0
    %v3440 = vxor.u32 %v3437, 2147483648
    %v3441 = vmul.f32 %v3440, 1.442695
    %v3442 = vpow.pop %v3441
    %v3443 = vadd.f32 %v3442, 1.0
    %v3444 = vrcp.pop %v3443
    %v3445 = vmul.f32 1.0, %v3444
    %vm3446 = vcmask 7168
    %3447 = vst.msk [vmem:[%s9] sm:$0xff] %vm3446, %v3445
    // Predicated region
    $region58: #{tuned_lstm_forward.1} parent=1 // pred_check
      _
    $region59: #{tuned_lstm_forward.1} parent=1 // pred_check_branch
      %3449 = sbr.rel (0) target = $region61
    $region60: #{tuned_lstm_forward.1} parent=1 // pred_region
      _
    $region61: #{tuned_lstm_forward.1} parent=1 // pred_fallthru
      _
    // Predicated region
    $region62: #{tuned_lstm_forward.1} parent=1 // pred_check
      _
    $region63: #{tuned_lstm_forward.1} parent=1 // pred_check_branch
      %3451 = sbr.rel (0) target = $region65
    $region64: #{tuned_lstm_forward.1} parent=1 // pred_region
      _
    $region65: #{tuned_lstm_forward.1} parent=1 // pred_fallthru
      _
    %3452 = vsyncpa [#allocation4], 1
    %3453 = vsyncpa [#allocation6], 1
    %3454 = vsyncpa [#allocation9], 1

</llo_original>
